<compile_context>
chip_gen: v7x
topology: tpu7x:2x2x1
jax: 0.10.0
libtpu: 0.0.40
codegen_flags: <defaults>
</compile_context>

<pallas_src>
import functools
import math

import jax
import jax.numpy as jnp
from jax import lax
from jax.experimental import pallas as pl
from jax.experimental.pallas import tpu as pltpu


# ------------------------------- helpers -------------------------------------

def _round_up(v, m):
    return ((v + m - 1) // m) * m


def _shifted_softplus(x):
    # softplus(x) - log(2), numerically stable, f32
    return jnp.maximum(x, 0.0) + jnp.log1p(jnp.exp(-jnp.abs(x))) - math.log(2.0)


def _plan_tiles(E, Np, Hp, Fp, Gp, Cp, mxu_bytes,
                requested=None, vmem_budget_bytes=None):
    """Pick the edge-tile size TE and a scoped-VMEM limit.

    Accounts for the single-buffered resident operands, the O(Np*Fp) x1/agg scratch,
    the output buffer, and the double-buffered streamed edge blocks (perf review).
    Returns (TE, vmem_limit_bytes).
    """
    if vmem_budget_bytes is None:
        try:
            cap = int(pltpu.get_tpu_info().vmem_capacity_bytes)
        except Exception:
            cap = 64 << 20                      # conservative (v7x per-TC physical)
        vmem_budget_bytes = (cap * 3) // 4      # ~96 MiB v5e/v6e, ~48 MiB v7x

    # fixed, grid-invariant footprint (all at Buffered(1))
    fixed = (
        Np * Hp * mxu_bytes                                              # x (resident)
        + (Gp * Fp + Fp * Fp + Hp * Fp + Fp * Hp + Hp * Hp) * mxu_bytes  # weights
        + 8 * Cp * 4                                                     # bias slab
        + Np * Fp * (mxu_bytes + 4)                                      # x1 + agg scratch
        + Np * Hp * 4                                                    # output buffer
    )
    # per-edge streamed / transient footprint
    per_edge = (
        2 * (8 * 4 + 4 + Gp * mxu_bytes)    # double-buffered edge slab + dst + edge_attr
        + 2 * Np * mxu_bytes                # gather/scatter one-hots
        + 4 * Fp * 4                        # h, W, x_j, msg f32 intermediates
    )

    if requested is not None:
        te = _round_up(requested, 128)
    else:
        avail = max(vmem_budget_bytes - fixed, 0)
        te = (avail // max(per_edge, 1)) // 128 * 128
        te = int(min(max(te, 128), 2048))
    te = min(te, _round_up(max(E, 1), 128))

    est = fixed + te * per_edge
    vmem_limit = int(min(vmem_budget_bytes,
                         max((est * 3) // 2 + (8 << 20), 32 << 20)))
    return te, vmem_limit


# ----------------------------- Pallas kernel --------------------------------

def _interaction_kernel(cutoff,
                        es_ref, dst_ref, ea_ref, x_ref,
                        w_mlp0_ref, w_mlp2_ref, w_lin1_ref, w_lin2_ref, w_lin_ref,
                        bias_ref,
                        out_ref,
                        x1_ref, agg_ref):
    k = pl.program_id(0)
    n_tiles = pl.num_programs(0)

    TE = es_ref.shape[0]            # edges per tile
    Np = x_ref.shape[0]             # padded node count
    Fp = w_mlp0_ref.shape[1]        # padded num_filters
    Hp = w_lin2_ref.shape[1]        # padded hidden_channels
    mxu = w_lin1_ref.dtype          # MXU operand dtype (bf16 or f32)

    bias = bias_ref[...]            # [8, C] f32 slab
    b_mlp0 = bias[0:1, :Fp]
    b_mlp2 = bias[1:2, :Fp]

    # ---- first tile: hoisted node-side lin1 + accumulator init ----
    @pl.when(k == 0)
    def _():
        x1 = jnp.dot(x_ref[...], w_lin1_ref[...],
                     preferred_element_type=jnp.float32)           # [Np, Fp]
        x1_ref[...] = x1.astype(x1_ref.dtype)
        agg_ref[...] = jnp.zeros_like(agg_ref)

    # ---- edge scalar slab: col0 = src (as f32, exact ints), col1 = edge_weight ----
    es = es_ref[...]                                               # [TE, 8] f32
    src_i = es[:, 0:1].astype(jnp.int32)                           # [TE, 1]
    ew = es[:, 1:2]                                                # [TE, 1]

    # ---- filter network on this edge tile: W = mlp(edge_attr) * C(edge_weight) ----
    h = jnp.dot(ea_ref[...], w_mlp0_ref[...],
                preferred_element_type=jnp.float32) + b_mlp0       # [TE, Fp]
    h = _shifted_softplus(h)
    W = jnp.dot(h.astype(mxu), w_mlp2_ref[...],
                preferred_element_type=jnp.float32) + b_mlp2       # [TE, Fp]
    C = 0.5 * (jnp.cos(ew * (math.pi / cutoff)) + 1.0)             # [TE, 1] f32
    W = W * C                                                      # [TE, Fp] f32

    # ---- gather x1 rows via [TE, Np] one-hot (0/1 exact in bf16) ----
    src_oh = (src_i ==
              lax.broadcasted_iota(jnp.int32, (TE, Np), 1)).astype(mxu)
    x_j = jnp.dot(src_oh, x1_ref[...],
                  preferred_element_type=jnp.float32)              # [TE, Fp]
    msg = x_j * W                                                  # [TE, Fp] f32

    # ---- scatter-add via pre-transposed [Np, TE] one-hot (lane-axis contraction) ----
    dst_oh = (dst_ref[...] ==
              lax.broadcasted_iota(jnp.int32, (Np, TE), 0)).astype(mxu)
    agg_ref[...] += jnp.dot(dst_oh, msg.astype(mxu),
                            preferred_element_type=jnp.float32)    # [Np, Fp]

    # ---- last tile: lin2 -> shifted softplus -> lin -> store ----
    @pl.when(k == n_tiles - 1)
    def _():
        b_lin2 = bias[2:3, :Hp]
        b_lin = bias[3:4, :Hp]
        y = jnp.dot(agg_ref[...].astype(mxu), w_lin2_ref[...],
                    preferred_element_type=jnp.float32) + b_lin2   # [Np, Hp]
        y = _shifted_softplus(y)
        out_ref[...] = jnp.dot(y.astype(mxu), w_lin_ref[...],
                               preferred_element_type=jnp.float32) + b_lin


# --------------------------------- wrapper -----------------------------------

def interaction_block(x, src, dst, edge_weight, edge_attr, params, cutoff,
                      *, tile_edges=None, mxu_dtype=jnp.bfloat16,
                      vmem_budget_bytes=None):
    """x: [N, H] f32; src/dst: [E] int; edge_weight: [E] f32; edge_attr: [E, G] f32.

    mxu_dtype=bfloat16 is the production path (f32 accumulation); float32 is test-only
    (v7x MXU has no native f32 matmul).
    """
    N, H = x.shape
    E = src.shape[0]
    G = edge_attr.shape[1]
    F = params["w_lin1"].shape[1]

    LANE = 128
    mxu_bytes = jnp.dtype(mxu_dtype).itemsize
    SUB = max(8, 32 // mxu_bytes)          # sublane tile for packed dtypes: 8/16/32
    Hp = _round_up(H, LANE)
    Fp = _round_up(F, LANE)
    Gp = _round_up(G, LANE)
    Np = _round_up(N, SUB)
    Cp = max(Fp, Hp)

    TE, vmem_limit = _plan_tiles(E, Np, Hp, Fp, Gp, Cp, mxu_bytes,
                                 requested=tile_edges,
                                 vmem_budget_bytes=vmem_budget_bytes)
    Ep = _round_up(max(E, 1), TE)
    n_tiles = Ep // TE

    f32 = jnp.float32

    # --- pad node features (zeros are exact: ssp(0)=0 and padded weights/biases are 0) ---
    xp = jnp.zeros((Np, Hp), f32).at[:N, :H].set(x.astype(f32)).astype(mxu_dtype)

    # --- edge scalar slab [Ep, 8]: col0 = src (pad -1 -> matches no node), col1 = ew ---
    es_p = jnp.zeros((Ep, 8), f32)
    es_p = es_p.at[:, 0].set(-1.0)
    es_p = es_p.at[:E, 0].set(src.astype(f32))
    es_p = es_p.at[:E, 1].set(edge_weight.astype(f32))

    # --- dst kept lane-major [1, Ep] for the pre-transposed scatter one-hot ---
    dst_p = jnp.full((1, Ep), -1, jnp.int32).at[0, :E].set(dst.astype(jnp.int32))
    ea_p = (jnp.zeros((Ep, Gp), f32).at[:E, :G].set(edge_attr.astype(f32))
            .astype(mxu_dtype))

    # --- pad weights (stored [in, out]) and cast MXU operands ---
    def padw(w, r, c):
        return (jnp.zeros((r, c), f32).at[:w.shape[0], :w.shape[1]]
                .set(w.astype(f32)).astype(mxu_dtype))

    w_mlp0 = padw(params["w_mlp0"], Gp, Fp)
    w_mlp2 = padw(params["w_mlp2"], Fp, Fp)
    w_lin1 = padw(params["w_lin1"], Hp, Fp)
    w_lin2 = padw(params["w_lin2"], Fp, Hp)
    w_lin = padw(params["w_lin"], Hp, Hp)

    # --- pack the four biases into one f32 slab (fewer DMA descriptors) ---
    bias = jnp.zeros((8, Cp), f32)
    bias = bias.at[0, :F].set(params["b_mlp0"].reshape(-1).astype(f32))
    bias = bias.at[1, :F].set(params["b_mlp2"].reshape(-1).astype(f32))
    bias = bias.at[2, :H].set(params["b_lin2"].reshape(-1).astype(f32))
    bias = bias.at[3, :H].set(params["b_lin"].reshape(-1).astype(f32))

    kernel = functools.partial(_interaction_kernel, float(cutoff))

    # grid-invariant operands: constant index_map + single buffer (no prefetch overlap
    # needed) -> halves their VMEM footprint, letting TE grow.
    resident = pl.Buffered(1)

    out_p = pl.pallas_call(
        kernel,
        out_shape=jax.ShapeDtypeStruct((Np, Hp), f32),
        grid_spec=pltpu.PrefetchScalarGridSpec(
            num_scalar_prefetch=0,
            grid=(n_tiles,),
            in_specs=[
                pl.BlockSpec((TE, 8), lambda e: (e, 0)),     # edge slab (src, ew)
                pl.BlockSpec((1, TE), lambda e: (0, e)),     # dst (lane-major)
                pl.BlockSpec((TE, Gp), lambda e: (e, 0)),    # edge_attr (streamed)
                pl.BlockSpec((Np, Hp), lambda e: (0, 0),
                             pipeline_mode=resident),        # x        (resident)
                pl.BlockSpec((Gp, Fp), lambda e: (0, 0),
                             pipeline_mode=resident),        # w_mlp0
                pl.BlockSpec((Fp, Fp), lambda e: (0, 0),
                             pipeline_mode=resident),        # w_mlp2
                pl.BlockSpec((Hp, Fp), lambda e: (0, 0),
                             pipeline_mode=resident),        # w_lin1
                pl.BlockSpec((Fp, Hp), lambda e: (0, 0),
                             pipeline_mode=resident),        # w_lin2
                pl.BlockSpec((Hp, Hp), lambda e: (0, 0),
                             pipeline_mode=resident),        # w_lin
                pl.BlockSpec((8, Cp), lambda e: (0, 0),
                             pipeline_mode=resident),        # bias slab
            ],
            out_specs=pl.BlockSpec((Np, Hp), lambda e: (0, 0),
                                   pipeline_mode=resident),
            scratch_shapes=[
                pltpu.VMEM((Np, Fp), mxu_dtype),             # x1 (hoisted lin1 output)
                pltpu.VMEM((Np, Fp), jnp.float32),           # agg accumulator
            ],
        ),
        compiler_params=pltpu.CompilerParams(
            dimension_semantics=("arbitrary",),              # edge axis is a reduction
            vmem_limit_bytes=vmem_limit,
        ),
    )(es_p, dst_p, ea_p, xp,
      w_mlp0, w_mlp2, w_lin1, w_lin2, w_lin, bias)

    return out_p[:N, :H]


# ------------------------- parameter construction ---------------------------

def _xavier_uniform(key, fan_in, fan_out):
    limit = math.sqrt(6.0 / (fan_in + fan_out))
    # stored as [in, out] so every layer is x @ W + b (== torch's x @ weight.T + bias)
    return jax.random.uniform(key, (fan_in, fan_out), jnp.float32, -limit, limit)


def make_params(key, hidden_channels, num_gaussians, num_filters):
    ks = jax.random.split(key, 5)
    return {
        "w_mlp0": _xavier_uniform(ks[0], num_gaussians, num_filters),
        "b_mlp0": jnp.zeros((1, num_filters), jnp.float32),
        "w_mlp2": _xavier_uniform(ks[1], num_filters, num_filters),
        "b_mlp2": jnp.zeros((1, num_filters), jnp.float32),
        "w_lin1": _xavier_uniform(ks[2], hidden_channels, num_filters),  # no bias
        "w_lin2": _xavier_uniform(ks[3], num_filters, hidden_channels),
        "b_lin2": jnp.zeros((1, hidden_channels), jnp.float32),
        "w_lin": _xavier_uniform(ks[4], hidden_channels, hidden_channels),
        "b_lin": jnp.zeros((1, hidden_channels), jnp.float32),
    }


# ---------------------------- pure-JAX reference ----------------------------

def reference(x, src, dst, edge_weight, edge_attr, params, cutoff):
    ssp = lambda v: jnp.logaddexp(v, 0.0) - math.log(2.0)
    h = edge_attr @ params["w_mlp0"] + params["b_mlp0"]
    W = ssp(h) @ params["w_mlp2"] + params["b_mlp2"]
    C = 0.5 * (jnp.cos(edge_weight * math.pi / cutoff) + 1.0)
    W = W * C[:, None]
    x1 = x @ params["w_lin1"]
    msg = x1[src] * W
    agg = jax.ops.segment_sum(msg, dst, num_segments=x.shape[0])
    y = agg @ params["w_lin2"] + params["b_lin2"]
    y = ssp(y)
    return y @ params["w_lin"] + params["b_lin"]


# ----------------------------------- main ------------------------------------

if __name__ == "__main__":
    hidden_channels = 32
    num_gaussians = 16
    num_filters = 32
    cutoff = 10.0

    N = 64    # nodes
    E = 300   # edges

    key = jax.random.PRNGKey(0)
    k_x, k_src, k_dst, k_ew, k_ea, k_p = jax.random.split(key, 6)

    x = jax.random.normal(k_x, (N, hidden_channels), jnp.float32)
    src = jax.random.randint(k_src, (E,), 0, N, jnp.int32)
    dst = jax.random.randint(k_dst, (E,), 0, N, jnp.int32)
    edge_weight = jax.random.uniform(k_ew, (E,), jnp.float32, 0.0, cutoff)
    edge_attr = jax.random.normal(k_ea, (E, num_gaussians), jnp.float32)

    params = make_params(k_p, hidden_channels, num_gaussians, num_filters)
    ref = reference(x, src, dst, edge_weight, edge_attr, params, cutoff)

    # exact-precision path, forced multi-tile (TE=128 -> 3 tiles: exercises init /
    # accumulate / finalize): tight check vs the reference
    out_f32 = interaction_block(x, src, dst, edge_weight, edge_attr, params, cutoff,
                                tile_edges=128, mxu_dtype=jnp.float32)
    out_f32 = jax.block_until_ready(out_f32)
    assert out_f32.shape == (N, hidden_channels)
    assert jnp.allclose(out_f32, ref, atol=1e-4, rtol=1e-4), "f32 mismatch vs reference"

    # production path: bf16 MXU operands, f32 accumulation, auto-planned TE /
    # vmem_limit_bytes (exercises the VMEM planner and Buffered(1) residents)
    out_bf16 = interaction_block(x, src, dst, edge_weight, edge_attr, params, cutoff,
                                 mxu_dtype=jnp.bfloat16)
    out_bf16 = jax.block_until_ready(out_bf16)
    assert out_bf16.shape == (N, hidden_channels)
    assert jnp.allclose(out_bf16, ref, atol=1e-1, rtol=1e-1), "bf16 mismatch vs reference"

    print("KERNEL_OK")
</pallas_src>

<mosaic_0001>
module attributes {stable_mosaic.version = 11 : i64} {
  func.func @_interaction_kernel(%arg0: i32, %arg1: memref<128x8xf32, #tpu.memory_space<vmem>>, %arg2: memref<1x128xi32, #tpu.memory_space<vmem>>, %arg3: memref<128x128xf32, #tpu.memory_space<vmem>>, %arg4: memref<64x128xf32, #tpu.memory_space<vmem>>, %arg5: memref<128x128xf32, #tpu.memory_space<vmem>>, %arg6: memref<128x128xf32, #tpu.memory_space<vmem>>, %arg7: memref<128x128xf32, #tpu.memory_space<vmem>>, %arg8: memref<128x128xf32, #tpu.memory_space<vmem>>, %arg9: memref<128x128xf32, #tpu.memory_space<vmem>>, %arg10: memref<8x128xf32, #tpu.memory_space<vmem>>, %arg11: memref<64x128xf32, #tpu.memory_space<vmem>>, %arg12: memref<64x128xf32, #tpu.memory_space<vmem>>, %arg13: memref<64x128xf32, #tpu.memory_space<vmem>>) attributes {dimension_semantics = [#tpu.dimension_semantics<arbitrary>], iteration_bounds = array<i64: 3>, scalar_prefetch = 0 : i64, scratch_operands = 2 : i64, tpu.core_type = #tpu.core_type<tc>, window_params = [{transform_indices = @transform_0, window_bounds = array<i64: 128, 8>}, {transform_indices = @transform_1, window_bounds = array<i64: 1, 128>}, {transform_indices = @transform_2, window_bounds = array<i64: 128, 128>}, {pipeline_mode = #tpu.pipeline_mode<synchronous>, transform_indices = @transform_3, window_bounds = array<i64: 64, 128>}, {pipeline_mode = #tpu.pipeline_mode<synchronous>, transform_indices = @transform_4, window_bounds = array<i64: 128, 128>}, {pipeline_mode = #tpu.pipeline_mode<synchronous>, transform_indices = @transform_5, window_bounds = array<i64: 128, 128>}, {pipeline_mode = #tpu.pipeline_mode<synchronous>, transform_indices = @transform_6, window_bounds = array<i64: 128, 128>}, {pipeline_mode = #tpu.pipeline_mode<synchronous>, transform_indices = @transform_7, window_bounds = array<i64: 128, 128>}, {pipeline_mode = #tpu.pipeline_mode<synchronous>, transform_indices = @transform_8, window_bounds = array<i64: 128, 128>}, {pipeline_mode = #tpu.pipeline_mode<synchronous>, transform_indices = @transform_9, window_bounds = array<i64: 8, 128>}, {pipeline_mode = #tpu.pipeline_mode<synchronous>, transform_indices = @transform_10, window_bounds = array<i64: 64, 128>}]} {
    %c0 = arith.constant 0 : index
    %c0_0 = arith.constant 0 : index
    %0 = vector.load %arg10[%c0, %c0_0] : memref<8x128xf32, #tpu.memory_space<vmem>>, vector<8x128xf32>
    %1 = vector.extract_strided_slice %0 {offsets = [0, 0], sizes = [1, 128], strides = [1, 1]} : vector<8x128xf32> to vector<1x128xf32>
    %2 = vector.extract_strided_slice %0 {offsets = [1, 0], sizes = [1, 128], strides = [1, 1]} : vector<8x128xf32> to vector<1x128xf32>
    %c0_i32 = arith.constant 0 : i32
    %3 = arith.cmpi eq, %arg0, %c0_i32 : i32
    %4 = arith.extui %3 : i1 to i32
    %c0_i32_1 = arith.constant 0 : i32
    %5 = arith.cmpi ne, %4, %c0_i32_1 : i32
    scf.if %5 {
      %c0_28 = arith.constant 0 : index
      %c0_29 = arith.constant 0 : index
      %59 = vector.load %arg4[%c0_28, %c0_29] : memref<64x128xf32, #tpu.memory_space<vmem>>, vector<64x128xf32>
      %c0_30 = arith.constant 0 : index
      %c0_31 = arith.constant 0 : index
      %60 = vector.load %arg7[%c0_30, %c0_31] : memref<128x128xf32, #tpu.memory_space<vmem>>, vector<128x128xf32>
      %cst_32 = arith.constant dense<0.000000e+00> : vector<64x128xf32>
      %61 = tpu.matmul %59, %60, %cst_32 {dimension_numbers = #tpu.dot_dimension_numbers<[1], [0], [0], [1], [0, 0, 1, 1], [], []>} : vector<64x128xf32>, vector<128x128xf32>, vector<64x128xf32> -> vector<64x128xf32>
      %c0_33 = arith.constant 0 : index
      %c0_34 = arith.constant 0 : index
      %62 = vector.load %arg12[%c0_33, %c0_34] : memref<64x128xf32, #tpu.memory_space<vmem>>, vector<64x128xf32>
      tpu.vector_store %arg12[%c0_33, %c0_34], %61 {strides = array<i32>} : memref<64x128xf32, #tpu.memory_space<vmem>>, vector<64x128xf32>,
      %cst_35 = arith.constant 0.000000e+00 : f32
      %63 = vector.broadcast %cst_35 : f32 to vector<64x128xf32>
      %c0_36 = arith.constant 0 : index
      %c0_37 = arith.constant 0 : index
      %64 = vector.load %arg13[%c0_36, %c0_37] : memref<64x128xf32, #tpu.memory_space<vmem>>, vector<64x128xf32>
      tpu.vector_store %arg13[%c0_36, %c0_37], %63 {strides = array<i32>} : memref<64x128xf32, #tpu.memory_space<vmem>>, vector<64x128xf32>,
    } else {
    }
    %c0_2 = arith.constant 0 : index
    %c0_3 = arith.constant 0 : index
    %6 = vector.load %arg1[%c0_2, %c0_3] : memref<128x8xf32, #tpu.memory_space<vmem>>, vector<128x8xf32>
    %7 = vector.extract_strided_slice %6 {offsets = [0, 0], sizes = [128, 1], strides = [1, 1]} : vector<128x8xf32> to vector<128x1xf32>
    %8 = arith.fptosi %7 : vector<128x1xf32> to vector<128x1xi32>
    %9 = vector.extract_strided_slice %6 {offsets = [0, 1], sizes = [128, 1], strides = [1, 1]} : vector<128x8xf32> to vector<128x1xf32>
    %c0_4 = arith.constant 0 : index
    %c0_5 = arith.constant 0 : index
    %10 = vector.load %arg3[%c0_4, %c0_5] : memref<128x128xf32, #tpu.memory_space<vmem>>, vector<128x128xf32>
    %c0_6 = arith.constant 0 : index
    %c0_7 = arith.constant 0 : index
    %11 = vector.load %arg5[%c0_6, %c0_7] : memref<128x128xf32, #tpu.memory_space<vmem>>, vector<128x128xf32>
    %cst = arith.constant dense<0.000000e+00> : vector<128x128xf32>
    %12 = tpu.matmul %10, %11, %cst {dimension_numbers = #tpu.dot_dimension_numbers<[1], [0], [0], [1], [0, 0, 1, 1], [], []>} : vector<128x128xf32>, vector<128x128xf32>, vector<128x128xf32> -> vector<128x128xf32>
    %13 = vector.broadcast %1 : vector<1x128xf32> to vector<128x128xf32>
    %14 = arith.addf %12, %13 : vector<128x128xf32>
    %cst_8 = arith.constant 0.000000e+00 : f32
    %15 = vector.broadcast %cst_8 : f32 to vector<128x128xf32>
    %16 = arith.maximumf %14, %15 : vector<128x128xf32>
    %17 = math.absf %14 : vector<128x128xf32>
    %cst_9 = arith.constant 0.000000e+00 : f32
    %18 = vector.broadcast %cst_9 : f32 to vector<128x128xf32>
    %19 = arith.subf %18, %17 : vector<128x128xf32>
    %20 = math.exp %19 : vector<128x128xf32>
    %21 = math.log1p %20 : vector<128x128xf32>
    %22 = arith.addf %16, %21 : vector<128x128xf32>
    %cst_10 = arith.constant 0.693147182 : f32
    %23 = vector.broadcast %cst_10 : f32 to vector<128x128xf32>
    %24 = arith.subf %22, %23 : vector<128x128xf32>
    %c0_11 = arith.constant 0 : index
    %c0_12 = arith.constant 0 : index
    %25 = vector.load %arg6[%c0_11, %c0_12] : memref<128x128xf32, #tpu.memory_space<vmem>>, vector<128x128xf32>
    %cst_13 = arith.constant dense<0.000000e+00> : vector<128x128xf32>
    %26 = tpu.matmul %24, %25, %cst_13 {dimension_numbers = #tpu.dot_dimension_numbers<[1], [0], [0], [1], [0, 0, 1, 1], [], []>} : vector<128x128xf32>, vector<128x128xf32>, vector<128x128xf32> -> vector<128x128xf32>
    %27 = vector.broadcast %2 : vector<1x128xf32> to vector<128x128xf32>
    %28 = arith.addf %26, %27 : vector<128x128xf32>
    %cst_14 = arith.constant 0.314159274 : f32
    %29 = vector.broadcast %cst_14 : f32 to vector<128x1xf32>
    %30 = arith.mulf %9, %29 : vector<128x1xf32>
    %31 = math.cos %30 : vector<128x1xf32>
    %cst_15 = arith.constant 1.000000e+00 : f32
    %32 = vector.broadcast %cst_15 : f32 to vector<128x1xf32>
    %33 = arith.addf %31, %32 : vector<128x1xf32>
    %cst_16 = arith.constant 5.000000e-01 : f32
    %34 = vector.broadcast %cst_16 : f32 to vector<128x1xf32>
    %35 = arith.mulf %34, %33 : vector<128x1xf32>
    %36 = vector.broadcast %35 : vector<128x1xf32> to vector<128x128xf32>
    %37 = arith.mulf %28, %36 : vector<128x128xf32>
    %38 = tpu.iota {dimensions = array<i32: 1>} : vector<128x64xi32>
    %39 = vector.broadcast %8 : vector<128x1xi32> to vector<128x64xi32>
    %40 = arith.cmpi eq, %39, %38 : vector<128x64xi32>
    %41 = arith.extui %40 : vector<128x64xi1> to vector<128x64xi32>
    %42 = arith.sitofp %41 : vector<128x64xi32> to vector<128x64xf32>
    %c0_17 = arith.constant 0 : index
    %c0_18 = arith.constant 0 : index
    %43 = vector.load %arg12[%c0_17, %c0_18] : memref<64x128xf32, #tpu.memory_space<vmem>>, vector<64x128xf32>
    %cst_19 = arith.constant dense<0.000000e+00> : vector<128x128xf32>
    %44 = tpu.matmul %42, %43, %cst_19 {dimension_numbers = #tpu.dot_dimension_numbers<[1], [0], [0], [1], [0, 0, 1, 1], [], []>} : vector<128x64xf32>, vector<64x128xf32>, vector<128x128xf32> -> vector<128x128xf32>
    %45 = arith.mulf %44, %37 : vector<128x128xf32>
    %c0_20 = arith.constant 0 : index
    %c0_21 = arith.constant 0 : index
    %46 = vector.load %arg2[%c0_20, %c0_21] : memref<1x128xi32, #tpu.memory_space<vmem>>, vector<1x128xi32>
    %47 = tpu.iota {dimensions = array<i32: 0>} : vector<64x128xi32>
    %48 = vector.broadcast %46 : vector<1x128xi32> to vector<64x128xi32>
    %49 = arith.cmpi eq, %48, %47 : vector<64x128xi32>
    %50 = arith.extui %49 : vector<64x128xi1> to vector<64x128xi32>
    %51 = arith.sitofp %50 : vector<64x128xi32> to vector<64x128xf32>
    %c0_22 = arith.constant 0 : index
    %c0_23 = arith.constant 0 : index
    %52 = vector.load %arg13[%c0_22, %c0_23] : memref<64x128xf32, #tpu.memory_space<vmem>>, vector<64x128xf32>
    %cst_24 = arith.constant dense<0.000000e+00> : vector<64x128xf32>
    %53 = tpu.matmul %51, %45, %cst_24 {dimension_numbers = #tpu.dot_dimension_numbers<[1], [0], [0], [1], [0, 0, 1, 1], [], []>} : vector<64x128xf32>, vector<128x128xf32>, vector<64x128xf32> -> vector<64x128xf32>
    %54 = arith.addf %52, %53 : vector<64x128xf32>
    %c0_25 = arith.constant 0 : index
    %c0_26 = arith.constant 0 : index
    %55 = vector.load %arg13[%c0_25, %c0_26] : memref<64x128xf32, #tpu.memory_space<vmem>>, vector<64x128xf32>
    tpu.vector_store %arg13[%c0_25, %c0_26], %54 {strides = array<i32>} : memref<64x128xf32, #tpu.memory_space<vmem>>, vector<64x128xf32>,
    %c2_i32 = arith.constant 2 : i32
    %56 = arith.cmpi eq, %arg0, %c2_i32 : i32
    %57 = arith.extui %56 : i1 to i32
    %c0_i32_27 = arith.constant 0 : i32
    %58 = arith.cmpi ne, %57, %c0_i32_27 : i32
    scf.if %58 {
      %59 = vector.extract_strided_slice %0 {offsets = [2, 0], sizes = [1, 128], strides = [1, 1]} : vector<8x128xf32> to vector<1x128xf32>
      %60 = vector.extract_strided_slice %0 {offsets = [3, 0], sizes = [1, 128], strides = [1, 1]} : vector<8x128xf32> to vector<1x128xf32>
      %c0_28 = arith.constant 0 : index
      %c0_29 = arith.constant 0 : index
      %61 = vector.load %arg13[%c0_28, %c0_29] : memref<64x128xf32, #tpu.memory_space<vmem>>, vector<64x128xf32>
      %c0_30 = arith.constant 0 : index
      %c0_31 = arith.constant 0 : index
      %62 = vector.load %arg8[%c0_30, %c0_31] : memref<128x128xf32, #tpu.memory_space<vmem>>, vector<128x128xf32>
      %cst_32 = arith.constant dense<0.000000e+00> : vector<64x128xf32>
      %63 = tpu.matmul %61, %62, %cst_32 {dimension_numbers = #tpu.dot_dimension_numbers<[1], [0], [0], [1], [0, 0, 1, 1], [], []>} : vector<64x128xf32>, vector<128x128xf32>, vector<64x128xf32> -> vector<64x128xf32>
      %64 = vector.broadcast %59 : vector<1x128xf32> to vector<64x128xf32>
      %65 = arith.addf %63, %64 : vector<64x128xf32>
      %cst_33 = arith.constant 0.000000e+00 : f32
      %66 = vector.broadcast %cst_33 : f32 to vector<64x128xf32>
      %67 = arith.maximumf %65, %66 : vector<64x128xf32>
      %68 = math.absf %65 : vector<64x128xf32>
      %cst_34 = arith.constant 0.000000e+00 : f32
      %69 = vector.broadcast %cst_34 : f32 to vector<64x128xf32>
      %70 = arith.subf %69, %68 : vector<64x128xf32>
      %71 = math.exp %70 : vector<64x128xf32>
      %72 = math.log1p %71 : vector<64x128xf32>
      %73 = arith.addf %67, %72 : vector<64x128xf32>
      %cst_35 = arith.constant 0.693147182 : f32
      %74 = vector.broadcast %cst_35 : f32 to vector<64x128xf32>
      %75 = arith.subf %73, %74 : vector<64x128xf32>
      %c0_36 = arith.constant 0 : index
      %c0_37 = arith.constant 0 : index
      %76 = vector.load %arg9[%c0_36, %c0_37] : memref<128x128xf32, #tpu.memory_space<vmem>>, vector<128x128xf32>
      %cst_38 = arith.constant dense<0.000000e+00> : vector<64x128xf32>
      %77 = tpu.matmul %75, %76, %cst_38 {dimension_numbers = #tpu.dot_dimension_numbers<[1], [0], [0], [1], [0, 0, 1, 1], [], []>} : vector<64x128xf32>, vector<128x128xf32>, vector<64x128xf32> -> vector<64x128xf32>
      %78 = vector.broadcast %60 : vector<1x128xf32> to vector<64x128xf32>
      %79 = arith.addf %77, %78 : vector<64x128xf32>
      %c0_39 = arith.constant 0 : index
      %c0_40 = arith.constant 0 : index
      %80 = vector.load %arg11[%c0_39, %c0_40] : memref<64x128xf32, #tpu.memory_space<vmem>>, vector<64x128xf32>
      tpu.vector_store %arg11[%c0_39, %c0_40], %79 {strides = array<i32>} : memref<64x128xf32, #tpu.memory_space<vmem>>, vector<64x128xf32>,
    } else {
    }
    return
  }
  func.func @transform_0(%arg0: i32) -> (i32, i32) {
    %c0_i32 = arith.constant 0 : i32
    %c0_i32_0 = arith.constant 0 : i32
    return %arg0, %c0_i32 : i32, i32
  }
  func.func @transform_1(%arg0: i32) -> (i32, i32) {
    %c0_i32 = arith.constant 0 : i32
    %c0_i32_0 = arith.constant 0 : i32
    return %c0_i32, %arg0 : i32, i32
  }
  func.func @transform_2(%arg0: i32) -> (i32, i32) {
    %c0_i32 = arith.constant 0 : i32
    %c0_i32_0 = arith.constant 0 : i32
    return %arg0, %c0_i32 : i32, i32
  }
  func.func @transform_3(%arg0: i32) -> (i32, i32) {
    %c0_i32 = arith.constant 0 : i32
    %c0_i32_0 = arith.constant 0 : i32
    %c0_i32_1 = arith.constant 0 : i32
    return %c0_i32, %c0_i32_0 : i32, i32
  }
  func.func @transform_4(%arg0: i32) -> (i32, i32) {
    %c0_i32 = arith.constant 0 : i32
    %c0_i32_0 = arith.constant 0 : i32
    %c0_i32_1 = arith.constant 0 : i32
    return %c0_i32, %c0_i32_0 : i32, i32
  }
  func.func @transform_5(%arg0: i32) -> (i32, i32) {
    %c0_i32 = arith.constant 0 : i32
    %c0_i32_0 = arith.constant 0 : i32
    %c0_i32_1 = arith.constant 0 : i32
    return %c0_i32, %c0_i32_0 : i32, i32
  }
  func.func @transform_6(%arg0: i32) -> (i32, i32) {
    %c0_i32 = arith.constant 0 : i32
    %c0_i32_0 = arith.constant 0 : i32
    %c0_i32_1 = arith.constant 0 : i32
    return %c0_i32, %c0_i32_0 : i32, i32
  }
  func.func @transform_7(%arg0: i32) -> (i32, i32) {
    %c0_i32 = arith.constant 0 : i32
    %c0_i32_0 = arith.constant 0 : i32
    %c0_i32_1 = arith.constant 0 : i32
    return %c0_i32, %c0_i32_0 : i32, i32
  }
  func.func @transform_8(%arg0: i32) -> (i32, i32) {
    %c0_i32 = arith.constant 0 : i32
    %c0_i32_0 = arith.constant 0 : i32
    %c0_i32_1 = arith.constant 0 : i32
    return %c0_i32, %c0_i32_0 : i32, i32
  }
  func.func @transform_9(%arg0: i32) -> (i32, i32) {
    %c0_i32 = arith.constant 0 : i32
    %c0_i32_0 = arith.constant 0 : i32
    %c0_i32_1 = arith.constant 0 : i32
    return %c0_i32, %c0_i32_0 : i32, i32
  }
  func.func @transform_10(%arg0: i32) -> (i32, i32) {
    %c0_i32 = arith.constant 0 : i32
    %c0_i32_0 = arith.constant 0 : i32
    %c0_i32_1 = arith.constant 0 : i32
    return %c0_i32, %c0_i32_0 : i32, i32
  }
}

</mosaic_0001>

<llo_original>
// kernel: tpu_custom_call.1
$region0: #{tpu_custom_call.1}
  #allocation0 [shape = 'u32[]', space=smem, size = 0x4, offset = 0x4, fixed_abs, tag = 'smem constant byte address 0x4 - core index']
  #allocation1 [shape = 'u32[144,128]{1,0:T(1,128)}', space=vmem, size = 0x12000, scoped, tag = 'internal scratch']
  #allocation2 [shape = 'f32[64,128]{1,0:T(8,128)}', space=vmem, size = 0x8000, scoped, tag = 'scratch operand']
  #allocation3 [shape = 'f32[64,128]{1,0:T(8,128)}', space=vmem, size = 0x8000, scoped, tag = 'scratch operand']
  %s0 = inlined_call_operand.vmem [shape: f32[384,8], index: 0, kind: input, shape index: {}]
  %s1 = inlined_call_operand.vmem [shape: s32[1,384], index: 1, kind: input, shape index: {}]
  %s2 = inlined_call_operand.vmem [shape: f32[384,128], index: 2, kind: input, shape index: {}]
  %s3 = inlined_call_operand.hbm [shape: f32[64,128], index: 3, kind: input, shape index: {}]
  %s4 = inlined_call_operand.hbm [shape: f32[128,128], index: 4, kind: input, shape index: {}]
  %s5 = inlined_call_operand.hbm [shape: f32[128,128], index: 5, kind: input, shape index: {}]
  %s6 = inlined_call_operand.hbm [shape: f32[128,128], index: 6, kind: input, shape index: {}]
  %s7 = inlined_call_operand.hbm [shape: f32[128,128], index: 7, kind: input, shape index: {}]
  %s8 = inlined_call_operand.hbm [shape: f32[128,128], index: 8, kind: input, shape index: {}]
  %s9 = inlined_call_operand.vmem [shape: f32[8,128], index: 9, kind: input, shape index: {}]
  %s10 = inlined_call_operand.hbm [shape: f32[64,128], index: 10, kind: output, shape index: {}]
  %s11 = sld [smem:[#allocation0]]
  $region105: #{tpu_custom_call.1} parent=0
    _
  %s13 = ssub.s32 1, %s11
  %s14 = scalar_select 0, %s13, %s11
  $region1: #{tpu_custom_call.1} parent=0
    #allocation4 [shape = 'u8[32768]{0}', space=vmem, size = 0x8000, scoped, tag = 'input window, operand 3, single buffered']
    #allocation5 [shape = 's32[2]{0}', space=sflag, size = 0x8, scoped, tag = 'scoped memory for tpu_custom_call.1']
    #allocation6 [shape = 's32[2]{0}', space=sflag, size = 0x8, scoped, tag = 'scoped memory for tpu_custom_call.1']
    #allocation7 [shape = 'u8[65536]{0}', space=vmem, size = 0x10000, scoped, tag = 'input window, operand 4, single buffered']
    #allocation8 [shape = 's32[1]{0}', space=sflag, size = 0x4, scoped, tag = 'scoped memory for tpu_custom_call.1']
    #allocation9 [shape = 'u8[65536]{0}', space=vmem, size = 0x10000, scoped, tag = 'input window, operand 5, single buffered']
    #allocation10 [shape = 'u8[65536]{0}', space=vmem, size = 0x10000, scoped, tag = 'input window, operand 6, single buffered']
    #allocation11 [shape = 's32[1]{0}', space=sflag, size = 0x4, scoped, tag = 'scoped memory for tpu_custom_call.1']
    #allocation12 [shape = 'u8[65536]{0}', space=vmem, size = 0x10000, scoped, tag = 'input window, operand 7, single buffered']
    #allocation13 [shape = 'u8[65536]{0}', space=vmem, size = 0x10000, scoped, tag = 'input window, operand 8, single buffered']
    #allocation14 [shape = 's32[1]{0}', space=sflag, size = 0x4, scoped, tag = 'scoped memory for tpu_custom_call.1']
    #allocation15 [shape = 'u8[32768]{0}', space=vmem, size = 0x8000, scoped, tag = 'output window, operand 0, single buffered']
    %15 = vsyncpa [#allocation5], 0
    %16 = vsyncpa [#allocation8], 0
    %17 = vsyncpa [#allocation11], 0
    %18 = vsyncpa [#allocation14], 0
    %19 = vsyncpa [#allocation6], 0
    loop: start=0, step=1, limit=5
    $region2: #{tpu_custom_call.1} parent=1 // loop_pre_header
      _
    $region3: #{tpu_custom_call.1} parent=1 // loop_header
      %s21 = sphi 0, %s25
      %p22 = scmp.ge.s32.totalorder %s21, 5
      %s31 = sphi 0, %s33
      %s34 = sphi 0, %s31
      %s35 = sphi 0, %s34
      %s51 = sphi 0, %s35
      %s57 = sphi 0, %s59
      %s60 = sphi 0, %s57
      %s61 = sphi 0, %s60
      %s77 = sphi 0, %s61
      %s83 = sphi 0, %s85
      %s86 = sphi 0, %s83
      %s87 = sphi 0, %s86
      %s103 = sphi 0, %s87
      %s107 = sphi 0, %s107
      %s109 = sphi 0, %s107
      %s110 = sphi 0, %s109
      %s124 = sphi 0, %s110
      %s128 = sphi 0, %s128
      %s130 = sphi 0, %s128
      %s131 = sphi 0, %s130
      %s145 = sphi 0, %s131
      %s149 = sphi 0, %s149
      %s151 = sphi 0, %s149
      %s152 = sphi 0, %s151
      %s166 = sphi 0, %s152
      %s170 = sphi 0, %s170
      %s172 = sphi 0, %s170
      %s173 = sphi 0, %s172
      %s187 = sphi 0, %s173
      %s191 = sphi 0, %s191
      %s193 = sphi 0, %s191
      %s194 = sphi 0, %s193
      %s208 = sphi 0, %s194
      %s212 = sphi 0, %s212
      %s214 = sphi 0, %s212
      %s215 = sphi 0, %s214
      %s229 = sphi 0, %s215
      %s233 = sphi 0, %s233
      %s235 = sphi 0, %s233
      %s236 = sphi 0, %s235
      %s250 = sphi 0, %s236
      %s254 = sphi 0, %s254
      %s256 = sphi 0, %s254
      %s257 = sphi 0, %s256
      %s271 = sphi 0, %s257
    $region4: #{tpu_custom_call.1} parent=1 // loop_header_branch
      %24 = sbr.rel (%p22) target = $region8
    $region5: #{tpu_custom_call.1} parent=1 // loop_body
      %s26 = ssub.s32 %s21, 1
      %s27 = ssub.s32 %s21, 2
      %s28 = sadd.s32 %s21, 1
      %s29 = ssub.s32 %s21, %s28
      %p30 = scmp.eq.s32.totalorder %s29, 0
      %s32 = sadd.s32 %s31, 1
      %s33 = scalar_select %p30, %s31, %s32
      %p36 = pneg %p30
      %p37 = scmp.eq.s32.totalorder %s21, 2
      %p38 = por %p36, %p37
      %p39 = scmp.ne.s32.totalorder %s31, %s34
      %p40 = scmp.eq.s32.totalorder %s21, 0
      %p41 = por %p39, %p40
      %p42 = scmp.ne.s32.totalorder %s31, %s34
      %p43 = scmp.eq.s32.totalorder %s26, 2
      %p44 = por %p42, %p43
      %p45 = scmp.ne.s32.totalorder %s34, %s35
      %p46 = scmp.eq.s32.totalorder %s26, 0
      %p47 = por %p45, %p46
      %p48 = scmp.ne.s32.totalorder %s34, %s35
      %p49 = scmp.eq.s32.totalorder %s27, 2
      %p50 = por %p48, %p49
      %p52 = scmp.ne.s32.totalorder %s35, %s51
      %p53 = scmp.eq.s32.totalorder %s27, 0
      %p54 = por %p52, %p53
      %s55 = ssub.s32 %s21, %s28
      %p56 = scmp.eq.s32.totalorder %s55, 0
      %s58 = sadd.s32 %s57, 1
      %s59 = scalar_select %p56, %s57, %s58
      %p62 = pneg %p56
      %p63 = scmp.eq.s32.totalorder %s21, 2
      %p64 = por %p62, %p63
      %p65 = scmp.ne.s32.totalorder %s57, %s60
      %p66 = scmp.eq.s32.totalorder %s21, 0
      %p67 = por %p65, %p66
      %p68 = scmp.ne.s32.totalorder %s57, %s60
      %p69 = scmp.eq.s32.totalorder %s26, 2
      %p70 = por %p68, %p69
      %p71 = scmp.ne.s32.totalorder %s60, %s61
      %p72 = scmp.eq.s32.totalorder %s26, 0
      %p73 = por %p71, %p72
      %p74 = scmp.ne.s32.totalorder %s60, %s61
      %p75 = scmp.eq.s32.totalorder %s27, 2
      %p76 = por %p74, %p75
      %p78 = scmp.ne.s32.totalorder %s61, %s77
      %p79 = scmp.eq.s32.totalorder %s27, 0
      %p80 = por %p78, %p79
      %s81 = ssub.s32 %s21, %s28
      %p82 = scmp.eq.s32.totalorder %s81, 0
      %s84 = sadd.s32 %s83, 1
      %s85 = scalar_select %p82, %s83, %s84
      %p88 = pneg %p82
      %p89 = scmp.eq.s32.totalorder %s21, 2
      %p90 = por %p88, %p89
      %p91 = scmp.ne.s32.totalorder %s83, %s86
      %p92 = scmp.eq.s32.totalorder %s21, 0
      %p93 = por %p91, %p92
      %p94 = scmp.ne.s32.totalorder %s83, %s86
      %p95 = scmp.eq.s32.totalorder %s26, 2
      %p96 = por %p94, %p95
      %p97 = scmp.ne.s32.totalorder %s86, %s87
      %p98 = scmp.eq.s32.totalorder %s26, 0
      %p99 = por %p97, %p98
      %p100 = scmp.ne.s32.totalorder %s86, %s87
      %p101 = scmp.eq.s32.totalorder %s27, 2
      %p102 = por %p100, %p101
      %p104 = scmp.ne.s32.totalorder %s87, %s103
      %p105 = scmp.eq.s32.totalorder %s27, 0
      %p106 = por %p104, %p105
      %s108 = sadd.s32 %s107, 1
      %p111 = scmp.eq.s32.totalorder %s21, 2
      %p112 = scmp.ne.s32.totalorder %s107, %s109
      %p113 = scmp.eq.s32.totalorder %s21, 0
      %p114 = por %p112, %p113
      %p115 = scmp.ne.s32.totalorder %s107, %s109
      %p116 = scmp.eq.s32.totalorder %s26, 2
      %p117 = por %p115, %p116
      %p118 = scmp.ne.s32.totalorder %s109, %s110
      %p119 = scmp.eq.s32.totalorder %s26, 0
      %p120 = por %p118, %p119
      %p121 = scmp.ne.s32.totalorder %s109, %s110
      %p122 = scmp.eq.s32.totalorder %s27, 2
      %p123 = por %p121, %p122
      %p125 = scmp.ne.s32.totalorder %s110, %s124
      %p126 = scmp.eq.s32.totalorder %s27, 0
      %p127 = por %p125, %p126
      %s129 = sadd.s32 %s128, 1
      %p132 = scmp.eq.s32.totalorder %s21, 2
      %p133 = scmp.ne.s32.totalorder %s128, %s130
      %p134 = scmp.eq.s32.totalorder %s21, 0
      %p135 = por %p133, %p134
      %p136 = scmp.ne.s32.totalorder %s128, %s130
      %p137 = scmp.eq.s32.totalorder %s26, 2
      %p138 = por %p136, %p137
      %p139 = scmp.ne.s32.totalorder %s130, %s131
      %p140 = scmp.eq.s32.totalorder %s26, 0
      %p141 = por %p139, %p140
      %p142 = scmp.ne.s32.totalorder %s130, %s131
      %p143 = scmp.eq.s32.totalorder %s27, 2
      %p144 = por %p142, %p143
      %p146 = scmp.ne.s32.totalorder %s131, %s145
      %p147 = scmp.eq.s32.totalorder %s27, 0
      %p148 = por %p146, %p147
      %s150 = sadd.s32 %s149, 1
      %p153 = scmp.eq.s32.totalorder %s21, 2
      %p154 = scmp.ne.s32.totalorder %s149, %s151
      %p155 = scmp.eq.s32.totalorder %s21, 0
      %p156 = por %p154, %p155
      %p157 = scmp.ne.s32.totalorder %s149, %s151
      %p158 = scmp.eq.s32.totalorder %s26, 2
      %p159 = por %p157, %p158
      %p160 = scmp.ne.s32.totalorder %s151, %s152
      %p161 = scmp.eq.s32.totalorder %s26, 0
      %p162 = por %p160, %p161
      %p163 = scmp.ne.s32.totalorder %s151, %s152
      %p164 = scmp.eq.s32.totalorder %s27, 2
      %p165 = por %p163, %p164
      %p167 = scmp.ne.s32.totalorder %s152, %s166
      %p168 = scmp.eq.s32.totalorder %s27, 0
      %p169 = por %p167, %p168
      %s171 = sadd.s32 %s170, 1
      %p174 = scmp.eq.s32.totalorder %s21, 2
      %p175 = scmp.ne.s32.totalorder %s170, %s172
      %p176 = scmp.eq.s32.totalorder %s21, 0
      %p177 = por %p175, %p176
      %p178 = scmp.ne.s32.totalorder %s170, %s172
      %p179 = scmp.eq.s32.totalorder %s26, 2
      %p180 = por %p178, %p179
      %p181 = scmp.ne.s32.totalorder %s172, %s173
      %p182 = scmp.eq.s32.totalorder %s26, 0
      %p183 = por %p181, %p182
      %p184 = scmp.ne.s32.totalorder %s172, %s173
      %p185 = scmp.eq.s32.totalorder %s27, 2
      %p186 = por %p184, %p185
      %p188 = scmp.ne.s32.totalorder %s173, %s187
      %p189 = scmp.eq.s32.totalorder %s27, 0
      %p190 = por %p188, %p189
      %s192 = sadd.s32 %s191, 1
      %p195 = scmp.eq.s32.totalorder %s21, 2
      %p196 = scmp.ne.s32.totalorder %s191, %s193
      %p197 = scmp.eq.s32.totalorder %s21, 0
      %p198 = por %p196, %p197
      %p199 = scmp.ne.s32.totalorder %s191, %s193
      %p200 = scmp.eq.s32.totalorder %s26, 2
      %p201 = por %p199, %p200
      %p202 = scmp.ne.s32.totalorder %s193, %s194
      %p203 = scmp.eq.s32.totalorder %s26, 0
      %p204 = por %p202, %p203
      %p205 = scmp.ne.s32.totalorder %s193, %s194
      %p206 = scmp.eq.s32.totalorder %s27, 2
      %p207 = por %p205, %p206
      %p209 = scmp.ne.s32.totalorder %s194, %s208
      %p210 = scmp.eq.s32.totalorder %s27, 0
      %p211 = por %p209, %p210
      %s213 = sadd.s32 %s212, 1
      %p216 = scmp.eq.s32.totalorder %s21, 2
      %p217 = scmp.ne.s32.totalorder %s212, %s214
      %p218 = scmp.eq.s32.totalorder %s21, 0
      %p219 = por %p217, %p218
      %p220 = scmp.ne.s32.totalorder %s212, %s214
      %p221 = scmp.eq.s32.totalorder %s26, 2
      %p222 = por %p220, %p221
      %p223 = scmp.ne.s32.totalorder %s214, %s215
      %p224 = scmp.eq.s32.totalorder %s26, 0
      %p225 = por %p223, %p224
      %p226 = scmp.ne.s32.totalorder %s214, %s215
      %p227 = scmp.eq.s32.totalorder %s27, 2
      %p228 = por %p226, %p227
      %p230 = scmp.ne.s32.totalorder %s215, %s229
      %p231 = scmp.eq.s32.totalorder %s27, 0
      %p232 = por %p230, %p231
      %s234 = sadd.s32 %s233, 1
      %p237 = scmp.eq.s32.totalorder %s21, 2
      %p238 = scmp.ne.s32.totalorder %s233, %s235
      %p239 = scmp.eq.s32.totalorder %s21, 0
      %p240 = por %p238, %p239
      %p241 = scmp.ne.s32.totalorder %s233, %s235
      %p242 = scmp.eq.s32.totalorder %s26, 2
      %p243 = por %p241, %p242
      %p244 = scmp.ne.s32.totalorder %s235, %s236
      %p245 = scmp.eq.s32.totalorder %s26, 0
      %p246 = por %p244, %p245
      %p247 = scmp.ne.s32.totalorder %s235, %s236
      %p248 = scmp.eq.s32.totalorder %s27, 2
      %p249 = por %p247, %p248
      %p251 = scmp.ne.s32.totalorder %s236, %s250
      %p252 = scmp.eq.s32.totalorder %s27, 0
      %p253 = por %p251, %p252
      %s255 = sadd.s32 %s254, 1
      %p258 = scmp.eq.s32.totalorder %s21, 2
      %p259 = scmp.ne.s32.totalorder %s254, %s256
      %p260 = scmp.eq.s32.totalorder %s21, 0
      %p261 = por %p259, %p260
      %p262 = scmp.ne.s32.totalorder %s254, %s256
      %p263 = scmp.eq.s32.totalorder %s26, 2
      %p264 = por %p262, %p263
      %p265 = scmp.ne.s32.totalorder %s256, %s257
      %p266 = scmp.eq.s32.totalorder %s26, 0
      %p267 = por %p265, %p266
      %p268 = scmp.ne.s32.totalorder %s256, %s257
      %p269 = scmp.eq.s32.totalorder %s27, 2
      %p270 = por %p268, %p269
      %p272 = scmp.ne.s32.totalorder %s257, %s271
      %p273 = scmp.eq.s32.totalorder %s27, 0
      %p274 = por %p272, %p273
      %p275 = scmp.le.s32.totalorder 1, %s21
      %p276 = scmp.lt.s32.totalorder %s21, 4
      %p277 = pnand %p275, %p276
      %p278 = pneg %p277
      // Predicated region
      $region9: #{tpu_custom_call.1} parent=5 // pred_check
        _
      $region10: #{tpu_custom_call.1} parent=5 // pred_check_branch
        %280 = sbr.rel (%p277) target = $region12
      $region11: #{tpu_custom_call.1} parent=5 // pred_region
        %s281 = ssub.s32 %s21, 1
        // Predicated region
        $region13: #{tpu_custom_call.1} parent=11 // pred_check
          %p282 = pneg %p120
        $region14: #{tpu_custom_call.1} parent=11 // pred_check_branch
          %284 = sbr.rel (%p282) target = $region16
        $region15: #{tpu_custom_call.1} parent=11 // pred_region
          %s286 = ssub.s32 1024, 1024
          %287 = vsyncadd [#allocation5], %s286
          %s288 = sshll.u32 [#allocation4], 4
          %s289 = int_to_ptr.vmem [resolvable:$true] %s288
          %294 = dma.hbm_to_vmem [thread:$0]  %s3, 1024, %s289, [#allocation5], 128, 128, 8
        $region16: #{tpu_custom_call.1} parent=11 // pred_fallthru
          _
        // Predicated region
        $region17: #{tpu_custom_call.1} parent=11 // pred_check
          %p295 = pneg %p141
        $region18: #{tpu_custom_call.1} parent=11 // pred_check_branch
          %297 = sbr.rel (%p295) target = $region20
        $region19: #{tpu_custom_call.1} parent=11 // pred_region
          %s299 = ssub.s32 2048, 2048
          %300 = vsyncadd [#allocation8], %s299
          %s301 = sshll.u32 [#allocation7], 4
          %s302 = int_to_ptr.vmem [resolvable:$true] %s301
          %307 = dma.hbm_to_vmem [thread:$0]  %s4, 2048, %s302, [#allocation8], 128, 128, 8
        $region20: #{tpu_custom_call.1} parent=11 // pred_fallthru
          _
        // Predicated region
        $region21: #{tpu_custom_call.1} parent=11 // pred_check
          %p308 = pneg %p162
        $region22: #{tpu_custom_call.1} parent=11 // pred_check_branch
          %310 = sbr.rel (%p308) target = $region24
        $region23: #{tpu_custom_call.1} parent=11 // pred_region
          %s312 = ssub.s32 2048, 2048
          %313 = vsyncadd [#allocation8], %s312
          %s314 = sshll.u32 [#allocation9], 4
          %s315 = int_to_ptr.vmem [resolvable:$true] %s314
          %320 = dma.hbm_to_vmem [thread:$0]  %s5, 2048, %s315, [#allocation8], 128, 128, 8
        $region24: #{tpu_custom_call.1} parent=11 // pred_fallthru
          _
        // Predicated region
        $region25: #{tpu_custom_call.1} parent=11 // pred_check
          %p321 = pneg %p183
        $region26: #{tpu_custom_call.1} parent=11 // pred_check_branch
          %323 = sbr.rel (%p321) target = $region28
        $region27: #{tpu_custom_call.1} parent=11 // pred_region
          %s325 = ssub.s32 2048, 2048
          %326 = vsyncadd [#allocation11], %s325
          %s327 = sshll.u32 [#allocation10], 4
          %s328 = int_to_ptr.vmem [resolvable:$true] %s327
          %333 = dma.hbm_to_vmem [thread:$0]  %s6, 2048, %s328, [#allocation11], 128, 128, 8
        $region28: #{tpu_custom_call.1} parent=11 // pred_fallthru
          _
        // Predicated region
        $region29: #{tpu_custom_call.1} parent=11 // pred_check
          %p334 = pneg %p204
        $region30: #{tpu_custom_call.1} parent=11 // pred_check_branch
          %336 = sbr.rel (%p334) target = $region32
        $region31: #{tpu_custom_call.1} parent=11 // pred_region
          %s338 = ssub.s32 2048, 2048
          %339 = vsyncadd [#allocation11], %s338
          %s340 = sshll.u32 [#allocation12], 4
          %s341 = int_to_ptr.vmem [resolvable:$true] %s340
          %346 = dma.hbm_to_vmem [thread:$0]  %s7, 2048, %s341, [#allocation11], 128, 128, 8
        $region32: #{tpu_custom_call.1} parent=11 // pred_fallthru
          _
        // Predicated region
        $region33: #{tpu_custom_call.1} parent=11 // pred_check
          %p347 = pneg %p225
        $region34: #{tpu_custom_call.1} parent=11 // pred_check_branch
          %349 = sbr.rel (%p347) target = $region36
        $region35: #{tpu_custom_call.1} parent=11 // pred_region
          %s351 = ssub.s32 2048, 2048
          %352 = vsyncadd [#allocation14], %s351
          %s353 = sshll.u32 [#allocation13], 4
          %s354 = int_to_ptr.vmem [resolvable:$true] %s353
          %359 = dma.hbm_to_vmem [thread:$0]  %s8, 2048, %s354, [#allocation14], 128, 128, 8
        $region36: #{tpu_custom_call.1} parent=11 // pred_fallthru
          _
        // Predicated region
        $region37: #{tpu_custom_call.1} parent=11 // pred_check
          %p360 = pneg %p246
        $region38: #{tpu_custom_call.1} parent=11 // pred_check_branch
          %362 = sbr.rel (%p360) target = $region40
        $region39: #{tpu_custom_call.1} parent=11 // pred_region
          _
        $region40: #{tpu_custom_call.1} parent=11 // pred_fallthru
          _
      $region12: #{tpu_custom_call.1} parent=5 // pred_fallthru
        _
      %p363 = scmp.lt.s32.totalorder %s21, 3
      // Predicated region
      $region41: #{tpu_custom_call.1} parent=5 // pred_check
        %p364 = pneg %p363
      $region42: #{tpu_custom_call.1} parent=5 // pred_check_branch
        %366 = sbr.rel (%p364) target = $region44
      $region43: #{tpu_custom_call.1} parent=5 // pred_region
        // Predicated region
        $region45: #{tpu_custom_call.1} parent=43 // pred_check
          %p367 = pneg %p41
        $region46: #{tpu_custom_call.1} parent=43 // pred_check_branch
          %369 = sbr.rel (%p367) target = $region48
        $region47: #{tpu_custom_call.1} parent=43 // pred_region
          %s370 = smul.u32 16, %s21
          %p371 = scmp.lt.s32.totalorder %s370, 47
          %s372 = scalar_select %p371, %s370, 47
          %s373 = smul.addr %s372, 8
          %s374 = scalar_lea.vmem %s0, %s373
          %s375 = smul.u32 16, %s21
        $region48: #{tpu_custom_call.1} parent=43 // pred_fallthru
          _
        // Predicated region
        $region49: #{tpu_custom_call.1} parent=43 // pred_check
          %p376 = pneg %p67
        $region50: #{tpu_custom_call.1} parent=43 // pred_check_branch
          %378 = sbr.rel (%p376) target = $region52
        $region51: #{tpu_custom_call.1} parent=43 // pred_region
          %p379 = scmp.lt.s32.totalorder %s21, 2
          %s380 = scalar_select %p379, %s21, 2
          %s381 = scalar_lea.vmem %s1, %s380
        $region52: #{tpu_custom_call.1} parent=43 // pred_fallthru
          _
        // Predicated region
        $region53: #{tpu_custom_call.1} parent=43 // pred_check
          %p382 = pneg %p93
        $region54: #{tpu_custom_call.1} parent=43 // pred_check_branch
          %384 = sbr.rel (%p382) target = $region56
        $region55: #{tpu_custom_call.1} parent=43 // pred_region
          %s385 = smul.u32 16, %s21
          %p386 = scmp.lt.s32.totalorder %s385, 47
          %s387 = scalar_select %p386, %s385, 47
          %s388 = smul.addr %s387, 8
          %s389 = scalar_lea.vmem %s2, %s388
          %s390 = smul.u32 16, %s21
        $region56: #{tpu_custom_call.1} parent=43 // pred_fallthru
          _
      $region44: #{tpu_custom_call.1} parent=5 // pred_fallthru
        _
      %p391 = scmp.le.s32.totalorder 1, %s21
      %p392 = scmp.lt.s32.totalorder %s21, 4
      %p393 = pnand %p391, %p392
      %p394 = pneg %p393
      // Predicated region
      $region57: #{tpu_custom_call.1} parent=5 // pred_check
        _
      $region58: #{tpu_custom_call.1} parent=5 // pred_check_branch
        %396 = sbr.rel (%p393) target = $region60
      $region59: #{tpu_custom_call.1} parent=5 // pred_region
        %s397 = ssub.s32 %s21, 1
        // Predicated region
        $region61: #{tpu_custom_call.1} parent=59 // pred_check
          %p398 = pneg %p120
        $region62: #{tpu_custom_call.1} parent=59 // pred_check_branch
          %400 = sbr.rel (%p398) target = $region64
        $region63: #{tpu_custom_call.1} parent=59 // pred_region
          %401 = dma.done [#allocation5], 1024
        $region64: #{tpu_custom_call.1} parent=59 // pred_fallthru
          _
        // Predicated region
        $region65: #{tpu_custom_call.1} parent=59 // pred_check
          %p402 = pneg %p141
        $region66: #{tpu_custom_call.1} parent=59 // pred_check_branch
          %404 = sbr.rel (%p402) target = $region68
        $region67: #{tpu_custom_call.1} parent=59 // pred_region
          %405 = dma.done [#allocation8], 2048
        $region68: #{tpu_custom_call.1} parent=59 // pred_fallthru
          _
        // Predicated region
        $region69: #{tpu_custom_call.1} parent=59 // pred_check
          %p406 = pneg %p162
        $region70: #{tpu_custom_call.1} parent=59 // pred_check_branch
          %408 = sbr.rel (%p406) target = $region72
        $region71: #{tpu_custom_call.1} parent=59 // pred_region
          %409 = dma.done [#allocation8], 2048
        $region72: #{tpu_custom_call.1} parent=59 // pred_fallthru
          _
        // Predicated region
        $region73: #{tpu_custom_call.1} parent=59 // pred_check
          %p410 = pneg %p183
        $region74: #{tpu_custom_call.1} parent=59 // pred_check_branch
          %412 = sbr.rel (%p410) target = $region76
        $region75: #{tpu_custom_call.1} parent=59 // pred_region
          %413 = dma.done [#allocation11], 2048
        $region76: #{tpu_custom_call.1} parent=59 // pred_fallthru
          _
        // Predicated region
        $region77: #{tpu_custom_call.1} parent=59 // pred_check
          %p414 = pneg %p204
        $region78: #{tpu_custom_call.1} parent=59 // pred_check_branch
          %416 = sbr.rel (%p414) target = $region80
        $region79: #{tpu_custom_call.1} parent=59 // pred_region
          %417 = dma.done [#allocation11], 2048
        $region80: #{tpu_custom_call.1} parent=59 // pred_fallthru
          _
        // Predicated region
        $region81: #{tpu_custom_call.1} parent=59 // pred_check
          %p418 = pneg %p225
        $region82: #{tpu_custom_call.1} parent=59 // pred_check_branch
          %420 = sbr.rel (%p418) target = $region84
        $region83: #{tpu_custom_call.1} parent=59 // pred_region
          %421 = dma.done [#allocation14], 2048
        $region84: #{tpu_custom_call.1} parent=59 // pred_fallthru
          _
        %s422 = smul.u32 16, %s26
        %p423 = scmp.lt.s32.totalorder %s422, 47
        %s424 = scalar_select %p423, %s422, 47
        %s425 = smul.addr %s424, 8
        %s426 = scalar_lea.vmem %s0, %s425
        %p427 = pneg %p47
        %p428 = pneg %p44
        %p429 = scmp.lt.s32.totalorder %s26, 2
        %s430 = scalar_select %p429, %s26, 2
        %s431 = scalar_lea.vmem %s1, %s430
        %p432 = pneg %p73
        %p433 = pneg %p70
        %s434 = smul.u32 16, %s26
        %p435 = scmp.lt.s32.totalorder %s434, 47
        %s436 = scalar_select %p435, %s434, 47
        %s437 = smul.addr %s436, 8
        %s438 = scalar_lea.vmem %s2, %s437
        %p439 = pneg %p99
        %p440 = pneg %p96
        %p441 = pneg %p120
        %p442 = pneg %p117
        %p443 = pneg %p141
        %p444 = pneg %p138
        %p445 = pneg %p162
        %p446 = pneg %p159
        %p447 = pneg %p183
        %p448 = pneg %p180
        %p449 = pneg %p204
        %p450 = pneg %p201
        %p451 = pneg %p225
        %p452 = pneg %p222
        %p453 = pneg %p246
        %p454 = pneg %p243
        %p455 = pneg %p267
        %p456 = pneg %p264
        %s457 = smul.u32 16, %s26
        %p458 = scmp.lt.s32.totalorder %s457, 47
        %s459 = scalar_select %p458, %s457, 47
        %s460 = smul.addr %s459, 8
        %s461 = scalar_lea.vmem %s0, %s460
        %s462 = smul.u32 16, %s26
        %p463 = scmp.lt.s32.totalorder %s26, 2
        %s464 = scalar_select %p463, %s26, 2
        %s465 = scalar_lea.vmem %s1, %s464
        %s466 = smul.u32 16, %s26
        %p467 = scmp.lt.s32.totalorder %s466, 47
        %s468 = scalar_select %p467, %s466, 47
        %s469 = smul.addr %s468, 8
        %s470 = scalar_lea.vmem %s2, %s469
        %s471 = smul.u32 16, %s26
        %v472 = vld [vmem:[%s9] sm:$0xff]
        %p473 = scmp.eq.s32.totalorder %s26, 0
        // Predicated region
        $region85: #{tpu_custom_call.1} parent=59 // pred_check
          %p474 = pneg %p473
        $region86: #{tpu_custom_call.1} parent=59 // pred_check_branch
          %476 = sbr.rel (%p474) target = $region88
        $region87: #{tpu_custom_call.1} parent=59 // pred_region
          %v477 = vld [vmem:[#allocation4] sm:$0xff]
          %v478 = vld [vmem:[#allocation4 + $0x8] sm:$0xff]
          %v479 = vld [vmem:[#allocation4 + $0x10] sm:$0xff]
          %v480 = vld [vmem:[#allocation4 + $0x18] sm:$0xff]
          %v481 = vld [vmem:[#allocation4 + $0x20] sm:$0xff]
          %v482 = vld [vmem:[#allocation4 + $0x28] sm:$0xff]
          %v483 = vld [vmem:[#allocation4 + $0x30] sm:$0xff]
          %v484 = vld [vmem:[#allocation4 + $0x38] sm:$0xff]
          %v485 = vld [vmem:[#allocation10] sm:$0xff]
          %v486 = vld [vmem:[#allocation10 + $0x8] sm:$0xff]
          %v487 = vld [vmem:[#allocation10 + $0x10] sm:$0xff]
          %v488 = vld [vmem:[#allocation10 + $0x18] sm:$0xff]
          %v489 = vld [vmem:[#allocation10 + $0x20] sm:$0xff]
          %v490 = vld [vmem:[#allocation10 + $0x28] sm:$0xff]
          %v491 = vld [vmem:[#allocation10 + $0x30] sm:$0xff]
          %v492 = vld [vmem:[#allocation10 + $0x38] sm:$0xff]
          %v493 = vld [vmem:[#allocation10 + $0x40] sm:$0xff]
          %v494 = vld [vmem:[#allocation10 + $0x48] sm:$0xff]
          %v495 = vld [vmem:[#allocation10 + $0x50] sm:$0xff]
          %v496 = vld [vmem:[#allocation10 + $0x58] sm:$0xff]
          %v497 = vld [vmem:[#allocation10 + $0x60] sm:$0xff]
          %v498 = vld [vmem:[#allocation10 + $0x68] sm:$0xff]
          %v499 = vld [vmem:[#allocation10 + $0x70] sm:$0xff]
          %v500 = vld [vmem:[#allocation10 + $0x78] sm:$0xff]
          %501 = vmatprep.subr.mxu0 0.0
          %502 = vmatpush1.msra.mxu0 %v485
          %503 = vmatprep.subr.mxu0 0.0
          %504 = vmatpush1.msra.mxu0 %v486
          %505 = vmatprep.subr.mxu0 0.0
          %506 = vmatpush1.msra.mxu0 %v487
          %507 = vmatprep.subr.mxu0 0.0
          %508 = vmatpush1.msra.mxu0 %v488
          %509 = vmatprep.subr.mxu0 0.0
          %510 = vmatpush1.msra.mxu0 %v489
          %511 = vmatprep.subr.mxu0 0.0
          %512 = vmatpush1.msra.mxu0 %v490
          %513 = vmatprep.subr.mxu0 0.0
          %514 = vmatpush1.msra.mxu0 %v491
          %515 = vmatprep.subr.mxu0 0.0
          %516 = vmatpush1.msra.mxu0 %v492
          %517 = vmatprep.subr.mxu0 0.0
          %518 = vmatpush1.msra.mxu0 %v493
          %519 = vmatprep.subr.mxu0 0.0
          %520 = vmatpush1.msra.mxu0 %v494
          %521 = vmatprep.subr.mxu0 0.0
          %522 = vmatpush1.msra.mxu0 %v495
          %523 = vmatprep.subr.mxu0 0.0
          %524 = vmatpush1.msra.mxu0 %v496
          %525 = vmatprep.subr.mxu0 0.0
          %526 = vmatpush1.msra.mxu0 %v497
          %527 = vmatprep.subr.mxu0 0.0
          %528 = vmatpush1.msra.mxu0 %v498
          %529 = vmatprep.subr.mxu0 0.0
          %530 = vmatpush1.msra.mxu0 %v499
          %531 = vmatprep.subr.mxu0 0.0
          %532 = vmatpush1.msra.mxu0 %v500
          %533 = vmatprep.subr.mxu0 0.0
          %534 = vmatpush1.msra.mxu0 0.0
          %535 = vmatprep.subr.mxu0 0.0
          %536 = vmatpush1.msra.mxu0 0.0
          %537 = vmatprep.subr.mxu0 0.0
          %538 = vmatpush1.msra.mxu0 0.0
          %539 = vmatprep.subr.mxu0 0.0
          %540 = vmatpush1.msra.mxu0 0.0
          %541 = vmatprep.subr.mxu0 0.0
          %542 = vmatpush1.msra.mxu0 0.0
          %543 = vmatprep.subr.mxu0 0.0
          %544 = vmatpush1.msra.mxu0 0.0
          %545 = vmatprep.subr.mxu0 0.0
          %546 = vmatpush1.msra.mxu0 0.0
          %547 = vmatprep.subr.mxu0 0.0
          %548 = vmatpush1.msra.mxu0 0.0
          %549 = vmatprep.subr.mxu0 0.0
          %550 = vmatpush1.msra.mxu0 0.0
          %551 = vmatprep.subr.mxu0 0.0
          %552 = vmatpush1.msra.mxu0 0.0
          %553 = vmatprep.subr.mxu0 0.0
          %554 = vmatpush1.msra.mxu0 0.0
          %555 = vmatprep.subr.mxu0 0.0
          %556 = vmatpush1.msra.mxu0 0.0
          %557 = vmatprep.subr.mxu0 0.0
          %558 = vmatpush1.msra.mxu0 0.0
          %559 = vmatprep.subr.mxu0 0.0
          %560 = vmatpush1.msra.mxu0 0.0
          %561 = vmatprep.subr.mxu0 0.0
          %562 = vmatpush1.msra.mxu0 0.0
          %563 = vmatprep.subr.mxu0 0.0
          %564 = vmatpush1.msra.mxu0 0.0
          %565 = vmatprep.mubr.f32.mxu0 0.0
          %566 = vmatmul.mubr.f32.gmra.mrb[0].mxu0 %v477
          %v567 = vpop.f32.mrb[0].mxu0
          %v568 = vadd.f32 0.0, %v567
          %v569 = vpop.f32.mrb[0].mxu0
          %570 = vmatprep.mubr.f32.mxu0 0.0
          %571 = vmatmul.mubr.f32.gmra.mrb[0].mxu0 %v478
          %v572 = vpop.f32.mrb[0].mxu0
          %v573 = vadd.f32 0.0, %v572
          %v574 = vpop.f32.mrb[0].mxu0
          %575 = vmatprep.mubr.f32.mxu0 0.0
          %576 = vmatmul.mubr.f32.gmra.mrb[0].mxu0 %v479
          %v577 = vpop.f32.mrb[0].mxu0
          %v578 = vadd.f32 0.0, %v577
          %v579 = vpop.f32.mrb[0].mxu0
          %580 = vmatprep.mubr.f32.mxu0 0.0
          %581 = vmatmul.mubr.f32.gmra.mrb[0].mxu0 %v480
          %v582 = vpop.f32.mrb[0].mxu0
          %v583 = vadd.f32 0.0, %v582
          %v584 = vpop.f32.mrb[0].mxu0
          %585 = vmatprep.mubr.f32.mxu0 0.0
          %586 = vmatmul.mubr.f32.gmra.mrb[0].mxu0 %v481
          %v587 = vpop.f32.mrb[0].mxu0
          %v588 = vadd.f32 0.0, %v587
          %v589 = vpop.f32.mrb[0].mxu0
          %590 = vmatprep.mubr.f32.mxu0 0.0
          %591 = vmatmul.mubr.f32.gmra.mrb[0].mxu0 %v482
          %v592 = vpop.f32.mrb[0].mxu0
          %v593 = vadd.f32 0.0, %v592
          %v594 = vpop.f32.mrb[0].mxu0
          %595 = vmatprep.mubr.f32.mxu0 0.0
          %596 = vmatmul.mubr.f32.gmra.mrb[0].mxu0 %v483
          %v597 = vpop.f32.mrb[0].mxu0
          %v598 = vadd.f32 0.0, %v597
          %v599 = vpop.f32.mrb[0].mxu0
          %600 = vmatprep.mubr.f32.mxu0 0.0
          %601 = vmatmul.mubr.f32.gmra.mrb[0].mxu0 %v484
          %v602 = vpop.f32.mrb[0].mxu0
          %v603 = vadd.f32 0.0, %v602
          %v604 = vpop.f32.mrb[0].mxu0
          %605 = vdwg.mxu0
          %606 = vst [vmem:[#allocation2] sm:$0xff] %v568
          %607 = vst [vmem:[#allocation2 + $0x8] sm:$0xff] %v573
          %608 = vst [vmem:[#allocation2 + $0x10] sm:$0xff] %v578
          %609 = vst [vmem:[#allocation2 + $0x18] sm:$0xff] %v583
          %610 = vst [vmem:[#allocation2 + $0x20] sm:$0xff] %v588
          %611 = vst [vmem:[#allocation2 + $0x28] sm:$0xff] %v593
          %612 = vst [vmem:[#allocation2 + $0x30] sm:$0xff] %v598
          %613 = vst [vmem:[#allocation2 + $0x38] sm:$0xff] %v603
          %614 = vst [vmem:[#allocation3] sm:$0xff] 0.0
          %615 = vst [vmem:[#allocation3 + $0x8] sm:$0xff] 0.0
          %616 = vst [vmem:[#allocation3 + $0x10] sm:$0xff] 0.0
          %617 = vst [vmem:[#allocation3 + $0x18] sm:$0xff] 0.0
          %618 = vst [vmem:[#allocation3 + $0x20] sm:$0xff] 0.0
          %619 = vst [vmem:[#allocation3 + $0x28] sm:$0xff] 0.0
          %620 = vst [vmem:[#allocation3 + $0x30] sm:$0xff] 0.0
          %621 = vst [vmem:[#allocation3 + $0x38] sm:$0xff] 0.0
        $region88: #{tpu_custom_call.1} parent=59 // pred_fallthru
          _
        %v622 = vld [vmem:[%s461] sm:$0xff]
        %v623 = vld [vmem:[%s461 + $0x8] sm:$0xff]
        %v624 = vld [vmem:[%s461 + $0x10] sm:$0xff]
        %v625 = vld [vmem:[%s461 + $0x18] sm:$0xff]
        %v626 = vld [vmem:[%s461 + $0x20] sm:$0xff]
        %v627 = vld [vmem:[%s461 + $0x28] sm:$0xff]
        %v628 = vld [vmem:[%s461 + $0x30] sm:$0xff]
        %v629 = vld [vmem:[%s461 + $0x38] sm:$0xff]
        %v630 = vld [vmem:[%s461 + $0x40] sm:$0xff]
        %v631 = vld [vmem:[%s461 + $0x48] sm:$0xff]
        %v632 = vld [vmem:[%s461 + $0x50] sm:$0xff]
        %v633 = vld [vmem:[%s461 + $0x58] sm:$0xff]
        %v634 = vld [vmem:[%s461 + $0x60] sm:$0xff]
        %v635 = vld [vmem:[%s461 + $0x68] sm:$0xff]
        %v636 = vld [vmem:[%s461 + $0x70] sm:$0xff]
        %v637 = vld [vmem:[%s461 + $0x78] sm:$0xff]
        %v638 = vcvt.f32.s32.to.zero.pseudo %v622
        %v639 = vcvt.f32.s32.to.zero.pseudo %v623
        %v640 = vcvt.f32.s32.to.zero.pseudo %v624
        %v641 = vcvt.f32.s32.to.zero.pseudo %v625
        %v642 = vcvt.f32.s32.to.zero.pseudo %v626
        %v643 = vcvt.f32.s32.to.zero.pseudo %v627
        %v644 = vcvt.f32.s32.to.zero.pseudo %v628
        %v645 = vcvt.f32.s32.to.zero.pseudo %v629
        %v646 = vcvt.f32.s32.to.zero.pseudo %v630
        %v647 = vcvt.f32.s32.to.zero.pseudo %v631
        %v648 = vcvt.f32.s32.to.zero.pseudo %v632
        %v649 = vcvt.f32.s32.to.zero.pseudo %v633
        %v650 = vcvt.f32.s32.to.zero.pseudo %v634
        %v651 = vcvt.f32.s32.to.zero.pseudo %v635
        %v652 = vcvt.f32.s32.to.zero.pseudo %v636
        %v653 = vcvt.f32.s32.to.zero.pseudo %v637
        %v654 = vld [vmem:[%s470] sm:$0xff]
        %v655 = vld [vmem:[%s470 + $0x8] sm:$0xff]
        %v656 = vld [vmem:[%s470 + $0x10] sm:$0xff]
        %v657 = vld [vmem:[%s470 + $0x18] sm:$0xff]
        %v658 = vld [vmem:[%s470 + $0x20] sm:$0xff]
        %v659 = vld [vmem:[%s470 + $0x28] sm:$0xff]
        %v660 = vld [vmem:[%s470 + $0x30] sm:$0xff]
        %v661 = vld [vmem:[%s470 + $0x38] sm:$0xff]
        %v662 = vld [vmem:[%s470 + $0x40] sm:$0xff]
        %v663 = vld [vmem:[%s470 + $0x48] sm:$0xff]
        %v664 = vld [vmem:[%s470 + $0x50] sm:$0xff]
        %v665 = vld [vmem:[%s470 + $0x58] sm:$0xff]
        %v666 = vld [vmem:[%s470 + $0x60] sm:$0xff]
        %v667 = vld [vmem:[%s470 + $0x68] sm:$0xff]
        %v668 = vld [vmem:[%s470 + $0x70] sm:$0xff]
        %v669 = vld [vmem:[%s470 + $0x78] sm:$0xff]
        %v670 = vld [vmem:[#allocation7] sm:$0xff]
        %v671 = vld [vmem:[#allocation7 + $0x8] sm:$0xff]
        %v672 = vld [vmem:[#allocation7 + $0x10] sm:$0xff]
        %v673 = vld [vmem:[#allocation7 + $0x18] sm:$0xff]
        %v674 = vld [vmem:[#allocation7 + $0x20] sm:$0xff]
        %v675 = vld [vmem:[#allocation7 + $0x28] sm:$0xff]
        %v676 = vld [vmem:[#allocation7 + $0x30] sm:$0xff]
        %v677 = vld [vmem:[#allocation7 + $0x38] sm:$0xff]
        %v678 = vld [vmem:[#allocation7 + $0x40] sm:$0xff]
        %v679 = vld [vmem:[#allocation7 + $0x48] sm:$0xff]
        %v680 = vld [vmem:[#allocation7 + $0x50] sm:$0xff]
        %v681 = vld [vmem:[#allocation7 + $0x58] sm:$0xff]
        %v682 = vld [vmem:[#allocation7 + $0x60] sm:$0xff]
        %v683 = vld [vmem:[#allocation7 + $0x68] sm:$0xff]
        %v684 = vld [vmem:[#allocation7 + $0x70] sm:$0xff]
        %v685 = vld [vmem:[#allocation7 + $0x78] sm:$0xff]
        %v686 = vlaneseq
        %v687 = vshrl.u32 %v686, 7
        %v688 = vsub.s32 0, %v687
        %v689 = vrot.slane %v472, %v688
        %690 = vmatprep.subr.mxu0 0.0
        %691 = vmatpush1.msra.mxu0 %v670
        %692 = vmatprep.subr.mxu0 0.0
        %693 = vmatpush1.msra.mxu0 %v671
        %694 = vmatprep.subr.mxu0 0.0
        %695 = vmatpush1.msra.mxu0 %v672
        %696 = vmatprep.subr.mxu0 0.0
        %697 = vmatpush1.msra.mxu0 %v673
        %698 = vmatprep.subr.mxu0 0.0
        %699 = vmatpush1.msra.mxu0 %v674
        %700 = vmatprep.subr.mxu0 0.0
        %701 = vmatpush1.msra.mxu0 %v675
        %702 = vmatprep.subr.mxu0 0.0
        %703 = vmatpush1.msra.mxu0 %v676
        %704 = vmatprep.subr.mxu0 0.0
        %705 = vmatpush1.msra.mxu0 %v677
        %706 = vmatprep.subr.mxu0 0.0
        %707 = vmatpush1.msra.mxu0 %v678
        %708 = vmatprep.subr.mxu0 0.0
        %709 = vmatpush1.msra.mxu0 %v679
        %710 = vmatprep.subr.mxu0 0.0
        %711 = vmatpush1.msra.mxu0 %v680
        %712 = vmatprep.subr.mxu0 0.0
        %713 = vmatpush1.msra.mxu0 %v681
        %714 = vmatprep.subr.mxu0 0.0
        %715 = vmatpush1.msra.mxu0 %v682
        %716 = vmatprep.subr.mxu0 0.0
        %717 = vmatpush1.msra.mxu0 %v683
        %718 = vmatprep.subr.mxu0 0.0
        %719 = vmatpush1.msra.mxu0 %v684
        %720 = vmatprep.subr.mxu0 0.0
        %721 = vmatpush1.msra.mxu0 %v685
        %722 = vmatprep.subr.mxu0 0.0
        %723 = vmatpush1.msra.mxu0 0.0
        %724 = vmatprep.subr.mxu0 0.0
        %725 = vmatpush1.msra.mxu0 0.0
        %726 = vmatprep.subr.mxu0 0.0
        %727 = vmatpush1.msra.mxu0 0.0
        %728 = vmatprep.subr.mxu0 0.0
        %729 = vmatpush1.msra.mxu0 0.0
        %730 = vmatprep.subr.mxu0 0.0
        %731 = vmatpush1.msra.mxu0 0.0
        %732 = vmatprep.subr.mxu0 0.0
        %733 = vmatpush1.msra.mxu0 0.0
        %734 = vmatprep.subr.mxu0 0.0
        %735 = vmatpush1.msra.mxu0 0.0
        %736 = vmatprep.subr.mxu0 0.0
        %737 = vmatpush1.msra.mxu0 0.0
        %738 = vmatprep.subr.mxu0 0.0
        %739 = vmatpush1.msra.mxu0 0.0
        %740 = vmatprep.subr.mxu0 0.0
        %741 = vmatpush1.msra.mxu0 0.0
        %742 = vmatprep.subr.mxu0 0.0
        %743 = vmatpush1.msra.mxu0 0.0
        %744 = vmatprep.subr.mxu0 0.0
        %745 = vmatpush1.msra.mxu0 0.0
        %746 = vmatprep.subr.mxu0 0.0
        %747 = vmatpush1.msra.mxu0 0.0
        %748 = vmatprep.subr.mxu0 0.0
        %749 = vmatpush1.msra.mxu0 0.0
        %750 = vmatprep.subr.mxu0 0.0
        %751 = vmatpush1.msra.mxu0 0.0
        %752 = vmatprep.subr.mxu0 0.0
        %753 = vmatpush1.msra.mxu0 0.0
        %754 = vmatprep.mubr.f32.mxu0 0.0
        %755 = vmatmul.mubr.f32.gmra.mrb[0].mxu0 %v654
        %v756 = vpop.f32.mrb[0].mxu0
        %v757 = vadd.f32 %v689, %v756
        %v758 = vpop.f32.mrb[0].mxu0
        %759 = vmatprep.mubr.f32.mxu0 0.0
        %760 = vmatmul.mubr.f32.gmra.mrb[0].mxu0 %v655
        %v761 = vpop.f32.mrb[0].mxu0
        %v762 = vadd.f32 %v689, %v761
        %v763 = vpop.f32.mrb[0].mxu0
        %764 = vmatprep.mubr.f32.mxu0 0.0
        %765 = vmatmul.mubr.f32.gmra.mrb[0].mxu0 %v656
        %v766 = vpop.f32.mrb[0].mxu0
        %v767 = vadd.f32 %v689, %v766
        %v768 = vpop.f32.mrb[0].mxu0
        %769 = vmatprep.mubr.f32.mxu0 0.0
        %770 = vmatmul.mubr.f32.gmra.mrb[0].mxu0 %v657
        %v771 = vpop.f32.mrb[0].mxu0
        %v772 = vadd.f32 %v689, %v771
        %v773 = vpop.f32.mrb[0].mxu0
        %774 = vmatprep.mubr.f32.mxu0 0.0
        %775 = vmatmul.mubr.f32.gmra.mrb[0].mxu0 %v658
        %v776 = vpop.f32.mrb[0].mxu0
        %v777 = vadd.f32 %v689, %v776
        %v778 = vpop.f32.mrb[0].mxu0
        %779 = vmatprep.mubr.f32.mxu0 0.0
        %780 = vmatmul.mubr.f32.gmra.mrb[0].mxu0 %v659
        %v781 = vpop.f32.mrb[0].mxu0
        %v782 = vadd.f32 %v689, %v781
        %v783 = vpop.f32.mrb[0].mxu0
        %784 = vmatprep.mubr.f32.mxu0 0.0
        %785 = vmatmul.mubr.f32.gmra.mrb[0].mxu0 %v660
        %v786 = vpop.f32.mrb[0].mxu0
        %v787 = vadd.f32 %v689, %v786
        %v788 = vpop.f32.mrb[0].mxu0
        %789 = vmatprep.mubr.f32.mxu0 0.0
        %790 = vmatmul.mubr.f32.gmra.mrb[0].mxu0 %v661
        %v791 = vpop.f32.mrb[0].mxu0
        %v792 = vadd.f32 %v689, %v791
        %v793 = vpop.f32.mrb[0].mxu0
        %794 = vmatprep.mubr.f32.mxu0 0.0
        %795 = vmatmul.mubr.f32.gmra.mrb[0].mxu0 %v662
        %v796 = vpop.f32.mrb[0].mxu0
        %v797 = vadd.f32 %v689, %v796
        %v798 = vpop.f32.mrb[0].mxu0
        %799 = vmatprep.mubr.f32.mxu0 0.0
        %800 = vmatmul.mubr.f32.gmra.mrb[0].mxu0 %v663
        %v801 = vpop.f32.mrb[0].mxu0
        %v802 = vadd.f32 %v689, %v801
        %v803 = vpop.f32.mrb[0].mxu0
        %804 = vmatprep.mubr.f32.mxu0 0.0
        %805 = vmatmul.mubr.f32.gmra.mrb[0].mxu0 %v664
        %v806 = vpop.f32.mrb[0].mxu0
        %v807 = vadd.f32 %v689, %v806
        %v808 = vpop.f32.mrb[0].mxu0
        %809 = vmatprep.mubr.f32.mxu0 0.0
        %810 = vmatmul.mubr.f32.gmra.mrb[0].mxu0 %v665
        %v811 = vpop.f32.mrb[0].mxu0
        %v812 = vadd.f32 %v689, %v811
        %v813 = vpop.f32.mrb[0].mxu0
        %814 = vmatprep.mubr.f32.mxu0 0.0
        %815 = vmatmul.mubr.f32.gmra.mrb[0].mxu0 %v666
        %v816 = vpop.f32.mrb[0].mxu0
        %v817 = vadd.f32 %v689, %v816
        %v818 = vpop.f32.mrb[0].mxu0
        %819 = vmatprep.mubr.f32.mxu0 0.0
        %820 = vmatmul.mubr.f32.gmra.mrb[0].mxu0 %v667
        %v821 = vpop.f32.mrb[0].mxu0
        %v822 = vadd.f32 %v689, %v821
        %v823 = vpop.f32.mrb[0].mxu0
        %824 = vmatprep.mubr.f32.mxu0 0.0
        %825 = vmatmul.mubr.f32.gmra.mrb[0].mxu0 %v668
        %v826 = vpop.f32.mrb[0].mxu0
        %v827 = vadd.f32 %v689, %v826
        %v828 = vpop.f32.mrb[0].mxu0
        %829 = vmatprep.mubr.f32.mxu0 0.0
        %830 = vmatmul.mubr.f32.gmra.mrb[0].mxu0 %v669
        %v831 = vpop.f32.mrb[0].mxu0
        %v832 = vadd.f32 %v689, %v831
        %v833 = vpop.f32.mrb[0].mxu0
        %834 = vdwg.mxu0
        %v835 = vmax.f32 %v757, 0.0
        %v836 = vmax.f32 %v762, 0.0
        %v837 = vmax.f32 %v767, 0.0
        %v838 = vmax.f32 %v772, 0.0
        %v839 = vmax.f32 %v777, 0.0
        %v840 = vmax.f32 %v782, 0.0
        %v841 = vmax.f32 %v787, 0.0
        %v842 = vmax.f32 %v792, 0.0
        %v843 = vmax.f32 %v797, 0.0
        %v844 = vmax.f32 %v802, 0.0
        %v845 = vmax.f32 %v807, 0.0
        %v846 = vmax.f32 %v812, 0.0
        %v847 = vmax.f32 %v817, 0.0
        %v848 = vmax.f32 %v822, 0.0
        %v849 = vmax.f32 %v827, 0.0
        %v850 = vmax.f32 %v832, 0.0
        %v851 = vand.u32 2147483647, %v757
        %v852 = vand.u32 2147483647, %v762
        %v853 = vand.u32 2147483647, %v767
        %v854 = vand.u32 2147483647, %v772
        %v855 = vand.u32 2147483647, %v777
        %v856 = vand.u32 2147483647, %v782
        %v857 = vand.u32 2147483647, %v787
        %v858 = vand.u32 2147483647, %v792
        %v859 = vand.u32 2147483647, %v797
        %v860 = vand.u32 2147483647, %v802
        %v861 = vand.u32 2147483647, %v807
        %v862 = vand.u32 2147483647, %v812
        %v863 = vand.u32 2147483647, %v817
        %v864 = vand.u32 2147483647, %v822
        %v865 = vand.u32 2147483647, %v827
        %v866 = vand.u32 2147483647, %v832
        %v867 = vsub.f32 0.0, %v851
        %v868 = vsub.f32 0.0, %v852
        %v869 = vsub.f32 0.0, %v853
        %v870 = vsub.f32 0.0, %v854
        %v871 = vsub.f32 0.0, %v855
        %v872 = vsub.f32 0.0, %v856
        %v873 = vsub.f32 0.0, %v857
        %v874 = vsub.f32 0.0, %v858
        %v875 = vsub.f32 0.0, %v859
        %v876 = vsub.f32 0.0, %v860
        %v877 = vsub.f32 0.0, %v861
        %v878 = vsub.f32 0.0, %v862
        %v879 = vsub.f32 0.0, %v863
        %v880 = vsub.f32 0.0, %v864
        %v881 = vsub.f32 0.0, %v865
        %v882 = vsub.f32 0.0, %v866
        %v883 = vmul.f32 %v867, 1.442695
        %v884 = vpow.pop %v883
        %v885 = vmul.f32 %v868, 1.442695
        %v886 = vpow.pop %v885
        %v887 = vmul.f32 %v869, 1.442695
        %v888 = vpow.pop %v887
        %v889 = vmul.f32 %v870, 1.442695
        %v890 = vpow.pop %v889
        %v891 = vmul.f32 %v871, 1.442695
        %v892 = vpow.pop %v891
        %v893 = vmul.f32 %v872, 1.442695
        %v894 = vpow.pop %v893
        %v895 = vmul.f32 %v873, 1.442695
        %v896 = vpow.pop %v895
        %v897 = vmul.f32 %v874, 1.442695
        %v898 = vpow.pop %v897
        %v899 = vmul.f32 %v875, 1.442695
        %v900 = vpow.pop %v899
        %v901 = vmul.f32 %v876, 1.442695
        %v902 = vpow.pop %v901
        %v903 = vmul.f32 %v877, 1.442695
        %v904 = vpow.pop %v903
        %v905 = vmul.f32 %v878, 1.442695
        %v906 = vpow.pop %v905
        %v907 = vmul.f32 %v879, 1.442695
        %v908 = vpow.pop %v907
        %v909 = vmul.f32 %v880, 1.442695
        %v910 = vpow.pop %v909
        %v911 = vmul.f32 %v881, 1.442695
        %v912 = vpow.pop %v911
        %v913 = vmul.f32 %v882, 1.442695
        %v914 = vpow.pop %v913
        %v915 = vadd.f32 %v884, 1.0
        %v916 = vlog2.pop %v915
        %v917 = vmul.f32 %v916, 0.6931472
        %v918 = vmul.f32 -0.5, %v884
        %v919 = vadd.f32 %v918, 1.0
        %v920 = vmul.f32 %v919, %v884
        %v921 = vand.u32 2147483647, %v884
        %vm922 = vcmp.lt.f32.partialorder %v921, 0.0004427343
        %v923 = vsel %vm922, %v920, %v917
        %v924 = vadd.f32 %v886, 1.0
        %v925 = vlog2.pop %v924
        %v926 = vmul.f32 %v925, 0.6931472
        %v927 = vmul.f32 -0.5, %v886
        %v928 = vadd.f32 %v927, 1.0
        %v929 = vmul.f32 %v928, %v886
        %v930 = vand.u32 2147483647, %v886
        %vm931 = vcmp.lt.f32.partialorder %v930, 0.0004427343
        %v932 = vsel %vm931, %v929, %v926
        %v933 = vadd.f32 %v888, 1.0
        %v934 = vlog2.pop %v933
        %v935 = vmul.f32 %v934, 0.6931472
        %v936 = vmul.f32 -0.5, %v888
        %v937 = vadd.f32 %v936, 1.0
        %v938 = vmul.f32 %v937, %v888
        %v939 = vand.u32 2147483647, %v888
        %vm940 = vcmp.lt.f32.partialorder %v939, 0.0004427343
        %v941 = vsel %vm940, %v938, %v935
        %v942 = vadd.f32 %v890, 1.0
        %v943 = vlog2.pop %v942
        %v944 = vmul.f32 %v943, 0.6931472
        %v945 = vmul.f32 -0.5, %v890
        %v946 = vadd.f32 %v945, 1.0
        %v947 = vmul.f32 %v946, %v890
        %v948 = vand.u32 2147483647, %v890
        %vm949 = vcmp.lt.f32.partialorder %v948, 0.0004427343
        %v950 = vsel %vm949, %v947, %v944
        %v951 = vadd.f32 %v892, 1.0
        %v952 = vlog2.pop %v951
        %v953 = vmul.f32 %v952, 0.6931472
        %v954 = vmul.f32 -0.5, %v892
        %v955 = vadd.f32 %v954, 1.0
        %v956 = vmul.f32 %v955, %v892
        %v957 = vand.u32 2147483647, %v892
        %vm958 = vcmp.lt.f32.partialorder %v957, 0.0004427343
        %v959 = vsel %vm958, %v956, %v953
        %v960 = vadd.f32 %v894, 1.0
        %v961 = vlog2.pop %v960
        %v962 = vmul.f32 %v961, 0.6931472
        %v963 = vmul.f32 -0.5, %v894
        %v964 = vadd.f32 %v963, 1.0
        %v965 = vmul.f32 %v964, %v894
        %v966 = vand.u32 2147483647, %v894
        %vm967 = vcmp.lt.f32.partialorder %v966, 0.0004427343
        %v968 = vsel %vm967, %v965, %v962
        %v969 = vadd.f32 %v896, 1.0
        %v970 = vlog2.pop %v969
        %v971 = vmul.f32 %v970, 0.6931472
        %v972 = vmul.f32 -0.5, %v896
        %v973 = vadd.f32 %v972, 1.0
        %v974 = vmul.f32 %v973, %v896
        %v975 = vand.u32 2147483647, %v896
        %vm976 = vcmp.lt.f32.partialorder %v975, 0.0004427343
        %v977 = vsel %vm976, %v974, %v971
        %v978 = vadd.f32 %v898, 1.0
        %v979 = vlog2.pop %v978
        %v980 = vmul.f32 %v979, 0.6931472
        %v981 = vmul.f32 -0.5, %v898
        %v982 = vadd.f32 %v981, 1.0
        %v983 = vmul.f32 %v982, %v898
        %v984 = vand.u32 2147483647, %v898
        %vm985 = vcmp.lt.f32.partialorder %v984, 0.0004427343
        %v986 = vsel %vm985, %v983, %v980
        %v987 = vadd.f32 %v900, 1.0
        %v988 = vlog2.pop %v987
        %v989 = vmul.f32 %v988, 0.6931472
        %v990 = vmul.f32 -0.5, %v900
        %v991 = vadd.f32 %v990, 1.0
        %v992 = vmul.f32 %v991, %v900
        %v993 = vand.u32 2147483647, %v900
        %vm994 = vcmp.lt.f32.partialorder %v993, 0.0004427343
        %v995 = vsel %vm994, %v992, %v989
        %v996 = vadd.f32 %v902, 1.0
        %v997 = vlog2.pop %v996
        %v998 = vmul.f32 %v997, 0.6931472
        %v999 = vmul.f32 -0.5, %v902
        %v1000 = vadd.f32 %v999, 1.0
        %v1001 = vmul.f32 %v1000, %v902
        %v1002 = vand.u32 2147483647, %v902
        %vm1003 = vcmp.lt.f32.partialorder %v1002, 0.0004427343
        %v1004 = vsel %vm1003, %v1001, %v998
        %v1005 = vadd.f32 %v904, 1.0
        %v1006 = vlog2.pop %v1005
        %v1007 = vmul.f32 %v1006, 0.6931472
        %v1008 = vmul.f32 -0.5, %v904
        %v1009 = vadd.f32 %v1008, 1.0
        %v1010 = vmul.f32 %v1009, %v904
        %v1011 = vand.u32 2147483647, %v904
        %vm1012 = vcmp.lt.f32.partialorder %v1011, 0.0004427343
        %v1013 = vsel %vm1012, %v1010, %v1007
        %v1014 = vadd.f32 %v906, 1.0
        %v1015 = vlog2.pop %v1014
        %v1016 = vmul.f32 %v1015, 0.6931472
        %v1017 = vmul.f32 -0.5, %v906
        %v1018 = vadd.f32 %v1017, 1.0
        %v1019 = vmul.f32 %v1018, %v906
        %v1020 = vand.u32 2147483647, %v906
        %vm1021 = vcmp.lt.f32.partialorder %v1020, 0.0004427343
        %v1022 = vsel %vm1021, %v1019, %v1016
        %v1023 = vadd.f32 %v908, 1.0
        %v1024 = vlog2.pop %v1023
        %v1025 = vmul.f32 %v1024, 0.6931472
        %v1026 = vmul.f32 -0.5, %v908
        %v1027 = vadd.f32 %v1026, 1.0
        %v1028 = vmul.f32 %v1027, %v908
        %v1029 = vand.u32 2147483647, %v908
        %vm1030 = vcmp.lt.f32.partialorder %v1029, 0.0004427343
        %v1031 = vsel %vm1030, %v1028, %v1025
        %v1032 = vadd.f32 %v910, 1.0
        %v1033 = vlog2.pop %v1032
        %v1034 = vmul.f32 %v1033, 0.6931472
        %v1035 = vmul.f32 -0.5, %v910
        %v1036 = vadd.f32 %v1035, 1.0
        %v1037 = vmul.f32 %v1036, %v910
        %v1038 = vand.u32 2147483647, %v910
        %vm1039 = vcmp.lt.f32.partialorder %v1038, 0.0004427343
        %v1040 = vsel %vm1039, %v1037, %v1034
        %v1041 = vadd.f32 %v912, 1.0
        %v1042 = vlog2.pop %v1041
        %v1043 = vmul.f32 %v1042, 0.6931472
        %v1044 = vmul.f32 -0.5, %v912
        %v1045 = vadd.f32 %v1044, 1.0
        %v1046 = vmul.f32 %v1045, %v912
        %v1047 = vand.u32 2147483647, %v912
        %vm1048 = vcmp.lt.f32.partialorder %v1047, 0.0004427343
        %v1049 = vsel %vm1048, %v1046, %v1043
        %v1050 = vadd.f32 %v914, 1.0
        %v1051 = vlog2.pop %v1050
        %v1052 = vmul.f32 %v1051, 0.6931472
        %v1053 = vmul.f32 -0.5, %v914
        %v1054 = vadd.f32 %v1053, 1.0
        %v1055 = vmul.f32 %v1054, %v914
        %v1056 = vand.u32 2147483647, %v914
        %vm1057 = vcmp.lt.f32.partialorder %v1056, 0.0004427343
        %v1058 = vsel %vm1057, %v1055, %v1052
        %v1059 = vadd.f32 %v835, %v923
        %v1060 = vadd.f32 %v836, %v932
        %v1061 = vadd.f32 %v837, %v941
        %v1062 = vadd.f32 %v838, %v950
        %v1063 = vadd.f32 %v839, %v959
        %v1064 = vadd.f32 %v840, %v968
        %v1065 = vadd.f32 %v841, %v977
        %v1066 = vadd.f32 %v842, %v986
        %v1067 = vadd.f32 %v843, %v995
        %v1068 = vadd.f32 %v844, %v1004
        %v1069 = vadd.f32 %v845, %v1013
        %v1070 = vadd.f32 %v846, %v1022
        %v1071 = vadd.f32 %v847, %v1031
        %v1072 = vadd.f32 %v848, %v1040
        %v1073 = vadd.f32 %v849, %v1049
        %v1074 = vadd.f32 %v850, %v1058
        %v1075 = vsub.f32 %v1059, 0.6931472
        %v1076 = vsub.f32 %v1060, 0.6931472
        %v1077 = vsub.f32 %v1061, 0.6931472
        %v1078 = vsub.f32 %v1062, 0.6931472
        %v1079 = vsub.f32 %v1063, 0.6931472
        %v1080 = vsub.f32 %v1064, 0.6931472
        %v1081 = vsub.f32 %v1065, 0.6931472
        %v1082 = vsub.f32 %v1066, 0.6931472
        %v1083 = vsub.f32 %v1067, 0.6931472
        %v1084 = vsub.f32 %v1068, 0.6931472
        %v1085 = vsub.f32 %v1069, 0.6931472
        %v1086 = vsub.f32 %v1070, 0.6931472
        %v1087 = vsub.f32 %v1071, 0.6931472
        %v1088 = vsub.f32 %v1072, 0.6931472
        %v1089 = vsub.f32 %v1073, 0.6931472
        %v1090 = vsub.f32 %v1074, 0.6931472
        %v1091 = vld [vmem:[#allocation9] sm:$0xff]
        %v1092 = vld [vmem:[#allocation9 + $0x8] sm:$0xff]
        %v1093 = vld [vmem:[#allocation9 + $0x10] sm:$0xff]
        %v1094 = vld [vmem:[#allocation9 + $0x18] sm:$0xff]
        %v1095 = vld [vmem:[#allocation9 + $0x20] sm:$0xff]
        %v1096 = vld [vmem:[#allocation9 + $0x28] sm:$0xff]
        %v1097 = vld [vmem:[#allocation9 + $0x30] sm:$0xff]
        %v1098 = vld [vmem:[#allocation9 + $0x38] sm:$0xff]
        %v1099 = vld [vmem:[#allocation9 + $0x40] sm:$0xff]
        %v1100 = vld [vmem:[#allocation9 + $0x48] sm:$0xff]
        %v1101 = vld [vmem:[#allocation9 + $0x50] sm:$0xff]
        %v1102 = vld [vmem:[#allocation9 + $0x58] sm:$0xff]
        %v1103 = vld [vmem:[#allocation9 + $0x60] sm:$0xff]
        %v1104 = vld [vmem:[#allocation9 + $0x68] sm:$0xff]
        %v1105 = vld [vmem:[#allocation9 + $0x70] sm:$0xff]
        %v1106 = vld [vmem:[#allocation9 + $0x78] sm:$0xff]
        %v1107 = vlaneseq
        %v1108 = vshrl.u32 %v1107, 7
        %v1109 = vsub.s32 1, %v1108
        %v1110 = vrot.slane %v472, %v1109
        %1111 = vmatprep.subr.mxu0 0.0
        %1112 = vmatpush1.msra.mxu0 %v1091
        %1113 = vmatprep.subr.mxu0 0.0
        %1114 = vmatpush1.msra.mxu0 %v1092
        %1115 = vmatprep.subr.mxu0 0.0
        %1116 = vmatpush1.msra.mxu0 %v1093
        %1117 = vmatprep.subr.mxu0 0.0
        %1118 = vmatpush1.msra.mxu0 %v1094
        %1119 = vmatprep.subr.mxu0 0.0
        %1120 = vmatpush1.msra.mxu0 %v1095
        %1121 = vmatprep.subr.mxu0 0.0
        %1122 = vmatpush1.msra.mxu0 %v1096
        %1123 = vmatprep.subr.mxu0 0.0
        %1124 = vmatpush1.msra.mxu0 %v1097
        %1125 = vmatprep.subr.mxu0 0.0
        %1126 = vmatpush1.msra.mxu0 %v1098
        %1127 = vmatprep.subr.mxu0 0.0
        %1128 = vmatpush1.msra.mxu0 %v1099
        %1129 = vmatprep.subr.mxu0 0.0
        %1130 = vmatpush1.msra.mxu0 %v1100
        %1131 = vmatprep.subr.mxu0 0.0
        %1132 = vmatpush1.msra.mxu0 %v1101
        %1133 = vmatprep.subr.mxu0 0.0
        %1134 = vmatpush1.msra.mxu0 %v1102
        %1135 = vmatprep.subr.mxu0 0.0
        %1136 = vmatpush1.msra.mxu0 %v1103
        %1137 = vmatprep.subr.mxu0 0.0
        %1138 = vmatpush1.msra.mxu0 %v1104
        %1139 = vmatprep.subr.mxu0 0.0
        %1140 = vmatpush1.msra.mxu0 %v1105
        %1141 = vmatprep.subr.mxu0 0.0
        %1142 = vmatpush1.msra.mxu0 %v1106
        %1143 = vmatprep.subr.mxu0 0.0
        %1144 = vmatpush1.msra.mxu0 0.0
        %1145 = vmatprep.subr.mxu0 0.0
        %1146 = vmatpush1.msra.mxu0 0.0
        %1147 = vmatprep.subr.mxu0 0.0
        %1148 = vmatpush1.msra.mxu0 0.0
        %1149 = vmatprep.subr.mxu0 0.0
        %1150 = vmatpush1.msra.mxu0 0.0
        %1151 = vmatprep.subr.mxu0 0.0
        %1152 = vmatpush1.msra.mxu0 0.0
        %1153 = vmatprep.subr.mxu0 0.0
        %1154 = vmatpush1.msra.mxu0 0.0
        %1155 = vmatprep.subr.mxu0 0.0
        %1156 = vmatpush1.msra.mxu0 0.0
        %1157 = vmatprep.subr.mxu0 0.0
        %1158 = vmatpush1.msra.mxu0 0.0
        %1159 = vmatprep.subr.mxu0 0.0
        %1160 = vmatpush1.msra.mxu0 0.0
        %1161 = vmatprep.subr.mxu0 0.0
        %1162 = vmatpush1.msra.mxu0 0.0
        %1163 = vmatprep.subr.mxu0 0.0
        %1164 = vmatpush1.msra.mxu0 0.0
        %1165 = vmatprep.subr.mxu0 0.0
        %1166 = vmatpush1.msra.mxu0 0.0
        %1167 = vmatprep.subr.mxu0 0.0
        %1168 = vmatpush1.msra.mxu0 0.0
        %1169 = vmatprep.subr.mxu0 0.0
        %1170 = vmatpush1.msra.mxu0 0.0
        %1171 = vmatprep.subr.mxu0 0.0
        %1172 = vmatpush1.msra.mxu0 0.0
        %1173 = vmatprep.subr.mxu0 0.0
        %1174 = vmatpush1.msra.mxu0 0.0
        %1175 = vmatprep.mubr.f32.mxu0 0.0
        %1176 = vmatmul.mubr.f32.gmra.mrb[0].mxu0 %v1075
        %v1177 = vpop.f32.mrb[0].mxu0
        %v1178 = vadd.f32 %v1110, %v1177
        %v1179 = vpop.f32.mrb[0].mxu0
        %1180 = vmatprep.mubr.f32.mxu0 0.0
        %1181 = vmatmul.mubr.f32.gmra.mrb[0].mxu0 %v1076
        %v1182 = vpop.f32.mrb[0].mxu0
        %v1183 = vadd.f32 %v1110, %v1182
        %v1184 = vpop.f32.mrb[0].mxu0
        %1185 = vmatprep.mubr.f32.mxu0 0.0
        %1186 = vmatmul.mubr.f32.gmra.mrb[0].mxu0 %v1077
        %v1187 = vpop.f32.mrb[0].mxu0
        %v1188 = vadd.f32 %v1110, %v1187
        %v1189 = vpop.f32.mrb[0].mxu0
        %1190 = vmatprep.mubr.f32.mxu0 0.0
        %1191 = vmatmul.mubr.f32.gmra.mrb[0].mxu0 %v1078
        %v1192 = vpop.f32.mrb[0].mxu0
        %v1193 = vadd.f32 %v1110, %v1192
        %v1194 = vpop.f32.mrb[0].mxu0
        %1195 = vmatprep.mubr.f32.mxu0 0.0
        %1196 = vmatmul.mubr.f32.gmra.mrb[0].mxu0 %v1079
        %v1197 = vpop.f32.mrb[0].mxu0
        %v1198 = vadd.f32 %v1110, %v1197
        %v1199 = vpop.f32.mrb[0].mxu0
        %1200 = vmatprep.mubr.f32.mxu0 0.0
        %1201 = vmatmul.mubr.f32.gmra.mrb[0].mxu0 %v1080
        %v1202 = vpop.f32.mrb[0].mxu0
        %v1203 = vadd.f32 %v1110, %v1202
        %v1204 = vpop.f32.mrb[0].mxu0
        %1205 = vmatprep.mubr.f32.mxu0 0.0
        %1206 = vmatmul.mubr.f32.gmra.mrb[0].mxu0 %v1081
        %v1207 = vpop.f32.mrb[0].mxu0
        %v1208 = vadd.f32 %v1110, %v1207
        %v1209 = vpop.f32.mrb[0].mxu0
        %1210 = vmatprep.mubr.f32.mxu0 0.0
        %1211 = vmatmul.mubr.f32.gmra.mrb[0].mxu0 %v1082
        %v1212 = vpop.f32.mrb[0].mxu0
        %v1213 = vadd.f32 %v1110, %v1212
        %v1214 = vpop.f32.mrb[0].mxu0
        %1215 = vmatprep.mubr.f32.mxu0 0.0
        %1216 = vmatmul.mubr.f32.gmra.mrb[0].mxu0 %v1083
        %v1217 = vpop.f32.mrb[0].mxu0
        %v1218 = vadd.f32 %v1110, %v1217
        %v1219 = vpop.f32.mrb[0].mxu0
        %1220 = vmatprep.mubr.f32.mxu0 0.0
        %1221 = vmatmul.mubr.f32.gmra.mrb[0].mxu0 %v1084
        %v1222 = vpop.f32.mrb[0].mxu0
        %v1223 = vadd.f32 %v1110, %v1222
        %v1224 = vpop.f32.mrb[0].mxu0
        %1225 = vmatprep.mubr.f32.mxu0 0.0
        %1226 = vmatmul.mubr.f32.gmra.mrb[0].mxu0 %v1085
        %v1227 = vpop.f32.mrb[0].mxu0
        %v1228 = vadd.f32 %v1110, %v1227
        %v1229 = vpop.f32.mrb[0].mxu0
        %1230 = vmatprep.mubr.f32.mxu0 0.0
        %1231 = vmatmul.mubr.f32.gmra.mrb[0].mxu0 %v1086
        %v1232 = vpop.f32.mrb[0].mxu0
        %v1233 = vadd.f32 %v1110, %v1232
        %v1234 = vpop.f32.mrb[0].mxu0
        %1235 = vmatprep.mubr.f32.mxu0 0.0
        %1236 = vmatmul.mubr.f32.gmra.mrb[0].mxu0 %v1087
        %v1237 = vpop.f32.mrb[0].mxu0
        %v1238 = vadd.f32 %v1110, %v1237
        %v1239 = vpop.f32.mrb[0].mxu0
        %1240 = vmatprep.mubr.f32.mxu0 0.0
        %1241 = vmatmul.mubr.f32.gmra.mrb[0].mxu0 %v1088
        %v1242 = vpop.f32.mrb[0].mxu0
        %v1243 = vadd.f32 %v1110, %v1242
        %v1244 = vpop.f32.mrb[0].mxu0
        %1245 = vmatprep.mubr.f32.mxu0 0.0
        %1246 = vmatmul.mubr.f32.gmra.mrb[0].mxu0 %v1089
        %v1247 = vpop.f32.mrb[0].mxu0
        %v1248 = vadd.f32 %v1110, %v1247
        %v1249 = vpop.f32.mrb[0].mxu0
        %1250 = vmatprep.mubr.f32.mxu0 0.0
        %1251 = vmatmul.mubr.f32.gmra.mrb[0].mxu0 %v1090
        %v1252 = vpop.f32.mrb[0].mxu0
        %v1253 = vadd.f32 %v1110, %v1252
        %v1254 = vpop.f32.mrb[0].mxu0
        %1255 = vdwg.mxu0
        %v1256 = vmul.f32 %v622, 0.31415927
        %v1257 = vmul.f32 %v623, 0.31415927
        %v1258 = vmul.f32 %v624, 0.31415927
        %v1259 = vmul.f32 %v625, 0.31415927
        %v1260 = vmul.f32 %v626, 0.31415927
        %v1261 = vmul.f32 %v627, 0.31415927
        %v1262 = vmul.f32 %v628, 0.31415927
        %v1263 = vmul.f32 %v629, 0.31415927
        %v1264 = vmul.f32 %v630, 0.31415927
        %v1265 = vmul.f32 %v631, 0.31415927
        %v1266 = vmul.f32 %v632, 0.31415927
        %v1267 = vmul.f32 %v633, 0.31415927
        %v1268 = vmul.f32 %v634, 0.31415927
        %v1269 = vmul.f32 %v635, 0.31415927
        %v1270 = vmul.f32 %v636, 0.31415927
        %v1271 = vmul.f32 %v637, 0.31415927
        %v1272 = vand.u32 2147483647, %v1256
        %vm1273 = vcmp.le.f32.partialorder %v1272, 0.7853982
        %vm1274 = vcmp.lt.s32.totalorder %v1256, 0
        %v1275 = vand.u32 %v1256, 2139095040
        %v1276 = vshrl.u32 %v1275, 23
        %v1277 = vsub.s32 %v1276, 127
        %v1278 = vand.u32 2147483647, %v1256
        %v1279 = vand.u32 %v1278, 8388607
        %v1280 = vor.u32 %v1279, 8388608
        %v1281 = vsub.s32 0, %v1280
        %v1282 = vadd.s32 %v1277, 1
        %vm1283 = vcmp.gt.s32.totalorder %v1282, 0
        %v1284 = vsel %vm1283, %v1282, 0
        %v1285 = vshrl.u32 %v1284, 5
        %v1286 = vand.u32 %v1284, 31
        %v1287 = vsub.s32 32, %v1286
        %v1288 = vshrl.u32 683565275, %v1287
        %v1289 = vshll.u32 683565275, %v1286
        %v1290 = vshrl.u32 2475754826, %v1287
        %v1291 = vor.u32 %v1289, %v1290
        %v1292 = vshll.u32 2475754826, %v1286
        %v1293 = vshrl.u32 2131351028, %v1287
        %v1294 = vor.u32 %v1292, %v1293
        %v1295 = vshll.u32 2131351028, %v1286
        %v1296 = vshrl.u32 2102212464, %v1287
        %v1297 = vor.u32 %v1295, %v1296
        %v1298 = vshll.u32 2102212464, %v1286
        %v1299 = vshrl.u32 920167782, %v1287
        %v1300 = vor.u32 %v1298, %v1299
        %v1301 = vshll.u32 920167782, %v1286
        %v1302 = vshrl.u32 1326507024, %v1287
        %v1303 = vor.u32 %v1301, %v1302
        %vm1304 = vcmp.lt.s32.totalorder %v1285, 1
        %vm1305 = vcmp.lt.s32.totalorder %v1285, 2
        %vm1306 = vcmp.lt.s32.totalorder %v1285, 3
        %vm1307 = vcmp.lt.s32.totalorder %v1285, 4
        %v1308 = vsel %vm1304, %v1288, %v1291
        %v1309 = vsel %vm1307, %v1297, 2102212464
        %v1310 = vsel %vm1306, %v1294, %v1309
        %v1311 = vsel %vm1305, %v1308, %v1310
        %v1312 = vsel %vm1304, %v1291, %v1294
        %v1313 = vsel %vm1307, %v1300, 920167782
        %v1314 = vsel %vm1306, %v1297, %v1313
        %v1315 = vsel %vm1305, %v1312, %v1314
        %v1316 = vsel %vm1304, %v1294, %v1297
        %v1317 = vsel %vm1307, %v1303, 1326507024
        %v1318 = vsel %vm1306, %v1300, %v1317
        %v1319 = vsel %vm1305, %v1316, %v1318
        %v1320 = vshll.u32 %v1280, 8
        %v1321 = vmul.u32.u64.compose %v1320, %v1319
        %v1322 = vextract.low.u32 %v1321
        %v1323 = vextract.high.u32 %v1321
        %v1324 = vmul.u32.u64.compose %v1320, %v1315
        %v1325 = vextract.low.u32 %v1324
        %v1326 = vextract.high.u32 %v1324
        %v1327 = vmul.u32 %v1320, %v1311
        %v1328 = vadd.s32 %v1323, %v1325
        %vm1329 = vc.u32 %v1323, %v1325
        %v1330 = vadd.s32 %v1326, 1
        %v1331 = vsel %vm1329, %v1330, %v1326
        %v1332 = vadd.s32 %v1327, %v1331
        %v1333 = vadd.s32 %v1332, 536870912
        %v1334 = vshrl.u32 %v1333, 30
        %v1335 = vshll.u32 %v1334, 30
        %v1336 = vsub.s32 %v1332, %v1335
        %vm1337 = vcmp.lt.s32.totalorder %v1336, 0
        %v1338 = vsub.s32 0, %v1336
        %v1339 = vsel %vm1337, %v1338, %v1336
        %v1340 = vclz %v1339
        %v1341 = vsub.s32 %v1340, 2
        %vm1342 = vcmp.gt.s32.totalorder 0, %v1341
        %v1343 = vsel %vm1342, 0, %v1341
        %v1344 = vsub.s32 32, %v1343
        %v1345 = vshll.u32 %v1336, %v1343
        %v1346 = vshrl.u32 %v1328, %v1344
        %v1347 = vor.u32 %v1345, %v1346
        %v1348 = vsub.s32 4294967266, %v1343
        %v1349 = vadd.s32 %v1348, 127
        %v1350 = vshll.u32 %v1349, 23
        %v1351 = vor.u32 4788187, %v1350
        %v1352 = vand.u32 2147483647, %v1351
        %v1354 = vcvt.s32.f32 %v1347
        %v1355 = vmul.f32 %v1354, %v1352
        %v1356 = vxor.u32 %v1355, 2147483648
        %v1357 = vsel %vm1274, %v1356, %v1355
        %v1358 = vsub.s32 4, %v1334
        %v1359 = vsel %vm1274, %v1358, %v1334
        %v1360 = vsel %vm1273, %v1256, %v1357
        %v1361 = vsel %vm1273, 0, %v1359
        %v1362 = vcosq.f32.pop %v1360
        %v1363 = vsinq.f32.pop %v1360
        %vm1364 = vweird.f32 %v1256
        %v1365 = vand.u32 %v1361, 3
        %vm1366 = vcmp.lt.s32.totalorder %v1365, 2
        %vm1367 = vcmp.eq.s32.totalorder %v1365, 0
        %v1368 = vxor.u32 %v1363, 2147483648
        %v1369 = vsel %vm1367, %v1362, %v1368
        %vm1370 = vcmp.eq.s32.totalorder %v1365, 2
        %v1371 = vxor.u32 %v1362, 2147483648
        %v1372 = vsel %vm1370, %v1371, %v1363
        %v1373 = vsel %vm1366, %v1369, %v1372
        %v1374 = vsel %vm1364, nan, %v1373
        %v1375 = vand.u32 2147483647, %v1257
        %vm1376 = vcmp.le.f32.partialorder %v1375, 0.7853982
        %vm1377 = vcmp.lt.s32.totalorder %v1257, 0
        %v1378 = vand.u32 %v1257, 2139095040
        %v1379 = vshrl.u32 %v1378, 23
        %v1380 = vsub.s32 %v1379, 127
        %v1381 = vand.u32 2147483647, %v1257
        %v1382 = vand.u32 %v1381, 8388607
        %v1383 = vor.u32 %v1382, 8388608
        %v1384 = vsub.s32 0, %v1383
        %v1385 = vadd.s32 %v1380, 1
        %vm1386 = vcmp.gt.s32.totalorder %v1385, 0
        %v1387 = vsel %vm1386, %v1385, 0
        %v1388 = vshrl.u32 %v1387, 5
        %v1389 = vand.u32 %v1387, 31
        %v1390 = vsub.s32 32, %v1389
        %v1391 = vshrl.u32 683565275, %v1390
        %v1392 = vshll.u32 683565275, %v1389
        %v1393 = vshrl.u32 2475754826, %v1390
        %v1394 = vor.u32 %v1392, %v1393
        %v1395 = vshll.u32 2475754826, %v1389
        %v1396 = vshrl.u32 2131351028, %v1390
        %v1397 = vor.u32 %v1395, %v1396
        %v1398 = vshll.u32 2131351028, %v1389
        %v1399 = vshrl.u32 2102212464, %v1390
        %v1400 = vor.u32 %v1398, %v1399
        %v1401 = vshll.u32 2102212464, %v1389
        %v1402 = vshrl.u32 920167782, %v1390
        %v1403 = vor.u32 %v1401, %v1402
        %v1404 = vshll.u32 920167782, %v1389
        %v1405 = vshrl.u32 1326507024, %v1390
        %v1406 = vor.u32 %v1404, %v1405
        %vm1407 = vcmp.lt.s32.totalorder %v1388, 1
        %vm1408 = vcmp.lt.s32.totalorder %v1388, 2
        %vm1409 = vcmp.lt.s32.totalorder %v1388, 3
        %vm1410 = vcmp.lt.s32.totalorder %v1388, 4
        %v1411 = vsel %vm1407, %v1391, %v1394
        %v1412 = vsel %vm1410, %v1400, 2102212464
        %v1413 = vsel %vm1409, %v1397, %v1412
        %v1414 = vsel %vm1408, %v1411, %v1413
        %v1415 = vsel %vm1407, %v1394, %v1397
        %v1416 = vsel %vm1410, %v1403, 920167782
        %v1417 = vsel %vm1409, %v1400, %v1416
        %v1418 = vsel %vm1408, %v1415, %v1417
        %v1419 = vsel %vm1407, %v1397, %v1400
        %v1420 = vsel %vm1410, %v1406, 1326507024
        %v1421 = vsel %vm1409, %v1403, %v1420
        %v1422 = vsel %vm1408, %v1419, %v1421
        %v1423 = vshll.u32 %v1383, 8
        %v1424 = vmul.u32.u64.compose %v1423, %v1422
        %v1425 = vextract.low.u32 %v1424
        %v1426 = vextract.high.u32 %v1424
        %v1427 = vmul.u32.u64.compose %v1423, %v1418
        %v1428 = vextract.low.u32 %v1427
        %v1429 = vextract.high.u32 %v1427
        %v1430 = vmul.u32 %v1423, %v1414
        %v1431 = vadd.s32 %v1426, %v1428
        %vm1432 = vc.u32 %v1426, %v1428
        %v1433 = vadd.s32 %v1429, 1
        %v1434 = vsel %vm1432, %v1433, %v1429
        %v1435 = vadd.s32 %v1430, %v1434
        %v1436 = vadd.s32 %v1435, 536870912
        %v1437 = vshrl.u32 %v1436, 30
        %v1438 = vshll.u32 %v1437, 30
        %v1439 = vsub.s32 %v1435, %v1438
        %vm1440 = vcmp.lt.s32.totalorder %v1439, 0
        %v1441 = vsub.s32 0, %v1439
        %v1442 = vsel %vm1440, %v1441, %v1439
        %v1443 = vclz %v1442
        %v1444 = vsub.s32 %v1443, 2
        %vm1445 = vcmp.gt.s32.totalorder 0, %v1444
        %v1446 = vsel %vm1445, 0, %v1444
        %v1447 = vsub.s32 32, %v1446
        %v1448 = vshll.u32 %v1439, %v1446
        %v1449 = vshrl.u32 %v1431, %v1447
        %v1450 = vor.u32 %v1448, %v1449
        %v1451 = vsub.s32 4294967266, %v1446
        %v1452 = vadd.s32 %v1451, 127
        %v1453 = vshll.u32 %v1452, 23
        %v1454 = vor.u32 4788187, %v1453
        %v1455 = vand.u32 2147483647, %v1454
        %v1457 = vcvt.s32.f32 %v1450
        %v1458 = vmul.f32 %v1457, %v1455
        %v1459 = vxor.u32 %v1458, 2147483648
        %v1460 = vsel %vm1377, %v1459, %v1458
        %v1461 = vsub.s32 4, %v1437
        %v1462 = vsel %vm1377, %v1461, %v1437
        %v1463 = vsel %vm1376, %v1257, %v1460
        %v1464 = vsel %vm1376, 0, %v1462
        %v1465 = vcosq.f32.pop %v1463
        %v1466 = vsinq.f32.pop %v1463
        %vm1467 = vweird.f32 %v1257
        %v1468 = vand.u32 %v1464, 3
        %vm1469 = vcmp.lt.s32.totalorder %v1468, 2
        %vm1470 = vcmp.eq.s32.totalorder %v1468, 0
        %v1471 = vxor.u32 %v1466, 2147483648
        %v1472 = vsel %vm1470, %v1465, %v1471
        %vm1473 = vcmp.eq.s32.totalorder %v1468, 2
        %v1474 = vxor.u32 %v1465, 2147483648
        %v1475 = vsel %vm1473, %v1474, %v1466
        %v1476 = vsel %vm1469, %v1472, %v1475
        %v1477 = vsel %vm1467, nan, %v1476
        %v1478 = vand.u32 2147483647, %v1258
        %vm1479 = vcmp.le.f32.partialorder %v1478, 0.7853982
        %vm1480 = vcmp.lt.s32.totalorder %v1258, 0
        %v1481 = vand.u32 %v1258, 2139095040
        %v1482 = vshrl.u32 %v1481, 23
        %v1483 = vsub.s32 %v1482, 127
        %v1484 = vand.u32 2147483647, %v1258
        %v1485 = vand.u32 %v1484, 8388607
        %v1486 = vor.u32 %v1485, 8388608
        %v1487 = vsub.s32 0, %v1486
        %v1488 = vadd.s32 %v1483, 1
        %vm1489 = vcmp.gt.s32.totalorder %v1488, 0
        %v1490 = vsel %vm1489, %v1488, 0
        %v1491 = vshrl.u32 %v1490, 5
        %v1492 = vand.u32 %v1490, 31
        %v1493 = vsub.s32 32, %v1492
        %v1494 = vshrl.u32 683565275, %v1493
        %v1495 = vshll.u32 683565275, %v1492
        %v1496 = vshrl.u32 2475754826, %v1493
        %v1497 = vor.u32 %v1495, %v1496
        %v1498 = vshll.u32 2475754826, %v1492
        %v1499 = vshrl.u32 2131351028, %v1493
        %v1500 = vor.u32 %v1498, %v1499
        %v1501 = vshll.u32 2131351028, %v1492
        %v1502 = vshrl.u32 2102212464, %v1493
        %v1503 = vor.u32 %v1501, %v1502
        %v1504 = vshll.u32 2102212464, %v1492
        %v1505 = vshrl.u32 920167782, %v1493
        %v1506 = vor.u32 %v1504, %v1505
        %v1507 = vshll.u32 920167782, %v1492
        %v1508 = vshrl.u32 1326507024, %v1493
        %v1509 = vor.u32 %v1507, %v1508
        %vm1510 = vcmp.lt.s32.totalorder %v1491, 1
        %vm1511 = vcmp.lt.s32.totalorder %v1491, 2
        %vm1512 = vcmp.lt.s32.totalorder %v1491, 3
        %vm1513 = vcmp.lt.s32.totalorder %v1491, 4
        %v1514 = vsel %vm1510, %v1494, %v1497
        %v1515 = vsel %vm1513, %v1503, 2102212464
        %v1516 = vsel %vm1512, %v1500, %v1515
        %v1517 = vsel %vm1511, %v1514, %v1516
        %v1518 = vsel %vm1510, %v1497, %v1500
        %v1519 = vsel %vm1513, %v1506, 920167782
        %v1520 = vsel %vm1512, %v1503, %v1519
        %v1521 = vsel %vm1511, %v1518, %v1520
        %v1522 = vsel %vm1510, %v1500, %v1503
        %v1523 = vsel %vm1513, %v1509, 1326507024
        %v1524 = vsel %vm1512, %v1506, %v1523
        %v1525 = vsel %vm1511, %v1522, %v1524
        %v1526 = vshll.u32 %v1486, 8
        %v1527 = vmul.u32.u64.compose %v1526, %v1525
        %v1528 = vextract.low.u32 %v1527
        %v1529 = vextract.high.u32 %v1527
        %v1530 = vmul.u32.u64.compose %v1526, %v1521
        %v1531 = vextract.low.u32 %v1530
        %v1532 = vextract.high.u32 %v1530
        %v1533 = vmul.u32 %v1526, %v1517
        %v1534 = vadd.s32 %v1529, %v1531
        %vm1535 = vc.u32 %v1529, %v1531
        %v1536 = vadd.s32 %v1532, 1
        %v1537 = vsel %vm1535, %v1536, %v1532
        %v1538 = vadd.s32 %v1533, %v1537
        %v1539 = vadd.s32 %v1538, 536870912
        %v1540 = vshrl.u32 %v1539, 30
        %v1541 = vshll.u32 %v1540, 30
        %v1542 = vsub.s32 %v1538, %v1541
        %vm1543 = vcmp.lt.s32.totalorder %v1542, 0
        %v1544 = vsub.s32 0, %v1542
        %v1545 = vsel %vm1543, %v1544, %v1542
        %v1546 = vclz %v1545
        %v1547 = vsub.s32 %v1546, 2
        %vm1548 = vcmp.gt.s32.totalorder 0, %v1547
        %v1549 = vsel %vm1548, 0, %v1547
        %v1550 = vsub.s32 32, %v1549
        %v1551 = vshll.u32 %v1542, %v1549
        %v1552 = vshrl.u32 %v1534, %v1550
        %v1553 = vor.u32 %v1551, %v1552
        %v1554 = vsub.s32 4294967266, %v1549
        %v1555 = vadd.s32 %v1554, 127
        %v1556 = vshll.u32 %v1555, 23
        %v1557 = vor.u32 4788187, %v1556
        %v1558 = vand.u32 2147483647, %v1557
        %v1560 = vcvt.s32.f32 %v1553
        %v1561 = vmul.f32 %v1560, %v1558
        %v1562 = vxor.u32 %v1561, 2147483648
        %v1563 = vsel %vm1480, %v1562, %v1561
        %v1564 = vsub.s32 4, %v1540
        %v1565 = vsel %vm1480, %v1564, %v1540
        %v1566 = vsel %vm1479, %v1258, %v1563
        %v1567 = vsel %vm1479, 0, %v1565
        %v1568 = vcosq.f32.pop %v1566
        %v1569 = vsinq.f32.pop %v1566
        %vm1570 = vweird.f32 %v1258
        %v1571 = vand.u32 %v1567, 3
        %vm1572 = vcmp.lt.s32.totalorder %v1571, 2
        %vm1573 = vcmp.eq.s32.totalorder %v1571, 0
        %v1574 = vxor.u32 %v1569, 2147483648
        %v1575 = vsel %vm1573, %v1568, %v1574
        %vm1576 = vcmp.eq.s32.totalorder %v1571, 2
        %v1577 = vxor.u32 %v1568, 2147483648
        %v1578 = vsel %vm1576, %v1577, %v1569
        %v1579 = vsel %vm1572, %v1575, %v1578
        %v1580 = vsel %vm1570, nan, %v1579
        %v1581 = vand.u32 2147483647, %v1259
        %vm1582 = vcmp.le.f32.partialorder %v1581, 0.7853982
        %vm1583 = vcmp.lt.s32.totalorder %v1259, 0
        %v1584 = vand.u32 %v1259, 2139095040
        %v1585 = vshrl.u32 %v1584, 23
        %v1586 = vsub.s32 %v1585, 127
        %v1587 = vand.u32 2147483647, %v1259
        %v1588 = vand.u32 %v1587, 8388607
        %v1589 = vor.u32 %v1588, 8388608
        %v1590 = vsub.s32 0, %v1589
        %v1591 = vadd.s32 %v1586, 1
        %vm1592 = vcmp.gt.s32.totalorder %v1591, 0
        %v1593 = vsel %vm1592, %v1591, 0
        %v1594 = vshrl.u32 %v1593, 5
        %v1595 = vand.u32 %v1593, 31
        %v1596 = vsub.s32 32, %v1595
        %v1597 = vshrl.u32 683565275, %v1596
        %v1598 = vshll.u32 683565275, %v1595
        %v1599 = vshrl.u32 2475754826, %v1596
        %v1600 = vor.u32 %v1598, %v1599
        %v1601 = vshll.u32 2475754826, %v1595
        %v1602 = vshrl.u32 2131351028, %v1596
        %v1603 = vor.u32 %v1601, %v1602
        %v1604 = vshll.u32 2131351028, %v1595
        %v1605 = vshrl.u32 2102212464, %v1596
        %v1606 = vor.u32 %v1604, %v1605
        %v1607 = vshll.u32 2102212464, %v1595
        %v1608 = vshrl.u32 920167782, %v1596
        %v1609 = vor.u32 %v1607, %v1608
        %v1610 = vshll.u32 920167782, %v1595
        %v1611 = vshrl.u32 1326507024, %v1596
        %v1612 = vor.u32 %v1610, %v1611
        %vm1613 = vcmp.lt.s32.totalorder %v1594, 1
        %vm1614 = vcmp.lt.s32.totalorder %v1594, 2
        %vm1615 = vcmp.lt.s32.totalorder %v1594, 3
        %vm1616 = vcmp.lt.s32.totalorder %v1594, 4
        %v1617 = vsel %vm1613, %v1597, %v1600
        %v1618 = vsel %vm1616, %v1606, 2102212464
        %v1619 = vsel %vm1615, %v1603, %v1618
        %v1620 = vsel %vm1614, %v1617, %v1619
        %v1621 = vsel %vm1613, %v1600, %v1603
        %v1622 = vsel %vm1616, %v1609, 920167782
        %v1623 = vsel %vm1615, %v1606, %v1622
        %v1624 = vsel %vm1614, %v1621, %v1623
        %v1625 = vsel %vm1613, %v1603, %v1606
        %v1626 = vsel %vm1616, %v1612, 1326507024
        %v1627 = vsel %vm1615, %v1609, %v1626
        %v1628 = vsel %vm1614, %v1625, %v1627
        %v1629 = vshll.u32 %v1589, 8
        %v1630 = vmul.u32.u64.compose %v1629, %v1628
        %v1631 = vextract.low.u32 %v1630
        %v1632 = vextract.high.u32 %v1630
        %v1633 = vmul.u32.u64.compose %v1629, %v1624
        %v1634 = vextract.low.u32 %v1633
        %v1635 = vextract.high.u32 %v1633
        %v1636 = vmul.u32 %v1629, %v1620
        %v1637 = vadd.s32 %v1632, %v1634
        %vm1638 = vc.u32 %v1632, %v1634
        %v1639 = vadd.s32 %v1635, 1
        %v1640 = vsel %vm1638, %v1639, %v1635
        %v1641 = vadd.s32 %v1636, %v1640
        %v1642 = vadd.s32 %v1641, 536870912
        %v1643 = vshrl.u32 %v1642, 30
        %v1644 = vshll.u32 %v1643, 30
        %v1645 = vsub.s32 %v1641, %v1644
        %vm1646 = vcmp.lt.s32.totalorder %v1645, 0
        %v1647 = vsub.s32 0, %v1645
        %v1648 = vsel %vm1646, %v1647, %v1645
        %v1649 = vclz %v1648
        %v1650 = vsub.s32 %v1649, 2
        %vm1651 = vcmp.gt.s32.totalorder 0, %v1650
        %v1652 = vsel %vm1651, 0, %v1650
        %v1653 = vsub.s32 32, %v1652
        %v1654 = vshll.u32 %v1645, %v1652
        %v1655 = vshrl.u32 %v1637, %v1653
        %v1656 = vor.u32 %v1654, %v1655
        %v1657 = vsub.s32 4294967266, %v1652
        %v1658 = vadd.s32 %v1657, 127
        %v1659 = vshll.u32 %v1658, 23
        %v1660 = vor.u32 4788187, %v1659
        %v1661 = vand.u32 2147483647, %v1660
        %v1663 = vcvt.s32.f32 %v1656
        %v1664 = vmul.f32 %v1663, %v1661
        %v1665 = vxor.u32 %v1664, 2147483648
        %v1666 = vsel %vm1583, %v1665, %v1664
        %v1667 = vsub.s32 4, %v1643
        %v1668 = vsel %vm1583, %v1667, %v1643
        %v1669 = vsel %vm1582, %v1259, %v1666
        %v1670 = vsel %vm1582, 0, %v1668
        %v1671 = vcosq.f32.pop %v1669
        %v1672 = vsinq.f32.pop %v1669
        %vm1673 = vweird.f32 %v1259
        %v1674 = vand.u32 %v1670, 3
        %vm1675 = vcmp.lt.s32.totalorder %v1674, 2
        %vm1676 = vcmp.eq.s32.totalorder %v1674, 0
        %v1677 = vxor.u32 %v1672, 2147483648
        %v1678 = vsel %vm1676, %v1671, %v1677
        %vm1679 = vcmp.eq.s32.totalorder %v1674, 2
        %v1680 = vxor.u32 %v1671, 2147483648
        %v1681 = vsel %vm1679, %v1680, %v1672
        %v1682 = vsel %vm1675, %v1678, %v1681
        %v1683 = vsel %vm1673, nan, %v1682
        %v1684 = vand.u32 2147483647, %v1260
        %vm1685 = vcmp.le.f32.partialorder %v1684, 0.7853982
        %vm1686 = vcmp.lt.s32.totalorder %v1260, 0
        %v1687 = vand.u32 %v1260, 2139095040
        %v1688 = vshrl.u32 %v1687, 23
        %v1689 = vsub.s32 %v1688, 127
        %v1690 = vand.u32 2147483647, %v1260
        %v1691 = vand.u32 %v1690, 8388607
        %v1692 = vor.u32 %v1691, 8388608
        %v1693 = vsub.s32 0, %v1692
        %v1694 = vadd.s32 %v1689, 1
        %vm1695 = vcmp.gt.s32.totalorder %v1694, 0
        %v1696 = vsel %vm1695, %v1694, 0
        %v1697 = vshrl.u32 %v1696, 5
        %v1698 = vand.u32 %v1696, 31
        %v1699 = vsub.s32 32, %v1698
        %v1700 = vshrl.u32 683565275, %v1699
        %v1701 = vshll.u32 683565275, %v1698
        %v1702 = vshrl.u32 2475754826, %v1699
        %v1703 = vor.u32 %v1701, %v1702
        %v1704 = vshll.u32 2475754826, %v1698
        %v1705 = vshrl.u32 2131351028, %v1699
        %v1706 = vor.u32 %v1704, %v1705
        %v1707 = vshll.u32 2131351028, %v1698
        %v1708 = vshrl.u32 2102212464, %v1699
        %v1709 = vor.u32 %v1707, %v1708
        %v1710 = vshll.u32 2102212464, %v1698
        %v1711 = vshrl.u32 920167782, %v1699
        %v1712 = vor.u32 %v1710, %v1711
        %v1713 = vshll.u32 920167782, %v1698
        %v1714 = vshrl.u32 1326507024, %v1699
        %v1715 = vor.u32 %v1713, %v1714
        %vm1716 = vcmp.lt.s32.totalorder %v1697, 1
        %vm1717 = vcmp.lt.s32.totalorder %v1697, 2
        %vm1718 = vcmp.lt.s32.totalorder %v1697, 3
        %vm1719 = vcmp.lt.s32.totalorder %v1697, 4
        %v1720 = vsel %vm1716, %v1700, %v1703
        %v1721 = vsel %vm1719, %v1709, 2102212464
        %v1722 = vsel %vm1718, %v1706, %v1721
        %v1723 = vsel %vm1717, %v1720, %v1722
        %v1724 = vsel %vm1716, %v1703, %v1706
        %v1725 = vsel %vm1719, %v1712, 920167782
        %v1726 = vsel %vm1718, %v1709, %v1725
        %v1727 = vsel %vm1717, %v1724, %v1726
        %v1728 = vsel %vm1716, %v1706, %v1709
        %v1729 = vsel %vm1719, %v1715, 1326507024
        %v1730 = vsel %vm1718, %v1712, %v1729
        %v1731 = vsel %vm1717, %v1728, %v1730
        %v1732 = vshll.u32 %v1692, 8
        %v1733 = vmul.u32.u64.compose %v1732, %v1731
        %v1734 = vextract.low.u32 %v1733
        %v1735 = vextract.high.u32 %v1733
        %v1736 = vmul.u32.u64.compose %v1732, %v1727
        %v1737 = vextract.low.u32 %v1736
        %v1738 = vextract.high.u32 %v1736
        %v1739 = vmul.u32 %v1732, %v1723
        %v1740 = vadd.s32 %v1735, %v1737
        %vm1741 = vc.u32 %v1735, %v1737
        %v1742 = vadd.s32 %v1738, 1
        %v1743 = vsel %vm1741, %v1742, %v1738
        %v1744 = vadd.s32 %v1739, %v1743
        %v1745 = vadd.s32 %v1744, 536870912
        %v1746 = vshrl.u32 %v1745, 30
        %v1747 = vshll.u32 %v1746, 30
        %v1748 = vsub.s32 %v1744, %v1747
        %vm1749 = vcmp.lt.s32.totalorder %v1748, 0
        %v1750 = vsub.s32 0, %v1748
        %v1751 = vsel %vm1749, %v1750, %v1748
        %v1752 = vclz %v1751
        %v1753 = vsub.s32 %v1752, 2
        %vm1754 = vcmp.gt.s32.totalorder 0, %v1753
        %v1755 = vsel %vm1754, 0, %v1753
        %v1756 = vsub.s32 32, %v1755
        %v1757 = vshll.u32 %v1748, %v1755
        %v1758 = vshrl.u32 %v1740, %v1756
        %v1759 = vor.u32 %v1757, %v1758
        %v1760 = vsub.s32 4294967266, %v1755
        %v1761 = vadd.s32 %v1760, 127
        %v1762 = vshll.u32 %v1761, 23
        %v1763 = vor.u32 4788187, %v1762
        %v1764 = vand.u32 2147483647, %v1763
        %v1766 = vcvt.s32.f32 %v1759
        %v1767 = vmul.f32 %v1766, %v1764
        %v1768 = vxor.u32 %v1767, 2147483648
        %v1769 = vsel %vm1686, %v1768, %v1767
        %v1770 = vsub.s32 4, %v1746
        %v1771 = vsel %vm1686, %v1770, %v1746
        %v1772 = vsel %vm1685, %v1260, %v1769
        %v1773 = vsel %vm1685, 0, %v1771
        %v1774 = vcosq.f32.pop %v1772
        %v1775 = vsinq.f32.pop %v1772
        %vm1776 = vweird.f32 %v1260
        %v1777 = vand.u32 %v1773, 3
        %vm1778 = vcmp.lt.s32.totalorder %v1777, 2
        %vm1779 = vcmp.eq.s32.totalorder %v1777, 0
        %v1780 = vxor.u32 %v1775, 2147483648
        %v1781 = vsel %vm1779, %v1774, %v1780
        %vm1782 = vcmp.eq.s32.totalorder %v1777, 2
        %v1783 = vxor.u32 %v1774, 2147483648
        %v1784 = vsel %vm1782, %v1783, %v1775
        %v1785 = vsel %vm1778, %v1781, %v1784
        %v1786 = vsel %vm1776, nan, %v1785
        %v1787 = vand.u32 2147483647, %v1261
        %vm1788 = vcmp.le.f32.partialorder %v1787, 0.7853982
        %vm1789 = vcmp.lt.s32.totalorder %v1261, 0
        %v1790 = vand.u32 %v1261, 2139095040
        %v1791 = vshrl.u32 %v1790, 23
        %v1792 = vsub.s32 %v1791, 127
        %v1793 = vand.u32 2147483647, %v1261
        %v1794 = vand.u32 %v1793, 8388607
        %v1795 = vor.u32 %v1794, 8388608
        %v1796 = vsub.s32 0, %v1795
        %v1797 = vadd.s32 %v1792, 1
        %vm1798 = vcmp.gt.s32.totalorder %v1797, 0
        %v1799 = vsel %vm1798, %v1797, 0
        %v1800 = vshrl.u32 %v1799, 5
        %v1801 = vand.u32 %v1799, 31
        %v1802 = vsub.s32 32, %v1801
        %v1803 = vshrl.u32 683565275, %v1802
        %v1804 = vshll.u32 683565275, %v1801
        %v1805 = vshrl.u32 2475754826, %v1802
        %v1806 = vor.u32 %v1804, %v1805
        %v1807 = vshll.u32 2475754826, %v1801
        %v1808 = vshrl.u32 2131351028, %v1802
        %v1809 = vor.u32 %v1807, %v1808
        %v1810 = vshll.u32 2131351028, %v1801
        %v1811 = vshrl.u32 2102212464, %v1802
        %v1812 = vor.u32 %v1810, %v1811
        %v1813 = vshll.u32 2102212464, %v1801
        %v1814 = vshrl.u32 920167782, %v1802
        %v1815 = vor.u32 %v1813, %v1814
        %v1816 = vshll.u32 920167782, %v1801
        %v1817 = vshrl.u32 1326507024, %v1802
        %v1818 = vor.u32 %v1816, %v1817
        %vm1819 = vcmp.lt.s32.totalorder %v1800, 1
        %vm1820 = vcmp.lt.s32.totalorder %v1800, 2
        %vm1821 = vcmp.lt.s32.totalorder %v1800, 3
        %vm1822 = vcmp.lt.s32.totalorder %v1800, 4
        %v1823 = vsel %vm1819, %v1803, %v1806
        %v1824 = vsel %vm1822, %v1812, 2102212464
        %v1825 = vsel %vm1821, %v1809, %v1824
        %v1826 = vsel %vm1820, %v1823, %v1825
        %v1827 = vsel %vm1819, %v1806, %v1809
        %v1828 = vsel %vm1822, %v1815, 920167782
        %v1829 = vsel %vm1821, %v1812, %v1828
        %v1830 = vsel %vm1820, %v1827, %v1829
        %v1831 = vsel %vm1819, %v1809, %v1812
        %v1832 = vsel %vm1822, %v1818, 1326507024
        %v1833 = vsel %vm1821, %v1815, %v1832
        %v1834 = vsel %vm1820, %v1831, %v1833
        %v1835 = vshll.u32 %v1795, 8
        %v1836 = vmul.u32.u64.compose %v1835, %v1834
        %v1837 = vextract.low.u32 %v1836
        %v1838 = vextract.high.u32 %v1836
        %v1839 = vmul.u32.u64.compose %v1835, %v1830
        %v1840 = vextract.low.u32 %v1839
        %v1841 = vextract.high.u32 %v1839
        %v1842 = vmul.u32 %v1835, %v1826
        %v1843 = vadd.s32 %v1838, %v1840
        %vm1844 = vc.u32 %v1838, %v1840
        %v1845 = vadd.s32 %v1841, 1
        %v1846 = vsel %vm1844, %v1845, %v1841
        %v1847 = vadd.s32 %v1842, %v1846
        %v1848 = vadd.s32 %v1847, 536870912
        %v1849 = vshrl.u32 %v1848, 30
        %v1850 = vshll.u32 %v1849, 30
        %v1851 = vsub.s32 %v1847, %v1850
        %vm1852 = vcmp.lt.s32.totalorder %v1851, 0
        %v1853 = vsub.s32 0, %v1851
        %v1854 = vsel %vm1852, %v1853, %v1851
        %v1855 = vclz %v1854
        %v1856 = vsub.s32 %v1855, 2
        %vm1857 = vcmp.gt.s32.totalorder 0, %v1856
        %v1858 = vsel %vm1857, 0, %v1856
        %v1859 = vsub.s32 32, %v1858
        %v1860 = vshll.u32 %v1851, %v1858
        %v1861 = vshrl.u32 %v1843, %v1859
        %v1862 = vor.u32 %v1860, %v1861
        %v1863 = vsub.s32 4294967266, %v1858
        %v1864 = vadd.s32 %v1863, 127
        %v1865 = vshll.u32 %v1864, 23
        %v1866 = vor.u32 4788187, %v1865
        %v1867 = vand.u32 2147483647, %v1866
        %v1869 = vcvt.s32.f32 %v1862
        %v1870 = vmul.f32 %v1869, %v1867
        %v1871 = vxor.u32 %v1870, 2147483648
        %v1872 = vsel %vm1789, %v1871, %v1870
        %v1873 = vsub.s32 4, %v1849
        %v1874 = vsel %vm1789, %v1873, %v1849
        %v1875 = vsel %vm1788, %v1261, %v1872
        %v1876 = vsel %vm1788, 0, %v1874
        %v1877 = vcosq.f32.pop %v1875
        %v1878 = vsinq.f32.pop %v1875
        %vm1879 = vweird.f32 %v1261
        %v1880 = vand.u32 %v1876, 3
        %vm1881 = vcmp.lt.s32.totalorder %v1880, 2
        %vm1882 = vcmp.eq.s32.totalorder %v1880, 0
        %v1883 = vxor.u32 %v1878, 2147483648
        %v1884 = vsel %vm1882, %v1877, %v1883
        %vm1885 = vcmp.eq.s32.totalorder %v1880, 2
        %v1886 = vxor.u32 %v1877, 2147483648
        %v1887 = vsel %vm1885, %v1886, %v1878
        %v1888 = vsel %vm1881, %v1884, %v1887
        %v1889 = vsel %vm1879, nan, %v1888
        %v1890 = vand.u32 2147483647, %v1262
        %vm1891 = vcmp.le.f32.partialorder %v1890, 0.7853982
        %vm1892 = vcmp.lt.s32.totalorder %v1262, 0
        %v1893 = vand.u32 %v1262, 2139095040
        %v1894 = vshrl.u32 %v1893, 23
        %v1895 = vsub.s32 %v1894, 127
        %v1896 = vand.u32 2147483647, %v1262
        %v1897 = vand.u32 %v1896, 8388607
        %v1898 = vor.u32 %v1897, 8388608
        %v1899 = vsub.s32 0, %v1898
        %v1900 = vadd.s32 %v1895, 1
        %vm1901 = vcmp.gt.s32.totalorder %v1900, 0
        %v1902 = vsel %vm1901, %v1900, 0
        %v1903 = vshrl.u32 %v1902, 5
        %v1904 = vand.u32 %v1902, 31
        %v1905 = vsub.s32 32, %v1904
        %v1906 = vshrl.u32 683565275, %v1905
        %v1907 = vshll.u32 683565275, %v1904
        %v1908 = vshrl.u32 2475754826, %v1905
        %v1909 = vor.u32 %v1907, %v1908
        %v1910 = vshll.u32 2475754826, %v1904
        %v1911 = vshrl.u32 2131351028, %v1905
        %v1912 = vor.u32 %v1910, %v1911
        %v1913 = vshll.u32 2131351028, %v1904
        %v1914 = vshrl.u32 2102212464, %v1905
        %v1915 = vor.u32 %v1913, %v1914
        %v1916 = vshll.u32 2102212464, %v1904
        %v1917 = vshrl.u32 920167782, %v1905
        %v1918 = vor.u32 %v1916, %v1917
        %v1919 = vshll.u32 920167782, %v1904
        %v1920 = vshrl.u32 1326507024, %v1905
        %v1921 = vor.u32 %v1919, %v1920
        %vm1922 = vcmp.lt.s32.totalorder %v1903, 1
        %vm1923 = vcmp.lt.s32.totalorder %v1903, 2
        %vm1924 = vcmp.lt.s32.totalorder %v1903, 3
        %vm1925 = vcmp.lt.s32.totalorder %v1903, 4
        %v1926 = vsel %vm1922, %v1906, %v1909
        %v1927 = vsel %vm1925, %v1915, 2102212464
        %v1928 = vsel %vm1924, %v1912, %v1927
        %v1929 = vsel %vm1923, %v1926, %v1928
        %v1930 = vsel %vm1922, %v1909, %v1912
        %v1931 = vsel %vm1925, %v1918, 920167782
        %v1932 = vsel %vm1924, %v1915, %v1931
        %v1933 = vsel %vm1923, %v1930, %v1932
        %v1934 = vsel %vm1922, %v1912, %v1915
        %v1935 = vsel %vm1925, %v1921, 1326507024
        %v1936 = vsel %vm1924, %v1918, %v1935
        %v1937 = vsel %vm1923, %v1934, %v1936
        %v1938 = vshll.u32 %v1898, 8
        %v1939 = vmul.u32.u64.compose %v1938, %v1937
        %v1940 = vextract.low.u32 %v1939
        %v1941 = vextract.high.u32 %v1939
        %v1942 = vmul.u32.u64.compose %v1938, %v1933
        %v1943 = vextract.low.u32 %v1942
        %v1944 = vextract.high.u32 %v1942
        %v1945 = vmul.u32 %v1938, %v1929
        %v1946 = vadd.s32 %v1941, %v1943
        %vm1947 = vc.u32 %v1941, %v1943
        %v1948 = vadd.s32 %v1944, 1
        %v1949 = vsel %vm1947, %v1948, %v1944
        %v1950 = vadd.s32 %v1945, %v1949
        %v1951 = vadd.s32 %v1950, 536870912
        %v1952 = vshrl.u32 %v1951, 30
        %v1953 = vshll.u32 %v1952, 30
        %v1954 = vsub.s32 %v1950, %v1953
        %vm1955 = vcmp.lt.s32.totalorder %v1954, 0
        %v1956 = vsub.s32 0, %v1954
        %v1957 = vsel %vm1955, %v1956, %v1954
        %v1958 = vclz %v1957
        %v1959 = vsub.s32 %v1958, 2
        %vm1960 = vcmp.gt.s32.totalorder 0, %v1959
        %v1961 = vsel %vm1960, 0, %v1959
        %v1962 = vsub.s32 32, %v1961
        %v1963 = vshll.u32 %v1954, %v1961
        %v1964 = vshrl.u32 %v1946, %v1962
        %v1965 = vor.u32 %v1963, %v1964
        %v1966 = vsub.s32 4294967266, %v1961
        %v1967 = vadd.s32 %v1966, 127
        %v1968 = vshll.u32 %v1967, 23
        %v1969 = vor.u32 4788187, %v1968
        %v1970 = vand.u32 2147483647, %v1969
        %v1972 = vcvt.s32.f32 %v1965
        %v1973 = vmul.f32 %v1972, %v1970
        %v1974 = vxor.u32 %v1973, 2147483648
        %v1975 = vsel %vm1892, %v1974, %v1973
        %v1976 = vsub.s32 4, %v1952
        %v1977 = vsel %vm1892, %v1976, %v1952
        %v1978 = vsel %vm1891, %v1262, %v1975
        %v1979 = vsel %vm1891, 0, %v1977
        %v1980 = vcosq.f32.pop %v1978
        %v1981 = vsinq.f32.pop %v1978
        %vm1982 = vweird.f32 %v1262
        %v1983 = vand.u32 %v1979, 3
        %vm1984 = vcmp.lt.s32.totalorder %v1983, 2
        %vm1985 = vcmp.eq.s32.totalorder %v1983, 0
        %v1986 = vxor.u32 %v1981, 2147483648
        %v1987 = vsel %vm1985, %v1980, %v1986
        %vm1988 = vcmp.eq.s32.totalorder %v1983, 2
        %v1989 = vxor.u32 %v1980, 2147483648
        %v1990 = vsel %vm1988, %v1989, %v1981
        %v1991 = vsel %vm1984, %v1987, %v1990
        %v1992 = vsel %vm1982, nan, %v1991
        %v1993 = vand.u32 2147483647, %v1263
        %vm1994 = vcmp.le.f32.partialorder %v1993, 0.7853982
        %vm1995 = vcmp.lt.s32.totalorder %v1263, 0
        %v1996 = vand.u32 %v1263, 2139095040
        %v1997 = vshrl.u32 %v1996, 23
        %v1998 = vsub.s32 %v1997, 127
        %v1999 = vand.u32 2147483647, %v1263
        %v2000 = vand.u32 %v1999, 8388607
        %v2001 = vor.u32 %v2000, 8388608
        %v2002 = vsub.s32 0, %v2001
        %v2003 = vadd.s32 %v1998, 1
        %vm2004 = vcmp.gt.s32.totalorder %v2003, 0
        %v2005 = vsel %vm2004, %v2003, 0
        %v2006 = vshrl.u32 %v2005, 5
        %v2007 = vand.u32 %v2005, 31
        %v2008 = vsub.s32 32, %v2007
        %v2009 = vshrl.u32 683565275, %v2008
        %v2010 = vshll.u32 683565275, %v2007
        %v2011 = vshrl.u32 2475754826, %v2008
        %v2012 = vor.u32 %v2010, %v2011
        %v2013 = vshll.u32 2475754826, %v2007
        %v2014 = vshrl.u32 2131351028, %v2008
        %v2015 = vor.u32 %v2013, %v2014
        %v2016 = vshll.u32 2131351028, %v2007
        %v2017 = vshrl.u32 2102212464, %v2008
        %v2018 = vor.u32 %v2016, %v2017
        %v2019 = vshll.u32 2102212464, %v2007
        %v2020 = vshrl.u32 920167782, %v2008
        %v2021 = vor.u32 %v2019, %v2020
        %v2022 = vshll.u32 920167782, %v2007
        %v2023 = vshrl.u32 1326507024, %v2008
        %v2024 = vor.u32 %v2022, %v2023
        %vm2025 = vcmp.lt.s32.totalorder %v2006, 1
        %vm2026 = vcmp.lt.s32.totalorder %v2006, 2
        %vm2027 = vcmp.lt.s32.totalorder %v2006, 3
        %vm2028 = vcmp.lt.s32.totalorder %v2006, 4
        %v2029 = vsel %vm2025, %v2009, %v2012
        %v2030 = vsel %vm2028, %v2018, 2102212464
        %v2031 = vsel %vm2027, %v2015, %v2030
        %v2032 = vsel %vm2026, %v2029, %v2031
        %v2033 = vsel %vm2025, %v2012, %v2015
        %v2034 = vsel %vm2028, %v2021, 920167782
        %v2035 = vsel %vm2027, %v2018, %v2034
        %v2036 = vsel %vm2026, %v2033, %v2035
        %v2037 = vsel %vm2025, %v2015, %v2018
        %v2038 = vsel %vm2028, %v2024, 1326507024
        %v2039 = vsel %vm2027, %v2021, %v2038
        %v2040 = vsel %vm2026, %v2037, %v2039
        %v2041 = vshll.u32 %v2001, 8
        %v2042 = vmul.u32.u64.compose %v2041, %v2040
        %v2043 = vextract.low.u32 %v2042
        %v2044 = vextract.high.u32 %v2042
        %v2045 = vmul.u32.u64.compose %v2041, %v2036
        %v2046 = vextract.low.u32 %v2045
        %v2047 = vextract.high.u32 %v2045
        %v2048 = vmul.u32 %v2041, %v2032
        %v2049 = vadd.s32 %v2044, %v2046
        %vm2050 = vc.u32 %v2044, %v2046
        %v2051 = vadd.s32 %v2047, 1
        %v2052 = vsel %vm2050, %v2051, %v2047
        %v2053 = vadd.s32 %v2048, %v2052
        %v2054 = vadd.s32 %v2053, 536870912
        %v2055 = vshrl.u32 %v2054, 30
        %v2056 = vshll.u32 %v2055, 30
        %v2057 = vsub.s32 %v2053, %v2056
        %vm2058 = vcmp.lt.s32.totalorder %v2057, 0
        %v2059 = vsub.s32 0, %v2057
        %v2060 = vsel %vm2058, %v2059, %v2057
        %v2061 = vclz %v2060
        %v2062 = vsub.s32 %v2061, 2
        %vm2063 = vcmp.gt.s32.totalorder 0, %v2062
        %v2064 = vsel %vm2063, 0, %v2062
        %v2065 = vsub.s32 32, %v2064
        %v2066 = vshll.u32 %v2057, %v2064
        %v2067 = vshrl.u32 %v2049, %v2065
        %v2068 = vor.u32 %v2066, %v2067
        %v2069 = vsub.s32 4294967266, %v2064
        %v2070 = vadd.s32 %v2069, 127
        %v2071 = vshll.u32 %v2070, 23
        %v2072 = vor.u32 4788187, %v2071
        %v2073 = vand.u32 2147483647, %v2072
        %v2075 = vcvt.s32.f32 %v2068
        %v2076 = vmul.f32 %v2075, %v2073
        %v2077 = vxor.u32 %v2076, 2147483648
        %v2078 = vsel %vm1995, %v2077, %v2076
        %v2079 = vsub.s32 4, %v2055
        %v2080 = vsel %vm1995, %v2079, %v2055
        %v2081 = vsel %vm1994, %v1263, %v2078
        %v2082 = vsel %vm1994, 0, %v2080
        %v2083 = vcosq.f32.pop %v2081
        %v2084 = vsinq.f32.pop %v2081
        %vm2085 = vweird.f32 %v1263
        %v2086 = vand.u32 %v2082, 3
        %vm2087 = vcmp.lt.s32.totalorder %v2086, 2
        %vm2088 = vcmp.eq.s32.totalorder %v2086, 0
        %v2089 = vxor.u32 %v2084, 2147483648
        %v2090 = vsel %vm2088, %v2083, %v2089
        %vm2091 = vcmp.eq.s32.totalorder %v2086, 2
        %v2092 = vxor.u32 %v2083, 2147483648
        %v2093 = vsel %vm2091, %v2092, %v2084
        %v2094 = vsel %vm2087, %v2090, %v2093
        %v2095 = vsel %vm2085, nan, %v2094
        %v2096 = vand.u32 2147483647, %v1264
        %vm2097 = vcmp.le.f32.partialorder %v2096, 0.7853982
        %vm2098 = vcmp.lt.s32.totalorder %v1264, 0
        %v2099 = vand.u32 %v1264, 2139095040
        %v2100 = vshrl.u32 %v2099, 23
        %v2101 = vsub.s32 %v2100, 127
        %v2102 = vand.u32 2147483647, %v1264
        %v2103 = vand.u32 %v2102, 8388607
        %v2104 = vor.u32 %v2103, 8388608
        %v2105 = vsub.s32 0, %v2104
        %v2106 = vadd.s32 %v2101, 1
        %vm2107 = vcmp.gt.s32.totalorder %v2106, 0
        %v2108 = vsel %vm2107, %v2106, 0
        %v2109 = vshrl.u32 %v2108, 5
        %v2110 = vand.u32 %v2108, 31
        %v2111 = vsub.s32 32, %v2110
        %v2112 = vshrl.u32 683565275, %v2111
        %v2113 = vshll.u32 683565275, %v2110
        %v2114 = vshrl.u32 2475754826, %v2111
        %v2115 = vor.u32 %v2113, %v2114
        %v2116 = vshll.u32 2475754826, %v2110
        %v2117 = vshrl.u32 2131351028, %v2111
        %v2118 = vor.u32 %v2116, %v2117
        %v2119 = vshll.u32 2131351028, %v2110
        %v2120 = vshrl.u32 2102212464, %v2111
        %v2121 = vor.u32 %v2119, %v2120
        %v2122 = vshll.u32 2102212464, %v2110
        %v2123 = vshrl.u32 920167782, %v2111
        %v2124 = vor.u32 %v2122, %v2123
        %v2125 = vshll.u32 920167782, %v2110
        %v2126 = vshrl.u32 1326507024, %v2111
        %v2127 = vor.u32 %v2125, %v2126
        %vm2128 = vcmp.lt.s32.totalorder %v2109, 1
        %vm2129 = vcmp.lt.s32.totalorder %v2109, 2
        %vm2130 = vcmp.lt.s32.totalorder %v2109, 3
        %vm2131 = vcmp.lt.s32.totalorder %v2109, 4
        %v2132 = vsel %vm2128, %v2112, %v2115
        %v2133 = vsel %vm2131, %v2121, 2102212464
        %v2134 = vsel %vm2130, %v2118, %v2133
        %v2135 = vsel %vm2129, %v2132, %v2134
        %v2136 = vsel %vm2128, %v2115, %v2118
        %v2137 = vsel %vm2131, %v2124, 920167782
        %v2138 = vsel %vm2130, %v2121, %v2137
        %v2139 = vsel %vm2129, %v2136, %v2138
        %v2140 = vsel %vm2128, %v2118, %v2121
        %v2141 = vsel %vm2131, %v2127, 1326507024
        %v2142 = vsel %vm2130, %v2124, %v2141
        %v2143 = vsel %vm2129, %v2140, %v2142
        %v2144 = vshll.u32 %v2104, 8
        %v2145 = vmul.u32.u64.compose %v2144, %v2143
        %v2146 = vextract.low.u32 %v2145
        %v2147 = vextract.high.u32 %v2145
        %v2148 = vmul.u32.u64.compose %v2144, %v2139
        %v2149 = vextract.low.u32 %v2148
        %v2150 = vextract.high.u32 %v2148
        %v2151 = vmul.u32 %v2144, %v2135
        %v2152 = vadd.s32 %v2147, %v2149
        %vm2153 = vc.u32 %v2147, %v2149
        %v2154 = vadd.s32 %v2150, 1
        %v2155 = vsel %vm2153, %v2154, %v2150
        %v2156 = vadd.s32 %v2151, %v2155
        %v2157 = vadd.s32 %v2156, 536870912
        %v2158 = vshrl.u32 %v2157, 30
        %v2159 = vshll.u32 %v2158, 30
        %v2160 = vsub.s32 %v2156, %v2159
        %vm2161 = vcmp.lt.s32.totalorder %v2160, 0
        %v2162 = vsub.s32 0, %v2160
        %v2163 = vsel %vm2161, %v2162, %v2160
        %v2164 = vclz %v2163
        %v2165 = vsub.s32 %v2164, 2
        %vm2166 = vcmp.gt.s32.totalorder 0, %v2165
        %v2167 = vsel %vm2166, 0, %v2165
        %v2168 = vsub.s32 32, %v2167
        %v2169 = vshll.u32 %v2160, %v2167
        %v2170 = vshrl.u32 %v2152, %v2168
        %v2171 = vor.u32 %v2169, %v2170
        %v2172 = vsub.s32 4294967266, %v2167
        %v2173 = vadd.s32 %v2172, 127
        %v2174 = vshll.u32 %v2173, 23
        %v2175 = vor.u32 4788187, %v2174
        %v2176 = vand.u32 2147483647, %v2175
        %v2178 = vcvt.s32.f32 %v2171
        %v2179 = vmul.f32 %v2178, %v2176
        %v2180 = vxor.u32 %v2179, 2147483648
        %v2181 = vsel %vm2098, %v2180, %v2179
        %v2182 = vsub.s32 4, %v2158
        %v2183 = vsel %vm2098, %v2182, %v2158
        %v2184 = vsel %vm2097, %v1264, %v2181
        %v2185 = vsel %vm2097, 0, %v2183
        %v2186 = vcosq.f32.pop %v2184
        %v2187 = vsinq.f32.pop %v2184
        %vm2188 = vweird.f32 %v1264
        %v2189 = vand.u32 %v2185, 3
        %vm2190 = vcmp.lt.s32.totalorder %v2189, 2
        %vm2191 = vcmp.eq.s32.totalorder %v2189, 0
        %v2192 = vxor.u32 %v2187, 2147483648
        %v2193 = vsel %vm2191, %v2186, %v2192
        %vm2194 = vcmp.eq.s32.totalorder %v2189, 2
        %v2195 = vxor.u32 %v2186, 2147483648
        %v2196 = vsel %vm2194, %v2195, %v2187
        %v2197 = vsel %vm2190, %v2193, %v2196
        %v2198 = vsel %vm2188, nan, %v2197
        %v2199 = vand.u32 2147483647, %v1265
        %vm2200 = vcmp.le.f32.partialorder %v2199, 0.7853982
        %vm2201 = vcmp.lt.s32.totalorder %v1265, 0
        %v2202 = vand.u32 %v1265, 2139095040
        %v2203 = vshrl.u32 %v2202, 23
        %v2204 = vsub.s32 %v2203, 127
        %v2205 = vand.u32 2147483647, %v1265
        %v2206 = vand.u32 %v2205, 8388607
        %v2207 = vor.u32 %v2206, 8388608
        %v2208 = vsub.s32 0, %v2207
        %v2209 = vadd.s32 %v2204, 1
        %vm2210 = vcmp.gt.s32.totalorder %v2209, 0
        %v2211 = vsel %vm2210, %v2209, 0
        %v2212 = vshrl.u32 %v2211, 5
        %v2213 = vand.u32 %v2211, 31
        %v2214 = vsub.s32 32, %v2213
        %v2215 = vshrl.u32 683565275, %v2214
        %v2216 = vshll.u32 683565275, %v2213
        %v2217 = vshrl.u32 2475754826, %v2214
        %v2218 = vor.u32 %v2216, %v2217
        %v2219 = vshll.u32 2475754826, %v2213
        %v2220 = vshrl.u32 2131351028, %v2214
        %v2221 = vor.u32 %v2219, %v2220
        %v2222 = vshll.u32 2131351028, %v2213
        %v2223 = vshrl.u32 2102212464, %v2214
        %v2224 = vor.u32 %v2222, %v2223
        %v2225 = vshll.u32 2102212464, %v2213
        %v2226 = vshrl.u32 920167782, %v2214
        %v2227 = vor.u32 %v2225, %v2226
        %v2228 = vshll.u32 920167782, %v2213
        %v2229 = vshrl.u32 1326507024, %v2214
        %v2230 = vor.u32 %v2228, %v2229
        %vm2231 = vcmp.lt.s32.totalorder %v2212, 1
        %vm2232 = vcmp.lt.s32.totalorder %v2212, 2
        %vm2233 = vcmp.lt.s32.totalorder %v2212, 3
        %vm2234 = vcmp.lt.s32.totalorder %v2212, 4
        %v2235 = vsel %vm2231, %v2215, %v2218
        %v2236 = vsel %vm2234, %v2224, 2102212464
        %v2237 = vsel %vm2233, %v2221, %v2236
        %v2238 = vsel %vm2232, %v2235, %v2237
        %v2239 = vsel %vm2231, %v2218, %v2221
        %v2240 = vsel %vm2234, %v2227, 920167782
        %v2241 = vsel %vm2233, %v2224, %v2240
        %v2242 = vsel %vm2232, %v2239, %v2241
        %v2243 = vsel %vm2231, %v2221, %v2224
        %v2244 = vsel %vm2234, %v2230, 1326507024
        %v2245 = vsel %vm2233, %v2227, %v2244
        %v2246 = vsel %vm2232, %v2243, %v2245
        %v2247 = vshll.u32 %v2207, 8
        %v2248 = vmul.u32.u64.compose %v2247, %v2246
        %v2249 = vextract.low.u32 %v2248
        %v2250 = vextract.high.u32 %v2248
        %v2251 = vmul.u32.u64.compose %v2247, %v2242
        %v2252 = vextract.low.u32 %v2251
        %v2253 = vextract.high.u32 %v2251
        %v2254 = vmul.u32 %v2247, %v2238
        %v2255 = vadd.s32 %v2250, %v2252
        %vm2256 = vc.u32 %v2250, %v2252
        %v2257 = vadd.s32 %v2253, 1
        %v2258 = vsel %vm2256, %v2257, %v2253
        %v2259 = vadd.s32 %v2254, %v2258
        %v2260 = vadd.s32 %v2259, 536870912
        %v2261 = vshrl.u32 %v2260, 30
        %v2262 = vshll.u32 %v2261, 30
        %v2263 = vsub.s32 %v2259, %v2262
        %vm2264 = vcmp.lt.s32.totalorder %v2263, 0
        %v2265 = vsub.s32 0, %v2263
        %v2266 = vsel %vm2264, %v2265, %v2263
        %v2267 = vclz %v2266
        %v2268 = vsub.s32 %v2267, 2
        %vm2269 = vcmp.gt.s32.totalorder 0, %v2268
        %v2270 = vsel %vm2269, 0, %v2268
        %v2271 = vsub.s32 32, %v2270
        %v2272 = vshll.u32 %v2263, %v2270
        %v2273 = vshrl.u32 %v2255, %v2271
        %v2274 = vor.u32 %v2272, %v2273
        %v2275 = vsub.s32 4294967266, %v2270
        %v2276 = vadd.s32 %v2275, 127
        %v2277 = vshll.u32 %v2276, 23
        %v2278 = vor.u32 4788187, %v2277
        %v2279 = vand.u32 2147483647, %v2278
        %v2281 = vcvt.s32.f32 %v2274
        %v2282 = vmul.f32 %v2281, %v2279
        %v2283 = vxor.u32 %v2282, 2147483648
        %v2284 = vsel %vm2201, %v2283, %v2282
        %v2285 = vsub.s32 4, %v2261
        %v2286 = vsel %vm2201, %v2285, %v2261
        %v2287 = vsel %vm2200, %v1265, %v2284
        %v2288 = vsel %vm2200, 0, %v2286
        %v2289 = vcosq.f32.pop %v2287
        %v2290 = vsinq.f32.pop %v2287
        %vm2291 = vweird.f32 %v1265
        %v2292 = vand.u32 %v2288, 3
        %vm2293 = vcmp.lt.s32.totalorder %v2292, 2
        %vm2294 = vcmp.eq.s32.totalorder %v2292, 0
        %v2295 = vxor.u32 %v2290, 2147483648
        %v2296 = vsel %vm2294, %v2289, %v2295
        %vm2297 = vcmp.eq.s32.totalorder %v2292, 2
        %v2298 = vxor.u32 %v2289, 2147483648
        %v2299 = vsel %vm2297, %v2298, %v2290
        %v2300 = vsel %vm2293, %v2296, %v2299
        %v2301 = vsel %vm2291, nan, %v2300
        %v2302 = vand.u32 2147483647, %v1266
        %vm2303 = vcmp.le.f32.partialorder %v2302, 0.7853982
        %vm2304 = vcmp.lt.s32.totalorder %v1266, 0
        %v2305 = vand.u32 %v1266, 2139095040
        %v2306 = vshrl.u32 %v2305, 23
        %v2307 = vsub.s32 %v2306, 127
        %v2308 = vand.u32 2147483647, %v1266
        %v2309 = vand.u32 %v2308, 8388607
        %v2310 = vor.u32 %v2309, 8388608
        %v2311 = vsub.s32 0, %v2310
        %v2312 = vadd.s32 %v2307, 1
        %vm2313 = vcmp.gt.s32.totalorder %v2312, 0
        %v2314 = vsel %vm2313, %v2312, 0
        %v2315 = vshrl.u32 %v2314, 5
        %v2316 = vand.u32 %v2314, 31
        %v2317 = vsub.s32 32, %v2316
        %v2318 = vshrl.u32 683565275, %v2317
        %v2319 = vshll.u32 683565275, %v2316
        %v2320 = vshrl.u32 2475754826, %v2317
        %v2321 = vor.u32 %v2319, %v2320
        %v2322 = vshll.u32 2475754826, %v2316
        %v2323 = vshrl.u32 2131351028, %v2317
        %v2324 = vor.u32 %v2322, %v2323
        %v2325 = vshll.u32 2131351028, %v2316
        %v2326 = vshrl.u32 2102212464, %v2317
        %v2327 = vor.u32 %v2325, %v2326
        %v2328 = vshll.u32 2102212464, %v2316
        %v2329 = vshrl.u32 920167782, %v2317
        %v2330 = vor.u32 %v2328, %v2329
        %v2331 = vshll.u32 920167782, %v2316
        %v2332 = vshrl.u32 1326507024, %v2317
        %v2333 = vor.u32 %v2331, %v2332
        %vm2334 = vcmp.lt.s32.totalorder %v2315, 1
        %vm2335 = vcmp.lt.s32.totalorder %v2315, 2
        %vm2336 = vcmp.lt.s32.totalorder %v2315, 3
        %vm2337 = vcmp.lt.s32.totalorder %v2315, 4
        %v2338 = vsel %vm2334, %v2318, %v2321
        %v2339 = vsel %vm2337, %v2327, 2102212464
        %v2340 = vsel %vm2336, %v2324, %v2339
        %v2341 = vsel %vm2335, %v2338, %v2340
        %v2342 = vsel %vm2334, %v2321, %v2324
        %v2343 = vsel %vm2337, %v2330, 920167782
        %v2344 = vsel %vm2336, %v2327, %v2343
        %v2345 = vsel %vm2335, %v2342, %v2344
        %v2346 = vsel %vm2334, %v2324, %v2327
        %v2347 = vsel %vm2337, %v2333, 1326507024
        %v2348 = vsel %vm2336, %v2330, %v2347
        %v2349 = vsel %vm2335, %v2346, %v2348
        %v2350 = vshll.u32 %v2310, 8
        %v2351 = vmul.u32.u64.compose %v2350, %v2349
        %v2352 = vextract.low.u32 %v2351
        %v2353 = vextract.high.u32 %v2351
        %v2354 = vmul.u32.u64.compose %v2350, %v2345
        %v2355 = vextract.low.u32 %v2354
        %v2356 = vextract.high.u32 %v2354
        %v2357 = vmul.u32 %v2350, %v2341
        %v2358 = vadd.s32 %v2353, %v2355
        %vm2359 = vc.u32 %v2353, %v2355
        %v2360 = vadd.s32 %v2356, 1
        %v2361 = vsel %vm2359, %v2360, %v2356
        %v2362 = vadd.s32 %v2357, %v2361
        %v2363 = vadd.s32 %v2362, 536870912
        %v2364 = vshrl.u32 %v2363, 30
        %v2365 = vshll.u32 %v2364, 30
        %v2366 = vsub.s32 %v2362, %v2365
        %vm2367 = vcmp.lt.s32.totalorder %v2366, 0
        %v2368 = vsub.s32 0, %v2366
        %v2369 = vsel %vm2367, %v2368, %v2366
        %v2370 = vclz %v2369
        %v2371 = vsub.s32 %v2370, 2
        %vm2372 = vcmp.gt.s32.totalorder 0, %v2371
        %v2373 = vsel %vm2372, 0, %v2371
        %v2374 = vsub.s32 32, %v2373
        %v2375 = vshll.u32 %v2366, %v2373
        %v2376 = vshrl.u32 %v2358, %v2374
        %v2377 = vor.u32 %v2375, %v2376
        %v2378 = vsub.s32 4294967266, %v2373
        %v2379 = vadd.s32 %v2378, 127
        %v2380 = vshll.u32 %v2379, 23
        %v2381 = vor.u32 4788187, %v2380
        %v2382 = vand.u32 2147483647, %v2381
        %v2384 = vcvt.s32.f32 %v2377
        %v2385 = vmul.f32 %v2384, %v2382
        %v2386 = vxor.u32 %v2385, 2147483648
        %v2387 = vsel %vm2304, %v2386, %v2385
        %v2388 = vsub.s32 4, %v2364
        %v2389 = vsel %vm2304, %v2388, %v2364
        %v2390 = vsel %vm2303, %v1266, %v2387
        %v2391 = vsel %vm2303, 0, %v2389
        %v2392 = vcosq.f32.pop %v2390
        %v2393 = vsinq.f32.pop %v2390
        %vm2394 = vweird.f32 %v1266
        %v2395 = vand.u32 %v2391, 3
        %vm2396 = vcmp.lt.s32.totalorder %v2395, 2
        %vm2397 = vcmp.eq.s32.totalorder %v2395, 0
        %v2398 = vxor.u32 %v2393, 2147483648
        %v2399 = vsel %vm2397, %v2392, %v2398
        %vm2400 = vcmp.eq.s32.totalorder %v2395, 2
        %v2401 = vxor.u32 %v2392, 2147483648
        %v2402 = vsel %vm2400, %v2401, %v2393
        %v2403 = vsel %vm2396, %v2399, %v2402
        %v2404 = vsel %vm2394, nan, %v2403
        %v2405 = vand.u32 2147483647, %v1267
        %vm2406 = vcmp.le.f32.partialorder %v2405, 0.7853982
        %vm2407 = vcmp.lt.s32.totalorder %v1267, 0
        %v2408 = vand.u32 %v1267, 2139095040
        %v2409 = vshrl.u32 %v2408, 23
        %v2410 = vsub.s32 %v2409, 127
        %v2411 = vand.u32 2147483647, %v1267
        %v2412 = vand.u32 %v2411, 8388607
        %v2413 = vor.u32 %v2412, 8388608
        %v2414 = vsub.s32 0, %v2413
        %v2415 = vadd.s32 %v2410, 1
        %vm2416 = vcmp.gt.s32.totalorder %v2415, 0
        %v2417 = vsel %vm2416, %v2415, 0
        %v2418 = vshrl.u32 %v2417, 5
        %v2419 = vand.u32 %v2417, 31
        %v2420 = vsub.s32 32, %v2419
        %v2421 = vshrl.u32 683565275, %v2420
        %v2422 = vshll.u32 683565275, %v2419
        %v2423 = vshrl.u32 2475754826, %v2420
        %v2424 = vor.u32 %v2422, %v2423
        %v2425 = vshll.u32 2475754826, %v2419
        %v2426 = vshrl.u32 2131351028, %v2420
        %v2427 = vor.u32 %v2425, %v2426
        %v2428 = vshll.u32 2131351028, %v2419
        %v2429 = vshrl.u32 2102212464, %v2420
        %v2430 = vor.u32 %v2428, %v2429
        %v2431 = vshll.u32 2102212464, %v2419
        %v2432 = vshrl.u32 920167782, %v2420
        %v2433 = vor.u32 %v2431, %v2432
        %v2434 = vshll.u32 920167782, %v2419
        %v2435 = vshrl.u32 1326507024, %v2420
        %v2436 = vor.u32 %v2434, %v2435
        %vm2437 = vcmp.lt.s32.totalorder %v2418, 1
        %vm2438 = vcmp.lt.s32.totalorder %v2418, 2
        %vm2439 = vcmp.lt.s32.totalorder %v2418, 3
        %vm2440 = vcmp.lt.s32.totalorder %v2418, 4
        %v2441 = vsel %vm2437, %v2421, %v2424
        %v2442 = vsel %vm2440, %v2430, 2102212464
        %v2443 = vsel %vm2439, %v2427, %v2442
        %v2444 = vsel %vm2438, %v2441, %v2443
        %v2445 = vsel %vm2437, %v2424, %v2427
        %v2446 = vsel %vm2440, %v2433, 920167782
        %v2447 = vsel %vm2439, %v2430, %v2446
        %v2448 = vsel %vm2438, %v2445, %v2447
        %v2449 = vsel %vm2437, %v2427, %v2430
        %v2450 = vsel %vm2440, %v2436, 1326507024
        %v2451 = vsel %vm2439, %v2433, %v2450
        %v2452 = vsel %vm2438, %v2449, %v2451
        %v2453 = vshll.u32 %v2413, 8
        %v2454 = vmul.u32.u64.compose %v2453, %v2452
        %v2455 = vextract.low.u32 %v2454
        %v2456 = vextract.high.u32 %v2454
        %v2457 = vmul.u32.u64.compose %v2453, %v2448
        %v2458 = vextract.low.u32 %v2457
        %v2459 = vextract.high.u32 %v2457
        %v2460 = vmul.u32 %v2453, %v2444
        %v2461 = vadd.s32 %v2456, %v2458
        %vm2462 = vc.u32 %v2456, %v2458
        %v2463 = vadd.s32 %v2459, 1
        %v2464 = vsel %vm2462, %v2463, %v2459
        %v2465 = vadd.s32 %v2460, %v2464
        %v2466 = vadd.s32 %v2465, 536870912
        %v2467 = vshrl.u32 %v2466, 30
        %v2468 = vshll.u32 %v2467, 30
        %v2469 = vsub.s32 %v2465, %v2468
        %vm2470 = vcmp.lt.s32.totalorder %v2469, 0
        %v2471 = vsub.s32 0, %v2469
        %v2472 = vsel %vm2470, %v2471, %v2469
        %v2473 = vclz %v2472
        %v2474 = vsub.s32 %v2473, 2
        %vm2475 = vcmp.gt.s32.totalorder 0, %v2474
        %v2476 = vsel %vm2475, 0, %v2474
        %v2477 = vsub.s32 32, %v2476
        %v2478 = vshll.u32 %v2469, %v2476
        %v2479 = vshrl.u32 %v2461, %v2477
        %v2480 = vor.u32 %v2478, %v2479
        %v2481 = vsub.s32 4294967266, %v2476
        %v2482 = vadd.s32 %v2481, 127
        %v2483 = vshll.u32 %v2482, 23
        %v2484 = vor.u32 4788187, %v2483
        %v2485 = vand.u32 2147483647, %v2484
        %v2487 = vcvt.s32.f32 %v2480
        %v2488 = vmul.f32 %v2487, %v2485
        %v2489 = vxor.u32 %v2488, 2147483648
        %v2490 = vsel %vm2407, %v2489, %v2488
        %v2491 = vsub.s32 4, %v2467
        %v2492 = vsel %vm2407, %v2491, %v2467
        %v2493 = vsel %vm2406, %v1267, %v2490
        %v2494 = vsel %vm2406, 0, %v2492
        %v2495 = vcosq.f32.pop %v2493
        %v2496 = vsinq.f32.pop %v2493
        %vm2497 = vweird.f32 %v1267
        %v2498 = vand.u32 %v2494, 3
        %vm2499 = vcmp.lt.s32.totalorder %v2498, 2
        %vm2500 = vcmp.eq.s32.totalorder %v2498, 0
        %v2501 = vxor.u32 %v2496, 2147483648
        %v2502 = vsel %vm2500, %v2495, %v2501
        %vm2503 = vcmp.eq.s32.totalorder %v2498, 2
        %v2504 = vxor.u32 %v2495, 2147483648
        %v2505 = vsel %vm2503, %v2504, %v2496
        %v2506 = vsel %vm2499, %v2502, %v2505
        %v2507 = vsel %vm2497, nan, %v2506
        %v2508 = vand.u32 2147483647, %v1268
        %vm2509 = vcmp.le.f32.partialorder %v2508, 0.7853982
        %vm2510 = vcmp.lt.s32.totalorder %v1268, 0
        %v2511 = vand.u32 %v1268, 2139095040
        %v2512 = vshrl.u32 %v2511, 23
        %v2513 = vsub.s32 %v2512, 127
        %v2514 = vand.u32 2147483647, %v1268
        %v2515 = vand.u32 %v2514, 8388607
        %v2516 = vor.u32 %v2515, 8388608
        %v2517 = vsub.s32 0, %v2516
        %v2518 = vadd.s32 %v2513, 1
        %vm2519 = vcmp.gt.s32.totalorder %v2518, 0
        %v2520 = vsel %vm2519, %v2518, 0
        %v2521 = vshrl.u32 %v2520, 5
        %v2522 = vand.u32 %v2520, 31
        %v2523 = vsub.s32 32, %v2522
        %v2524 = vshrl.u32 683565275, %v2523
        %v2525 = vshll.u32 683565275, %v2522
        %v2526 = vshrl.u32 2475754826, %v2523
        %v2527 = vor.u32 %v2525, %v2526
        %v2528 = vshll.u32 2475754826, %v2522
        %v2529 = vshrl.u32 2131351028, %v2523
        %v2530 = vor.u32 %v2528, %v2529
        %v2531 = vshll.u32 2131351028, %v2522
        %v2532 = vshrl.u32 2102212464, %v2523
        %v2533 = vor.u32 %v2531, %v2532
        %v2534 = vshll.u32 2102212464, %v2522
        %v2535 = vshrl.u32 920167782, %v2523
        %v2536 = vor.u32 %v2534, %v2535
        %v2537 = vshll.u32 920167782, %v2522
        %v2538 = vshrl.u32 1326507024, %v2523
        %v2539 = vor.u32 %v2537, %v2538
        %vm2540 = vcmp.lt.s32.totalorder %v2521, 1
        %vm2541 = vcmp.lt.s32.totalorder %v2521, 2
        %vm2542 = vcmp.lt.s32.totalorder %v2521, 3
        %vm2543 = vcmp.lt.s32.totalorder %v2521, 4
        %v2544 = vsel %vm2540, %v2524, %v2527
        %v2545 = vsel %vm2543, %v2533, 2102212464
        %v2546 = vsel %vm2542, %v2530, %v2545
        %v2547 = vsel %vm2541, %v2544, %v2546
        %v2548 = vsel %vm2540, %v2527, %v2530
        %v2549 = vsel %vm2543, %v2536, 920167782
        %v2550 = vsel %vm2542, %v2533, %v2549
        %v2551 = vsel %vm2541, %v2548, %v2550
        %v2552 = vsel %vm2540, %v2530, %v2533
        %v2553 = vsel %vm2543, %v2539, 1326507024
        %v2554 = vsel %vm2542, %v2536, %v2553
        %v2555 = vsel %vm2541, %v2552, %v2554
        %v2556 = vshll.u32 %v2516, 8
        %v2557 = vmul.u32.u64.compose %v2556, %v2555
        %v2558 = vextract.low.u32 %v2557
        %v2559 = vextract.high.u32 %v2557
        %v2560 = vmul.u32.u64.compose %v2556, %v2551
        %v2561 = vextract.low.u32 %v2560
        %v2562 = vextract.high.u32 %v2560
        %v2563 = vmul.u32 %v2556, %v2547
        %v2564 = vadd.s32 %v2559, %v2561
        %vm2565 = vc.u32 %v2559, %v2561
        %v2566 = vadd.s32 %v2562, 1
        %v2567 = vsel %vm2565, %v2566, %v2562
        %v2568 = vadd.s32 %v2563, %v2567
        %v2569 = vadd.s32 %v2568, 536870912
        %v2570 = vshrl.u32 %v2569, 30
        %v2571 = vshll.u32 %v2570, 30
        %v2572 = vsub.s32 %v2568, %v2571
        %vm2573 = vcmp.lt.s32.totalorder %v2572, 0
        %v2574 = vsub.s32 0, %v2572
        %v2575 = vsel %vm2573, %v2574, %v2572
        %v2576 = vclz %v2575
        %v2577 = vsub.s32 %v2576, 2
        %vm2578 = vcmp.gt.s32.totalorder 0, %v2577
        %v2579 = vsel %vm2578, 0, %v2577
        %v2580 = vsub.s32 32, %v2579
        %v2581 = vshll.u32 %v2572, %v2579
        %v2582 = vshrl.u32 %v2564, %v2580
        %v2583 = vor.u32 %v2581, %v2582
        %v2584 = vsub.s32 4294967266, %v2579
        %v2585 = vadd.s32 %v2584, 127
        %v2586 = vshll.u32 %v2585, 23
        %v2587 = vor.u32 4788187, %v2586
        %v2588 = vand.u32 2147483647, %v2587
        %v2590 = vcvt.s32.f32 %v2583
        %v2591 = vmul.f32 %v2590, %v2588
        %v2592 = vxor.u32 %v2591, 2147483648
        %v2593 = vsel %vm2510, %v2592, %v2591
        %v2594 = vsub.s32 4, %v2570
        %v2595 = vsel %vm2510, %v2594, %v2570
        %v2596 = vsel %vm2509, %v1268, %v2593
        %v2597 = vsel %vm2509, 0, %v2595
        %v2598 = vcosq.f32.pop %v2596
        %v2599 = vsinq.f32.pop %v2596
        %vm2600 = vweird.f32 %v1268
        %v2601 = vand.u32 %v2597, 3
        %vm2602 = vcmp.lt.s32.totalorder %v2601, 2
        %vm2603 = vcmp.eq.s32.totalorder %v2601, 0
        %v2604 = vxor.u32 %v2599, 2147483648
        %v2605 = vsel %vm2603, %v2598, %v2604
        %vm2606 = vcmp.eq.s32.totalorder %v2601, 2
        %v2607 = vxor.u32 %v2598, 2147483648
        %v2608 = vsel %vm2606, %v2607, %v2599
        %v2609 = vsel %vm2602, %v2605, %v2608
        %v2610 = vsel %vm2600, nan, %v2609
        %v2611 = vand.u32 2147483647, %v1269
        %vm2612 = vcmp.le.f32.partialorder %v2611, 0.7853982
        %vm2613 = vcmp.lt.s32.totalorder %v1269, 0
        %v2614 = vand.u32 %v1269, 2139095040
        %v2615 = vshrl.u32 %v2614, 23
        %v2616 = vsub.s32 %v2615, 127
        %v2617 = vand.u32 2147483647, %v1269
        %v2618 = vand.u32 %v2617, 8388607
        %v2619 = vor.u32 %v2618, 8388608
        %v2620 = vsub.s32 0, %v2619
        %v2621 = vadd.s32 %v2616, 1
        %vm2622 = vcmp.gt.s32.totalorder %v2621, 0
        %v2623 = vsel %vm2622, %v2621, 0
        %v2624 = vshrl.u32 %v2623, 5
        %v2625 = vand.u32 %v2623, 31
        %v2626 = vsub.s32 32, %v2625
        %v2627 = vshrl.u32 683565275, %v2626
        %v2628 = vshll.u32 683565275, %v2625
        %v2629 = vshrl.u32 2475754826, %v2626
        %v2630 = vor.u32 %v2628, %v2629
        %v2631 = vshll.u32 2475754826, %v2625
        %v2632 = vshrl.u32 2131351028, %v2626
        %v2633 = vor.u32 %v2631, %v2632
        %v2634 = vshll.u32 2131351028, %v2625
        %v2635 = vshrl.u32 2102212464, %v2626
        %v2636 = vor.u32 %v2634, %v2635
        %v2637 = vshll.u32 2102212464, %v2625
        %v2638 = vshrl.u32 920167782, %v2626
        %v2639 = vor.u32 %v2637, %v2638
        %v2640 = vshll.u32 920167782, %v2625
        %v2641 = vshrl.u32 1326507024, %v2626
        %v2642 = vor.u32 %v2640, %v2641
        %vm2643 = vcmp.lt.s32.totalorder %v2624, 1
        %vm2644 = vcmp.lt.s32.totalorder %v2624, 2
        %vm2645 = vcmp.lt.s32.totalorder %v2624, 3
        %vm2646 = vcmp.lt.s32.totalorder %v2624, 4
        %v2647 = vsel %vm2643, %v2627, %v2630
        %v2648 = vsel %vm2646, %v2636, 2102212464
        %v2649 = vsel %vm2645, %v2633, %v2648
        %v2650 = vsel %vm2644, %v2647, %v2649
        %v2651 = vsel %vm2643, %v2630, %v2633
        %v2652 = vsel %vm2646, %v2639, 920167782
        %v2653 = vsel %vm2645, %v2636, %v2652
        %v2654 = vsel %vm2644, %v2651, %v2653
        %v2655 = vsel %vm2643, %v2633, %v2636
        %v2656 = vsel %vm2646, %v2642, 1326507024
        %v2657 = vsel %vm2645, %v2639, %v2656
        %v2658 = vsel %vm2644, %v2655, %v2657
        %v2659 = vshll.u32 %v2619, 8
        %v2660 = vmul.u32.u64.compose %v2659, %v2658
        %v2661 = vextract.low.u32 %v2660
        %v2662 = vextract.high.u32 %v2660
        %v2663 = vmul.u32.u64.compose %v2659, %v2654
        %v2664 = vextract.low.u32 %v2663
        %v2665 = vextract.high.u32 %v2663
        %v2666 = vmul.u32 %v2659, %v2650
        %v2667 = vadd.s32 %v2662, %v2664
        %vm2668 = vc.u32 %v2662, %v2664
        %v2669 = vadd.s32 %v2665, 1
        %v2670 = vsel %vm2668, %v2669, %v2665
        %v2671 = vadd.s32 %v2666, %v2670
        %v2672 = vadd.s32 %v2671, 536870912
        %v2673 = vshrl.u32 %v2672, 30
        %v2674 = vshll.u32 %v2673, 30
        %v2675 = vsub.s32 %v2671, %v2674
        %vm2676 = vcmp.lt.s32.totalorder %v2675, 0
        %v2677 = vsub.s32 0, %v2675
        %v2678 = vsel %vm2676, %v2677, %v2675
        %v2679 = vclz %v2678
        %v2680 = vsub.s32 %v2679, 2
        %vm2681 = vcmp.gt.s32.totalorder 0, %v2680
        %v2682 = vsel %vm2681, 0, %v2680
        %v2683 = vsub.s32 32, %v2682
        %v2684 = vshll.u32 %v2675, %v2682
        %v2685 = vshrl.u32 %v2667, %v2683
        %v2686 = vor.u32 %v2684, %v2685
        %v2687 = vsub.s32 4294967266, %v2682
        %v2688 = vadd.s32 %v2687, 127
        %v2689 = vshll.u32 %v2688, 23
        %v2690 = vor.u32 4788187, %v2689
        %v2691 = vand.u32 2147483647, %v2690
        %v2693 = vcvt.s32.f32 %v2686
        %v2694 = vmul.f32 %v2693, %v2691
        %v2695 = vxor.u32 %v2694, 2147483648
        %v2696 = vsel %vm2613, %v2695, %v2694
        %v2697 = vsub.s32 4, %v2673
        %v2698 = vsel %vm2613, %v2697, %v2673
        %v2699 = vsel %vm2612, %v1269, %v2696
        %v2700 = vsel %vm2612, 0, %v2698
        %v2701 = vcosq.f32.pop %v2699
        %v2702 = vsinq.f32.pop %v2699
        %vm2703 = vweird.f32 %v1269
        %v2704 = vand.u32 %v2700, 3
        %vm2705 = vcmp.lt.s32.totalorder %v2704, 2
        %vm2706 = vcmp.eq.s32.totalorder %v2704, 0
        %v2707 = vxor.u32 %v2702, 2147483648
        %v2708 = vsel %vm2706, %v2701, %v2707
        %vm2709 = vcmp.eq.s32.totalorder %v2704, 2
        %v2710 = vxor.u32 %v2701, 2147483648
        %v2711 = vsel %vm2709, %v2710, %v2702
        %v2712 = vsel %vm2705, %v2708, %v2711
        %v2713 = vsel %vm2703, nan, %v2712
        %v2714 = vand.u32 2147483647, %v1270
        %vm2715 = vcmp.le.f32.partialorder %v2714, 0.7853982
        %vm2716 = vcmp.lt.s32.totalorder %v1270, 0
        %v2717 = vand.u32 %v1270, 2139095040
        %v2718 = vshrl.u32 %v2717, 23
        %v2719 = vsub.s32 %v2718, 127
        %v2720 = vand.u32 2147483647, %v1270
        %v2721 = vand.u32 %v2720, 8388607
        %v2722 = vor.u32 %v2721, 8388608
        %v2723 = vsub.s32 0, %v2722
        %v2724 = vadd.s32 %v2719, 1
        %vm2725 = vcmp.gt.s32.totalorder %v2724, 0
        %v2726 = vsel %vm2725, %v2724, 0
        %v2727 = vshrl.u32 %v2726, 5
        %v2728 = vand.u32 %v2726, 31
        %v2729 = vsub.s32 32, %v2728
        %v2730 = vshrl.u32 683565275, %v2729
        %v2731 = vshll.u32 683565275, %v2728
        %v2732 = vshrl.u32 2475754826, %v2729
        %v2733 = vor.u32 %v2731, %v2732
        %v2734 = vshll.u32 2475754826, %v2728
        %v2735 = vshrl.u32 2131351028, %v2729
        %v2736 = vor.u32 %v2734, %v2735
        %v2737 = vshll.u32 2131351028, %v2728
        %v2738 = vshrl.u32 2102212464, %v2729
        %v2739 = vor.u32 %v2737, %v2738
        %v2740 = vshll.u32 2102212464, %v2728
        %v2741 = vshrl.u32 920167782, %v2729
        %v2742 = vor.u32 %v2740, %v2741
        %v2743 = vshll.u32 920167782, %v2728
        %v2744 = vshrl.u32 1326507024, %v2729
        %v2745 = vor.u32 %v2743, %v2744
        %vm2746 = vcmp.lt.s32.totalorder %v2727, 1
        %vm2747 = vcmp.lt.s32.totalorder %v2727, 2
        %vm2748 = vcmp.lt.s32.totalorder %v2727, 3
        %vm2749 = vcmp.lt.s32.totalorder %v2727, 4
        %v2750 = vsel %vm2746, %v2730, %v2733
        %v2751 = vsel %vm2749, %v2739, 2102212464
        %v2752 = vsel %vm2748, %v2736, %v2751
        %v2753 = vsel %vm2747, %v2750, %v2752
        %v2754 = vsel %vm2746, %v2733, %v2736
        %v2755 = vsel %vm2749, %v2742, 920167782
        %v2756 = vsel %vm2748, %v2739, %v2755
        %v2757 = vsel %vm2747, %v2754, %v2756
        %v2758 = vsel %vm2746, %v2736, %v2739
        %v2759 = vsel %vm2749, %v2745, 1326507024
        %v2760 = vsel %vm2748, %v2742, %v2759
        %v2761 = vsel %vm2747, %v2758, %v2760
        %v2762 = vshll.u32 %v2722, 8
        %v2763 = vmul.u32.u64.compose %v2762, %v2761
        %v2764 = vextract.low.u32 %v2763
        %v2765 = vextract.high.u32 %v2763
        %v2766 = vmul.u32.u64.compose %v2762, %v2757
        %v2767 = vextract.low.u32 %v2766
        %v2768 = vextract.high.u32 %v2766
        %v2769 = vmul.u32 %v2762, %v2753
        %v2770 = vadd.s32 %v2765, %v2767
        %vm2771 = vc.u32 %v2765, %v2767
        %v2772 = vadd.s32 %v2768, 1
        %v2773 = vsel %vm2771, %v2772, %v2768
        %v2774 = vadd.s32 %v2769, %v2773
        %v2775 = vadd.s32 %v2774, 536870912
        %v2776 = vshrl.u32 %v2775, 30
        %v2777 = vshll.u32 %v2776, 30
        %v2778 = vsub.s32 %v2774, %v2777
        %vm2779 = vcmp.lt.s32.totalorder %v2778, 0
        %v2780 = vsub.s32 0, %v2778
        %v2781 = vsel %vm2779, %v2780, %v2778
        %v2782 = vclz %v2781
        %v2783 = vsub.s32 %v2782, 2
        %vm2784 = vcmp.gt.s32.totalorder 0, %v2783
        %v2785 = vsel %vm2784, 0, %v2783
        %v2786 = vsub.s32 32, %v2785
        %v2787 = vshll.u32 %v2778, %v2785
        %v2788 = vshrl.u32 %v2770, %v2786
        %v2789 = vor.u32 %v2787, %v2788
        %v2790 = vsub.s32 4294967266, %v2785
        %v2791 = vadd.s32 %v2790, 127
        %v2792 = vshll.u32 %v2791, 23
        %v2793 = vor.u32 4788187, %v2792
        %v2794 = vand.u32 2147483647, %v2793
        %v2796 = vcvt.s32.f32 %v2789
        %v2797 = vmul.f32 %v2796, %v2794
        %v2798 = vxor.u32 %v2797, 2147483648
        %v2799 = vsel %vm2716, %v2798, %v2797
        %v2800 = vsub.s32 4, %v2776
        %v2801 = vsel %vm2716, %v2800, %v2776
        %v2802 = vsel %vm2715, %v1270, %v2799
        %v2803 = vsel %vm2715, 0, %v2801
        %v2804 = vcosq.f32.pop %v2802
        %v2805 = vsinq.f32.pop %v2802
        %vm2806 = vweird.f32 %v1270
        %v2807 = vand.u32 %v2803, 3
        %vm2808 = vcmp.lt.s32.totalorder %v2807, 2
        %vm2809 = vcmp.eq.s32.totalorder %v2807, 0
        %v2810 = vxor.u32 %v2805, 2147483648
        %v2811 = vsel %vm2809, %v2804, %v2810
        %vm2812 = vcmp.eq.s32.totalorder %v2807, 2
        %v2813 = vxor.u32 %v2804, 2147483648
        %v2814 = vsel %vm2812, %v2813, %v2805
        %v2815 = vsel %vm2808, %v2811, %v2814
        %v2816 = vsel %vm2806, nan, %v2815
        %v2817 = vand.u32 2147483647, %v1271
        %vm2818 = vcmp.le.f32.partialorder %v2817, 0.7853982
        %vm2819 = vcmp.lt.s32.totalorder %v1271, 0
        %v2820 = vand.u32 %v1271, 2139095040
        %v2821 = vshrl.u32 %v2820, 23
        %v2822 = vsub.s32 %v2821, 127
        %v2823 = vand.u32 2147483647, %v1271
        %v2824 = vand.u32 %v2823, 8388607
        %v2825 = vor.u32 %v2824, 8388608
        %v2826 = vsub.s32 0, %v2825
        %v2827 = vadd.s32 %v2822, 1
        %vm2828 = vcmp.gt.s32.totalorder %v2827, 0
        %v2829 = vsel %vm2828, %v2827, 0
        %v2830 = vshrl.u32 %v2829, 5
        %v2831 = vand.u32 %v2829, 31
        %v2832 = vsub.s32 32, %v2831
        %v2833 = vshrl.u32 683565275, %v2832
        %v2834 = vshll.u32 683565275, %v2831
        %v2835 = vshrl.u32 2475754826, %v2832
        %v2836 = vor.u32 %v2834, %v2835
        %v2837 = vshll.u32 2475754826, %v2831
        %v2838 = vshrl.u32 2131351028, %v2832
        %v2839 = vor.u32 %v2837, %v2838
        %v2840 = vshll.u32 2131351028, %v2831
        %v2841 = vshrl.u32 2102212464, %v2832
        %v2842 = vor.u32 %v2840, %v2841
        %v2843 = vshll.u32 2102212464, %v2831
        %v2844 = vshrl.u32 920167782, %v2832
        %v2845 = vor.u32 %v2843, %v2844
        %v2846 = vshll.u32 920167782, %v2831
        %v2847 = vshrl.u32 1326507024, %v2832
        %v2848 = vor.u32 %v2846, %v2847
        %vm2849 = vcmp.lt.s32.totalorder %v2830, 1
        %vm2850 = vcmp.lt.s32.totalorder %v2830, 2
        %vm2851 = vcmp.lt.s32.totalorder %v2830, 3
        %vm2852 = vcmp.lt.s32.totalorder %v2830, 4
        %v2853 = vsel %vm2849, %v2833, %v2836
        %v2854 = vsel %vm2852, %v2842, 2102212464
        %v2855 = vsel %vm2851, %v2839, %v2854
        %v2856 = vsel %vm2850, %v2853, %v2855
        %v2857 = vsel %vm2849, %v2836, %v2839
        %v2858 = vsel %vm2852, %v2845, 920167782
        %v2859 = vsel %vm2851, %v2842, %v2858
        %v2860 = vsel %vm2850, %v2857, %v2859
        %v2861 = vsel %vm2849, %v2839, %v2842
        %v2862 = vsel %vm2852, %v2848, 1326507024
        %v2863 = vsel %vm2851, %v2845, %v2862
        %v2864 = vsel %vm2850, %v2861, %v2863
        %v2865 = vshll.u32 %v2825, 8
        %v2866 = vmul.u32.u64.compose %v2865, %v2864
        %v2867 = vextract.low.u32 %v2866
        %v2868 = vextract.high.u32 %v2866
        %v2869 = vmul.u32.u64.compose %v2865, %v2860
        %v2870 = vextract.low.u32 %v2869
        %v2871 = vextract.high.u32 %v2869
        %v2872 = vmul.u32 %v2865, %v2856
        %v2873 = vadd.s32 %v2868, %v2870
        %vm2874 = vc.u32 %v2868, %v2870
        %v2875 = vadd.s32 %v2871, 1
        %v2876 = vsel %vm2874, %v2875, %v2871
        %v2877 = vadd.s32 %v2872, %v2876
        %v2878 = vadd.s32 %v2877, 536870912
        %v2879 = vshrl.u32 %v2878, 30
        %v2880 = vshll.u32 %v2879, 30
        %v2881 = vsub.s32 %v2877, %v2880
        %vm2882 = vcmp.lt.s32.totalorder %v2881, 0
        %v2883 = vsub.s32 0, %v2881
        %v2884 = vsel %vm2882, %v2883, %v2881
        %v2885 = vclz %v2884
        %v2886 = vsub.s32 %v2885, 2
        %vm2887 = vcmp.gt.s32.totalorder 0, %v2886
        %v2888 = vsel %vm2887, 0, %v2886
        %v2889 = vsub.s32 32, %v2888
        %v2890 = vshll.u32 %v2881, %v2888
        %v2891 = vshrl.u32 %v2873, %v2889
        %v2892 = vor.u32 %v2890, %v2891
        %v2893 = vsub.s32 4294967266, %v2888
        %v2894 = vadd.s32 %v2893, 127
        %v2895 = vshll.u32 %v2894, 23
        %v2896 = vor.u32 4788187, %v2895
        %v2897 = vand.u32 2147483647, %v2896
        %v2899 = vcvt.s32.f32 %v2892
        %v2900 = vmul.f32 %v2899, %v2897
        %v2901 = vxor.u32 %v2900, 2147483648
        %v2902 = vsel %vm2819, %v2901, %v2900
        %v2903 = vsub.s32 4, %v2879
        %v2904 = vsel %vm2819, %v2903, %v2879
        %v2905 = vsel %vm2818, %v1271, %v2902
        %v2906 = vsel %vm2818, 0, %v2904
        %v2907 = vcosq.f32.pop %v2905
        %v2908 = vsinq.f32.pop %v2905
        %vm2909 = vweird.f32 %v1271
        %v2910 = vand.u32 %v2906, 3
        %vm2911 = vcmp.lt.s32.totalorder %v2910, 2
        %vm2912 = vcmp.eq.s32.totalorder %v2910, 0
        %v2913 = vxor.u32 %v2908, 2147483648
        %v2914 = vsel %vm2912, %v2907, %v2913
        %vm2915 = vcmp.eq.s32.totalorder %v2910, 2
        %v2916 = vxor.u32 %v2907, 2147483648
        %v2917 = vsel %vm2915, %v2916, %v2908
        %v2918 = vsel %vm2911, %v2914, %v2917
        %v2919 = vsel %vm2909, nan, %v2918
        %v2920 = vadd.f32 %v1374, 1.0
        %v2921 = vadd.f32 %v1477, 1.0
        %v2922 = vadd.f32 %v1580, 1.0
        %v2923 = vadd.f32 %v1683, 1.0
        %v2924 = vadd.f32 %v1786, 1.0
        %v2925 = vadd.f32 %v1889, 1.0
        %v2926 = vadd.f32 %v1992, 1.0
        %v2927 = vadd.f32 %v2095, 1.0
        %v2928 = vadd.f32 %v2198, 1.0
        %v2929 = vadd.f32 %v2301, 1.0
        %v2930 = vadd.f32 %v2404, 1.0
        %v2931 = vadd.f32 %v2507, 1.0
        %v2932 = vadd.f32 %v2610, 1.0
        %v2933 = vadd.f32 %v2713, 1.0
        %v2934 = vadd.f32 %v2816, 1.0
        %v2935 = vadd.f32 %v2919, 1.0
        %v2936 = vmul.f32 %v2920, 0.5
        %v2937 = vmul.f32 %v2921, 0.5
        %v2938 = vmul.f32 %v2922, 0.5
        %v2939 = vmul.f32 %v2923, 0.5
        %v2940 = vmul.f32 %v2924, 0.5
        %v2941 = vmul.f32 %v2925, 0.5
        %v2942 = vmul.f32 %v2926, 0.5
        %v2943 = vmul.f32 %v2927, 0.5
        %v2944 = vmul.f32 %v2928, 0.5
        %v2945 = vmul.f32 %v2929, 0.5
        %v2946 = vmul.f32 %v2930, 0.5
        %v2947 = vmul.f32 %v2931, 0.5
        %v2948 = vmul.f32 %v2932, 0.5
        %v2949 = vmul.f32 %v2933, 0.5
        %v2950 = vmul.f32 %v2934, 0.5
        %v2951 = vmul.f32 %v2935, 0.5
        %2953 = vset.pattern.permute.xlu0 1
        %2954 = vperm.xlu0 %2953, %v2936
        %v2955 = vpop.permute.xlu0 %2954
        %2958 = vset.pattern.permute.xlu0 1
        %2959 = vperm.xlu0 %2958, %v2937
        %v2960 = vpop.permute.xlu0 %2959
        %2963 = vset.pattern.permute.xlu0 1
        %2964 = vperm.xlu0 %2963, %v2938
        %v2965 = vpop.permute.xlu0 %2964
        %2968 = vset.pattern.permute.xlu0 1
        %2969 = vperm.xlu0 %2968, %v2939
        %v2970 = vpop.permute.xlu0 %2969
        %2973 = vset.pattern.permute.xlu0 1
        %2974 = vperm.xlu0 %2973, %v2940
        %v2975 = vpop.permute.xlu0 %2974
        %2978 = vset.pattern.permute.xlu0 1
        %2979 = vperm.xlu0 %2978, %v2941
        %v2980 = vpop.permute.xlu0 %2979
        %2983 = vset.pattern.permute.xlu0 1
        %2984 = vperm.xlu0 %2983, %v2942
        %v2985 = vpop.permute.xlu0 %2984
        %2988 = vset.pattern.permute.xlu0 1
        %2989 = vperm.xlu0 %2988, %v2943
        %v2990 = vpop.permute.xlu0 %2989
        %2993 = vset.pattern.permute.xlu0 1
        %2994 = vperm.xlu0 %2993, %v2944
        %v2995 = vpop.permute.xlu0 %2994
        %2998 = vset.pattern.permute.xlu0 1
        %2999 = vperm.xlu0 %2998, %v2945
        %v3000 = vpop.permute.xlu0 %2999
        %3003 = vset.pattern.permute.xlu0 1
        %3004 = vperm.xlu0 %3003, %v2946
        %v3005 = vpop.permute.xlu0 %3004
        %3008 = vset.pattern.permute.xlu0 1
        %3009 = vperm.xlu0 %3008, %v2947
        %v3010 = vpop.permute.xlu0 %3009
        %3013 = vset.pattern.permute.xlu0 1
        %3014 = vperm.xlu0 %3013, %v2948
        %v3015 = vpop.permute.xlu0 %3014
        %3018 = vset.pattern.permute.xlu0 1
        %3019 = vperm.xlu0 %3018, %v2949
        %v3020 = vpop.permute.xlu0 %3019
        %3023 = vset.pattern.permute.xlu0 1
        %3024 = vperm.xlu0 %3023, %v2950
        %v3025 = vpop.permute.xlu0 %3024
        %3028 = vset.pattern.permute.xlu0 1
        %3029 = vperm.xlu0 %3028, %v2951
        %v3030 = vpop.permute.xlu0 %3029
        %v3032 = vmul.f32 %v1178, %v2955
        %v3033 = vmul.f32 %v1183, %v2960
        %v3034 = vmul.f32 %v1188, %v2965
        %v3035 = vmul.f32 %v1193, %v2970
        %v3036 = vmul.f32 %v1198, %v2975
        %v3037 = vmul.f32 %v1203, %v2980
        %v3038 = vmul.f32 %v1208, %v2985
        %v3039 = vmul.f32 %v1213, %v2990
        %v3040 = vmul.f32 %v1218, %v2995
        %v3041 = vmul.f32 %v1223, %v3000
        %v3042 = vmul.f32 %v1228, %v3005
        %v3043 = vmul.f32 %v1233, %v3010
        %v3044 = vmul.f32 %v1238, %v3015
        %v3045 = vmul.f32 %v1243, %v3020
        %v3046 = vmul.f32 %v1248, %v3025
        %v3047 = vmul.f32 %v1253, %v3030
        %v3048 = vlaneseq
        %v3049 = vand.u32 %v3048, 127
        %3050 = vset.pattern.permute.xlu0 0
        %3051 = vperm.xlu0 %3050, %v638
        %v3052 = vpop.permute.xlu0 %3051
        %3053 = vset.pattern.permute.xlu0 0
        %3054 = vperm.xlu0 %3053, %v639
        %v3055 = vpop.permute.xlu0 %3054
        %3056 = vset.pattern.permute.xlu0 0
        %3057 = vperm.xlu0 %3056, %v640
        %v3058 = vpop.permute.xlu0 %3057
        %3059 = vset.pattern.permute.xlu0 0
        %3060 = vperm.xlu0 %3059, %v641
        %v3061 = vpop.permute.xlu0 %3060
        %3062 = vset.pattern.permute.xlu0 0
        %3063 = vperm.xlu0 %3062, %v642
        %v3064 = vpop.permute.xlu0 %3063
        %3065 = vset.pattern.permute.xlu0 0
        %3066 = vperm.xlu0 %3065, %v643
        %v3067 = vpop.permute.xlu0 %3066
        %3068 = vset.pattern.permute.xlu0 0
        %3069 = vperm.xlu0 %3068, %v644
        %v3070 = vpop.permute.xlu0 %3069
        %3071 = vset.pattern.permute.xlu0 0
        %3072 = vperm.xlu0 %3071, %v645
        %v3073 = vpop.permute.xlu0 %3072
        %3074 = vset.pattern.permute.xlu0 0
        %3075 = vperm.xlu0 %3074, %v646
        %v3076 = vpop.permute.xlu0 %3075
        %3077 = vset.pattern.permute.xlu0 0
        %3078 = vperm.xlu0 %3077, %v647
        %v3079 = vpop.permute.xlu0 %3078
        %3080 = vset.pattern.permute.xlu0 0
        %3081 = vperm.xlu0 %3080, %v648
        %v3082 = vpop.permute.xlu0 %3081
        %3083 = vset.pattern.permute.xlu0 0
        %3084 = vperm.xlu0 %3083, %v649
        %v3085 = vpop.permute.xlu0 %3084
        %3086 = vset.pattern.permute.xlu0 0
        %3087 = vperm.xlu0 %3086, %v650
        %v3088 = vpop.permute.xlu0 %3087
        %3089 = vset.pattern.permute.xlu0 0
        %3090 = vperm.xlu0 %3089, %v651
        %v3091 = vpop.permute.xlu0 %3090
        %3092 = vset.pattern.permute.xlu0 0
        %3093 = vperm.xlu0 %3092, %v652
        %v3094 = vpop.permute.xlu0 %3093
        %3095 = vset.pattern.permute.xlu0 0
        %3096 = vperm.xlu0 %3095, %v653
        %v3097 = vpop.permute.xlu0 %3096
        %vm3098 = vcmp.eq.s32.totalorder %v3052, %v3049
        %vm3099 = vcmp.eq.s32.totalorder %v3055, %v3049
        %vm3100 = vcmp.eq.s32.totalorder %v3058, %v3049
        %vm3101 = vcmp.eq.s32.totalorder %v3061, %v3049
        %vm3102 = vcmp.eq.s32.totalorder %v3064, %v3049
        %vm3103 = vcmp.eq.s32.totalorder %v3067, %v3049
        %vm3104 = vcmp.eq.s32.totalorder %v3070, %v3049
        %vm3105 = vcmp.eq.s32.totalorder %v3073, %v3049
        %vm3106 = vcmp.eq.s32.totalorder %v3076, %v3049
        %vm3107 = vcmp.eq.s32.totalorder %v3079, %v3049
        %vm3108 = vcmp.eq.s32.totalorder %v3082, %v3049
        %vm3109 = vcmp.eq.s32.totalorder %v3085, %v3049
        %vm3110 = vcmp.eq.s32.totalorder %v3088, %v3049
        %vm3111 = vcmp.eq.s32.totalorder %v3091, %v3049
        %vm3112 = vcmp.eq.s32.totalorder %v3094, %v3049
        %vm3113 = vcmp.eq.s32.totalorder %v3097, %v3049
        %v3114 = vsel %vm3098, 1, 0
        %v3115 = vsel %vm3099, 1, 0
        %v3116 = vsel %vm3100, 1, 0
        %v3117 = vsel %vm3101, 1, 0
        %v3118 = vsel %vm3102, 1, 0
        %v3119 = vsel %vm3103, 1, 0
        %v3120 = vsel %vm3104, 1, 0
        %v3121 = vsel %vm3105, 1, 0
        %v3122 = vsel %vm3106, 1, 0
        %v3123 = vsel %vm3107, 1, 0
        %v3124 = vsel %vm3108, 1, 0
        %v3125 = vsel %vm3109, 1, 0
        %v3126 = vsel %vm3110, 1, 0
        %v3127 = vsel %vm3111, 1, 0
        %v3128 = vsel %vm3112, 1, 0
        %v3129 = vsel %vm3113, 1, 0
        %v3130 = vcvt.s32.f32 %v3114
        %v3131 = vcvt.s32.f32 %v3115
        %v3132 = vcvt.s32.f32 %v3116
        %v3133 = vcvt.s32.f32 %v3117
        %v3134 = vcvt.s32.f32 %v3118
        %v3135 = vcvt.s32.f32 %v3119
        %v3136 = vcvt.s32.f32 %v3120
        %v3137 = vcvt.s32.f32 %v3121
        %v3138 = vcvt.s32.f32 %v3122
        %v3139 = vcvt.s32.f32 %v3123
        %v3140 = vcvt.s32.f32 %v3124
        %v3141 = vcvt.s32.f32 %v3125
        %v3142 = vcvt.s32.f32 %v3126
        %v3143 = vcvt.s32.f32 %v3127
        %v3144 = vcvt.s32.f32 %v3128
        %v3145 = vcvt.s32.f32 %v3129
        %v3146 = vld [vmem:[#allocation2] sm:$0xff]
        %v3147 = vld [vmem:[#allocation2 + $0x8] sm:$0xff]
        %v3148 = vld [vmem:[#allocation2 + $0x10] sm:$0xff]
        %v3149 = vld [vmem:[#allocation2 + $0x18] sm:$0xff]
        %v3150 = vld [vmem:[#allocation2 + $0x20] sm:$0xff]
        %v3151 = vld [vmem:[#allocation2 + $0x28] sm:$0xff]
        %v3152 = vld [vmem:[#allocation2 + $0x30] sm:$0xff]
        %v3153 = vld [vmem:[#allocation2 + $0x38] sm:$0xff]
        %vm3154 = vcmask 523264
        %v3156 = vsel %vm3154, %v3130, 0
        %v3159 = vsel %vm3154, %v3131, 0
        %v3162 = vsel %vm3154, %v3132, 0
        %v3165 = vsel %vm3154, %v3133, 0
        %v3168 = vsel %vm3154, %v3134, 0
        %v3171 = vsel %vm3154, %v3135, 0
        %v3174 = vsel %vm3154, %v3136, 0
        %v3177 = vsel %vm3154, %v3137, 0
        %v3180 = vsel %vm3154, %v3138, 0
        %v3183 = vsel %vm3154, %v3139, 0
        %v3186 = vsel %vm3154, %v3140, 0
        %v3189 = vsel %vm3154, %v3141, 0
        %v3192 = vsel %vm3154, %v3142, 0
        %v3195 = vsel %vm3154, %v3143, 0
        %v3198 = vsel %vm3154, %v3144, 0
        %v3201 = vsel %vm3154, %v3145, 0
        %3203 = vmatprep.subr.mxu0 0.0
        %3204 = vmatpush1.msra.mxu0 %v3146
        %3205 = vmatprep.subr.mxu0 0.0
        %3206 = vmatpush1.msra.mxu0 %v3147
        %3207 = vmatprep.subr.mxu0 0.0
        %3208 = vmatpush1.msra.mxu0 %v3148
        %3209 = vmatprep.subr.mxu0 0.0
        %3210 = vmatpush1.msra.mxu0 %v3149
        %3211 = vmatprep.subr.mxu0 0.0
        %3212 = vmatpush1.msra.mxu0 %v3150
        %3213 = vmatprep.subr.mxu0 0.0
        %3214 = vmatpush1.msra.mxu0 %v3151
        %3215 = vmatprep.subr.mxu0 0.0
        %3216 = vmatpush1.msra.mxu0 %v3152
        %3217 = vmatprep.subr.mxu0 0.0
        %3218 = vmatpush1.msra.mxu0 %v3153
        %3219 = vmatprep.subr.mxu0 0.0
        %3220 = vmatpush1.msra.mxu0 0.0
        %3221 = vmatprep.subr.mxu0 0.0
        %3222 = vmatpush1.msra.mxu0 0.0
        %3223 = vmatprep.subr.mxu0 0.0
        %3224 = vmatpush1.msra.mxu0 0.0
        %3225 = vmatprep.subr.mxu0 0.0
        %3226 = vmatpush1.msra.mxu0 0.0
        %3227 = vmatprep.subr.mxu0 0.0
        %3228 = vmatpush1.msra.mxu0 0.0
        %3229 = vmatprep.subr.mxu0 0.0
        %3230 = vmatpush1.msra.mxu0 0.0
        %3231 = vmatprep.subr.mxu0 0.0
        %3232 = vmatpush1.msra.mxu0 0.0
        %3233 = vmatprep.subr.mxu0 0.0
        %3234 = vmatpush1.msra.mxu0 0.0
        %3235 = vmatprep.subr.mxu0 0.0
        %3236 = vmatpush1.msra.mxu0 0.0
        %3237 = vmatprep.subr.mxu0 0.0
        %3238 = vmatpush1.msra.mxu0 0.0
        %3239 = vmatprep.subr.mxu0 0.0
        %3240 = vmatpush1.msra.mxu0 0.0
        %3241 = vmatprep.subr.mxu0 0.0
        %3242 = vmatpush1.msra.mxu0 0.0
        %3243 = vmatprep.subr.mxu0 0.0
        %3244 = vmatpush1.msra.mxu0 0.0
        %3245 = vmatprep.subr.mxu0 0.0
        %3246 = vmatpush1.msra.mxu0 0.0
        %3247 = vmatprep.subr.mxu0 0.0
        %3248 = vmatpush1.msra.mxu0 0.0
        %3249 = vmatprep.subr.mxu0 0.0
        %3250 = vmatpush1.msra.mxu0 0.0
        %3251 = vmatprep.subr.mxu0 0.0
        %3252 = vmatpush1.msra.mxu0 0.0
        %3253 = vmatprep.subr.mxu0 0.0
        %3254 = vmatpush1.msra.mxu0 0.0
        %3255 = vmatprep.subr.mxu0 0.0
        %3256 = vmatpush1.msra.mxu0 0.0
        %3257 = vmatprep.subr.mxu0 0.0
        %3258 = vmatpush1.msra.mxu0 0.0
        %3259 = vmatprep.subr.mxu0 0.0
        %3260 = vmatpush1.msra.mxu0 0.0
        %3261 = vmatprep.subr.mxu0 0.0
        %3262 = vmatpush1.msra.mxu0 0.0
        %3263 = vmatprep.subr.mxu0 0.0
        %3264 = vmatpush1.msra.mxu0 0.0
        %3265 = vmatprep.subr.mxu0 0.0
        %3266 = vmatpush1.msra.mxu0 0.0
        %3267 = vmatprep.mubr.f32.mxu0 0.0
        %3268 = vmatmul.mubr.f32.gmra.mrb[0].mxu0 %v3156
        %v3269 = vpop.f32.mrb[0].mxu0
        %v3270 = vadd.f32 0.0, %v3269
        %v3271 = vpop.f32.mrb[0].mxu0
        %3272 = vmatprep.mubr.f32.mxu0 0.0
        %3273 = vmatmul.mubr.f32.gmra.mrb[0].mxu0 %v3159
        %v3274 = vpop.f32.mrb[0].mxu0
        %v3275 = vadd.f32 0.0, %v3274
        %v3276 = vpop.f32.mrb[0].mxu0
        %3277 = vmatprep.mubr.f32.mxu0 0.0
        %3278 = vmatmul.mubr.f32.gmra.mrb[0].mxu0 %v3162
        %v3279 = vpop.f32.mrb[0].mxu0
        %v3280 = vadd.f32 0.0, %v3279
        %v3281 = vpop.f32.mrb[0].mxu0
        %3282 = vmatprep.mubr.f32.mxu0 0.0
        %3283 = vmatmul.mubr.f32.gmra.mrb[0].mxu0 %v3165
        %v3284 = vpop.f32.mrb[0].mxu0
        %v3285 = vadd.f32 0.0, %v3284
        %v3286 = vpop.f32.mrb[0].mxu0
        %3287 = vmatprep.mubr.f32.mxu0 0.0
        %3288 = vmatmul.mubr.f32.gmra.mrb[0].mxu0 %v3168
        %v3289 = vpop.f32.mrb[0].mxu0
        %v3290 = vadd.f32 0.0, %v3289
        %v3291 = vpop.f32.mrb[0].mxu0
        %3292 = vmatprep.mubr.f32.mxu0 0.0
        %3293 = vmatmul.mubr.f32.gmra.mrb[0].mxu0 %v3171
        %v3294 = vpop.f32.mrb[0].mxu0
        %v3295 = vadd.f32 0.0, %v3294
        %v3296 = vpop.f32.mrb[0].mxu0
        %3297 = vmatprep.mubr.f32.mxu0 0.0
        %3298 = vmatmul.mubr.f32.gmra.mrb[0].mxu0 %v3174
        %v3299 = vpop.f32.mrb[0].mxu0
        %v3300 = vadd.f32 0.0, %v3299
        %v3301 = vpop.f32.mrb[0].mxu0
        %3302 = vmatprep.mubr.f32.mxu0 0.0
        %3303 = vmatmul.mubr.f32.gmra.mrb[0].mxu0 %v3177
        %v3304 = vpop.f32.mrb[0].mxu0
        %v3305 = vadd.f32 0.0, %v3304
        %v3306 = vpop.f32.mrb[0].mxu0
        %3307 = vmatprep.mubr.f32.mxu0 0.0
        %3308 = vmatmul.mubr.f32.gmra.mrb[0].mxu0 %v3180
        %v3309 = vpop.f32.mrb[0].mxu0
        %v3310 = vadd.f32 0.0, %v3309
        %v3311 = vpop.f32.mrb[0].mxu0
        %3312 = vmatprep.mubr.f32.mxu0 0.0
        %3313 = vmatmul.mubr.f32.gmra.mrb[0].mxu0 %v3183
        %v3314 = vpop.f32.mrb[0].mxu0
        %v3315 = vadd.f32 0.0, %v3314
        %v3316 = vpop.f32.mrb[0].mxu0
        %3317 = vmatprep.mubr.f32.mxu0 0.0
        %3318 = vmatmul.mubr.f32.gmra.mrb[0].mxu0 %v3186
        %v3319 = vpop.f32.mrb[0].mxu0
        %v3320 = vadd.f32 0.0, %v3319
        %v3321 = vpop.f32.mrb[0].mxu0
        %3322 = vmatprep.mubr.f32.mxu0 0.0
        %3323 = vmatmul.mubr.f32.gmra.mrb[0].mxu0 %v3189
        %v3324 = vpop.f32.mrb[0].mxu0
        %v3325 = vadd.f32 0.0, %v3324
        %v3326 = vpop.f32.mrb[0].mxu0
        %3327 = vmatprep.mubr.f32.mxu0 0.0
        %3328 = vmatmul.mubr.f32.gmra.mrb[0].mxu0 %v3192
        %v3329 = vpop.f32.mrb[0].mxu0
        %v3330 = vadd.f32 0.0, %v3329
        %v3331 = vpop.f32.mrb[0].mxu0
        %3332 = vmatprep.mubr.f32.mxu0 0.0
        %3333 = vmatmul.mubr.f32.gmra.mrb[0].mxu0 %v3195
        %v3334 = vpop.f32.mrb[0].mxu0
        %v3335 = vadd.f32 0.0, %v3334
        %v3336 = vpop.f32.mrb[0].mxu0
        %3337 = vmatprep.mubr.f32.mxu0 0.0
        %3338 = vmatmul.mubr.f32.gmra.mrb[0].mxu0 %v3198
        %v3339 = vpop.f32.mrb[0].mxu0
        %v3340 = vadd.f32 0.0, %v3339
        %v3341 = vpop.f32.mrb[0].mxu0
        %3342 = vmatprep.mubr.f32.mxu0 0.0
        %3343 = vmatmul.mubr.f32.gmra.mrb[0].mxu0 %v3201
        %v3344 = vpop.f32.mrb[0].mxu0
        %v3345 = vadd.f32 0.0, %v3344
        %v3346 = vpop.f32.mrb[0].mxu0
        %3347 = vdwg.mxu0
        %v3348 = vmul.f32 %v3270, %v3032
        %v3349 = vmul.f32 %v3275, %v3033
        %v3350 = vmul.f32 %v3280, %v3034
        %v3351 = vmul.f32 %v3285, %v3035
        %v3352 = vmul.f32 %v3290, %v3036
        %v3353 = vmul.f32 %v3295, %v3037
        %v3354 = vmul.f32 %v3300, %v3038
        %v3355 = vmul.f32 %v3305, %v3039
        %v3356 = vmul.f32 %v3310, %v3040
        %v3357 = vmul.f32 %v3315, %v3041
        %v3358 = vmul.f32 %v3320, %v3042
        %v3359 = vmul.f32 %v3325, %v3043
        %v3360 = vmul.f32 %v3330, %v3044
        %v3361 = vmul.f32 %v3335, %v3045
        %v3362 = vmul.f32 %v3340, %v3046
        %v3363 = vmul.f32 %v3345, %v3047
        %v3364 = vld [vmem:[%s465] sm:$0x1]
        %v3365 = vlaneseq
        %v3366 = vshrl.u32 %v3365, 7
        %v3367 = vadd.s32 %v3366, 8
        %v3368 = vadd.s32 %v3366, 16
        %v3369 = vadd.s32 %v3366, 24
        %v3370 = vadd.s32 %v3366, 32
        %v3371 = vadd.s32 %v3366, 40
        %v3372 = vadd.s32 %v3366, 48
        %v3373 = vadd.s32 %v3366, 56
        %v3374 = vlaneseq
        %v3375 = vshrl.u32 %v3374, 7
        %v3376 = vsub.s32 0, %v3375
        %v3377 = vrot.slane %v3364, %v3376
        %vm3378 = vcmp.eq.s32.totalorder %v3377, %v3366
        %vm3379 = vcmp.eq.s32.totalorder %v3377, %v3367
        %vm3380 = vcmp.eq.s32.totalorder %v3377, %v3368
        %vm3381 = vcmp.eq.s32.totalorder %v3377, %v3369
        %vm3382 = vcmp.eq.s32.totalorder %v3377, %v3370
        %vm3383 = vcmp.eq.s32.totalorder %v3377, %v3371
        %vm3384 = vcmp.eq.s32.totalorder %v3377, %v3372
        %vm3385 = vcmp.eq.s32.totalorder %v3377, %v3373
        %v3386 = vsel %vm3378, 1, 0
        %v3387 = vsel %vm3379, 1, 0
        %v3388 = vsel %vm3380, 1, 0
        %v3389 = vsel %vm3381, 1, 0
        %v3390 = vsel %vm3382, 1, 0
        %v3391 = vsel %vm3383, 1, 0
        %v3392 = vsel %vm3384, 1, 0
        %v3393 = vsel %vm3385, 1, 0
        %v3394 = vcvt.s32.f32 %v3386
        %v3395 = vcvt.s32.f32 %v3387
        %v3396 = vcvt.s32.f32 %v3388
        %v3397 = vcvt.s32.f32 %v3389
        %v3398 = vcvt.s32.f32 %v3390
        %v3399 = vcvt.s32.f32 %v3391
        %v3400 = vcvt.s32.f32 %v3392
        %v3401 = vcvt.s32.f32 %v3393
        %v3402 = vld [vmem:[#allocation3] sm:$0xff]
        %v3403 = vld [vmem:[#allocation3 + $0x8] sm:$0xff]
        %v3404 = vld [vmem:[#allocation3 + $0x10] sm:$0xff]
        %v3405 = vld [vmem:[#allocation3 + $0x18] sm:$0xff]
        %v3406 = vld [vmem:[#allocation3 + $0x20] sm:$0xff]
        %v3407 = vld [vmem:[#allocation3 + $0x28] sm:$0xff]
        %v3408 = vld [vmem:[#allocation3 + $0x30] sm:$0xff]
        %v3409 = vld [vmem:[#allocation3 + $0x38] sm:$0xff]
        %3410 = vmatprep.subr.mxu0 0.0
        %3411 = vmatpush1.msra.mxu0 %v3348
        %3412 = vmatprep.subr.mxu0 0.0
        %3413 = vmatpush1.msra.mxu0 %v3349
        %3414 = vmatprep.subr.mxu0 0.0
        %3415 = vmatpush1.msra.mxu0 %v3350
        %3416 = vmatprep.subr.mxu0 0.0
        %3417 = vmatpush1.msra.mxu0 %v3351
        %3418 = vmatprep.subr.mxu0 0.0
        %3419 = vmatpush1.msra.mxu0 %v3352
        %3420 = vmatprep.subr.mxu0 0.0
        %3421 = vmatpush1.msra.mxu0 %v3353
        %3422 = vmatprep.subr.mxu0 0.0
        %3423 = vmatpush1.msra.mxu0 %v3354
        %3424 = vmatprep.subr.mxu0 0.0
        %3425 = vmatpush1.msra.mxu0 %v3355
        %3426 = vmatprep.subr.mxu0 0.0
        %3427 = vmatpush1.msra.mxu0 %v3356
        %3428 = vmatprep.subr.mxu0 0.0
        %3429 = vmatpush1.msra.mxu0 %v3357
        %3430 = vmatprep.subr.mxu0 0.0
        %3431 = vmatpush1.msra.mxu0 %v3358
        %3432 = vmatprep.subr.mxu0 0.0
        %3433 = vmatpush1.msra.mxu0 %v3359
        %3434 = vmatprep.subr.mxu0 0.0
        %3435 = vmatpush1.msra.mxu0 %v3360
        %3436 = vmatprep.subr.mxu0 0.0
        %3437 = vmatpush1.msra.mxu0 %v3361
        %3438 = vmatprep.subr.mxu0 0.0
        %3439 = vmatpush1.msra.mxu0 %v3362
        %3440 = vmatprep.subr.mxu0 0.0
        %3441 = vmatpush1.msra.mxu0 %v3363
        %3442 = vmatprep.subr.mxu0 0.0
        %3443 = vmatpush1.msra.mxu0 0.0
        %3444 = vmatprep.subr.mxu0 0.0
        %3445 = vmatpush1.msra.mxu0 0.0
        %3446 = vmatprep.subr.mxu0 0.0
        %3447 = vmatpush1.msra.mxu0 0.0
        %3448 = vmatprep.subr.mxu0 0.0
        %3449 = vmatpush1.msra.mxu0 0.0
        %3450 = vmatprep.subr.mxu0 0.0
        %3451 = vmatpush1.msra.mxu0 0.0
        %3452 = vmatprep.subr.mxu0 0.0
        %3453 = vmatpush1.msra.mxu0 0.0
        %3454 = vmatprep.subr.mxu0 0.0
        %3455 = vmatpush1.msra.mxu0 0.0
        %3456 = vmatprep.subr.mxu0 0.0
        %3457 = vmatpush1.msra.mxu0 0.0
        %3458 = vmatprep.subr.mxu0 0.0
        %3459 = vmatpush1.msra.mxu0 0.0
        %3460 = vmatprep.subr.mxu0 0.0
        %3461 = vmatpush1.msra.mxu0 0.0
        %3462 = vmatprep.subr.mxu0 0.0
        %3463 = vmatpush1.msra.mxu0 0.0
        %3464 = vmatprep.subr.mxu0 0.0
        %3465 = vmatpush1.msra.mxu0 0.0
        %3466 = vmatprep.subr.mxu0 0.0
        %3467 = vmatpush1.msra.mxu0 0.0
        %3468 = vmatprep.subr.mxu0 0.0
        %3469 = vmatpush1.msra.mxu0 0.0
        %3470 = vmatprep.subr.mxu0 0.0
        %3471 = vmatpush1.msra.mxu0 0.0
        %3472 = vmatprep.subr.mxu0 0.0
        %3473 = vmatpush1.msra.mxu0 0.0
        %3474 = vmatprep.mubr.f32.mxu0 0.0
        %3475 = vmatmul.mubr.f32.gmra.mrb[0].mxu0 %v3394
        %v3476 = vpop.f32.mrb[0].mxu0
        %v3477 = vadd.f32 0.0, %v3476
        %v3478 = vpop.f32.mrb[0].mxu0
        %3479 = vmatprep.mubr.f32.mxu0 0.0
        %3480 = vmatmul.mubr.f32.gmra.mrb[0].mxu0 %v3395
        %v3481 = vpop.f32.mrb[0].mxu0
        %v3482 = vadd.f32 0.0, %v3481
        %v3483 = vpop.f32.mrb[0].mxu0
        %3484 = vmatprep.mubr.f32.mxu0 0.0
        %3485 = vmatmul.mubr.f32.gmra.mrb[0].mxu0 %v3396
        %v3486 = vpop.f32.mrb[0].mxu0
        %v3487 = vadd.f32 0.0, %v3486
        %v3488 = vpop.f32.mrb[0].mxu0
        %3489 = vmatprep.mubr.f32.mxu0 0.0
        %3490 = vmatmul.mubr.f32.gmra.mrb[0].mxu0 %v3397
        %v3491 = vpop.f32.mrb[0].mxu0
        %v3492 = vadd.f32 0.0, %v3491
        %v3493 = vpop.f32.mrb[0].mxu0
        %3494 = vmatprep.mubr.f32.mxu0 0.0
        %3495 = vmatmul.mubr.f32.gmra.mrb[0].mxu0 %v3398
        %v3496 = vpop.f32.mrb[0].mxu0
        %v3497 = vadd.f32 0.0, %v3496
        %v3498 = vpop.f32.mrb[0].mxu0
        %3499 = vmatprep.mubr.f32.mxu0 0.0
        %3500 = vmatmul.mubr.f32.gmra.mrb[0].mxu0 %v3399
        %v3501 = vpop.f32.mrb[0].mxu0
        %v3502 = vadd.f32 0.0, %v3501
        %v3503 = vpop.f32.mrb[0].mxu0
        %3504 = vmatprep.mubr.f32.mxu0 0.0
        %3505 = vmatmul.mubr.f32.gmra.mrb[0].mxu0 %v3400
        %v3506 = vpop.f32.mrb[0].mxu0
        %v3507 = vadd.f32 0.0, %v3506
        %v3508 = vpop.f32.mrb[0].mxu0
        %3509 = vmatprep.mubr.f32.mxu0 0.0
        %3510 = vmatmul.mubr.f32.gmra.mrb[0].mxu0 %v3401
        %v3511 = vpop.f32.mrb[0].mxu0
        %v3512 = vadd.f32 0.0, %v3511
        %v3513 = vpop.f32.mrb[0].mxu0
        %3514 = vdwg.mxu0
        %v3515 = vadd.f32 %v3402, %v3477
        %v3516 = vadd.f32 %v3403, %v3482
        %v3517 = vadd.f32 %v3404, %v3487
        %v3518 = vadd.f32 %v3405, %v3492
        %v3519 = vadd.f32 %v3406, %v3497
        %v3520 = vadd.f32 %v3407, %v3502
        %v3521 = vadd.f32 %v3408, %v3507
        %v3522 = vadd.f32 %v3409, %v3512
        %3523 = vst [vmem:[#allocation3] sm:$0xff] %v3515
        %3524 = vst [vmem:[#allocation3 + $0x8] sm:$0xff] %v3516
        %3525 = vst [vmem:[#allocation3 + $0x10] sm:$0xff] %v3517
        %3526 = vst [vmem:[#allocation3 + $0x18] sm:$0xff] %v3518
        %3527 = vst [vmem:[#allocation3 + $0x20] sm:$0xff] %v3519
        %3528 = vst [vmem:[#allocation3 + $0x28] sm:$0xff] %v3520
        %3529 = vst [vmem:[#allocation3 + $0x30] sm:$0xff] %v3521
        %3530 = vst [vmem:[#allocation3 + $0x38] sm:$0xff] %v3522
        %p3531 = scmp.eq.s32.totalorder %s26, 2
        // Predicated region
        $region89: #{tpu_custom_call.1} parent=59 // pred_check
          %p3532 = pneg %p3531
        $region90: #{tpu_custom_call.1} parent=59 // pred_check_branch
          %3534 = sbr.rel (%p3532) target = $region92
        $region91: #{tpu_custom_call.1} parent=59 // pred_region
          %v3535 = vld [vmem:[#allocation3] sm:$0xff]
          %v3536 = vld [vmem:[#allocation3 + $0x8] sm:$0xff]
          %v3537 = vld [vmem:[#allocation3 + $0x10] sm:$0xff]
          %v3538 = vld [vmem:[#allocation3 + $0x18] sm:$0xff]
          %v3539 = vld [vmem:[#allocation3 + $0x20] sm:$0xff]
          %v3540 = vld [vmem:[#allocation3 + $0x28] sm:$0xff]
          %v3541 = vld [vmem:[#allocation3 + $0x30] sm:$0xff]
          %v3542 = vld [vmem:[#allocation3 + $0x38] sm:$0xff]
          %v3543 = vld [vmem:[#allocation12] sm:$0xff]
          %v3544 = vld [vmem:[#allocation12 + $0x8] sm:$0xff]
          %v3545 = vld [vmem:[#allocation12 + $0x10] sm:$0xff]
          %v3546 = vld [vmem:[#allocation12 + $0x18] sm:$0xff]
          %v3547 = vld [vmem:[#allocation12 + $0x20] sm:$0xff]
          %v3548 = vld [vmem:[#allocation12 + $0x28] sm:$0xff]
          %v3549 = vld [vmem:[#allocation12 + $0x30] sm:$0xff]
          %v3550 = vld [vmem:[#allocation12 + $0x38] sm:$0xff]
          %v3551 = vld [vmem:[#allocation12 + $0x40] sm:$0xff]
          %v3552 = vld [vmem:[#allocation12 + $0x48] sm:$0xff]
          %v3553 = vld [vmem:[#allocation12 + $0x50] sm:$0xff]
          %v3554 = vld [vmem:[#allocation12 + $0x58] sm:$0xff]
          %v3555 = vld [vmem:[#allocation12 + $0x60] sm:$0xff]
          %v3556 = vld [vmem:[#allocation12 + $0x68] sm:$0xff]
          %v3557 = vld [vmem:[#allocation12 + $0x70] sm:$0xff]
          %v3558 = vld [vmem:[#allocation12 + $0x78] sm:$0xff]
          %v3559 = vlaneseq
          %v3560 = vshrl.u32 %v3559, 7
          %v3561 = vsub.s32 2, %v3560
          %v3562 = vrot.slane %v472, %v3561
          %3563 = vmatprep.subr.mxu0 0.0
          %3564 = vmatpush1.msra.mxu0 %v3543
          %3565 = vmatprep.subr.mxu0 0.0
          %3566 = vmatpush1.msra.mxu0 %v3544
          %3567 = vmatprep.subr.mxu0 0.0
          %3568 = vmatpush1.msra.mxu0 %v3545
          %3569 = vmatprep.subr.mxu0 0.0
          %3570 = vmatpush1.msra.mxu0 %v3546
          %3571 = vmatprep.subr.mxu0 0.0
          %3572 = vmatpush1.msra.mxu0 %v3547
          %3573 = vmatprep.subr.mxu0 0.0
          %3574 = vmatpush1.msra.mxu0 %v3548
          %3575 = vmatprep.subr.mxu0 0.0
          %3576 = vmatpush1.msra.mxu0 %v3549
          %3577 = vmatprep.subr.mxu0 0.0
          %3578 = vmatpush1.msra.mxu0 %v3550
          %3579 = vmatprep.subr.mxu0 0.0
          %3580 = vmatpush1.msra.mxu0 %v3551
          %3581 = vmatprep.subr.mxu0 0.0
          %3582 = vmatpush1.msra.mxu0 %v3552
          %3583 = vmatprep.subr.mxu0 0.0
          %3584 = vmatpush1.msra.mxu0 %v3553
          %3585 = vmatprep.subr.mxu0 0.0
          %3586 = vmatpush1.msra.mxu0 %v3554
          %3587 = vmatprep.subr.mxu0 0.0
          %3588 = vmatpush1.msra.mxu0 %v3555
          %3589 = vmatprep.subr.mxu0 0.0
          %3590 = vmatpush1.msra.mxu0 %v3556
          %3591 = vmatprep.subr.mxu0 0.0
          %3592 = vmatpush1.msra.mxu0 %v3557
          %3593 = vmatprep.subr.mxu0 0.0
          %3594 = vmatpush1.msra.mxu0 %v3558
          %3595 = vmatprep.subr.mxu0 0.0
          %3596 = vmatpush1.msra.mxu0 0.0
          %3597 = vmatprep.subr.mxu0 0.0
          %3598 = vmatpush1.msra.mxu0 0.0
          %3599 = vmatprep.subr.mxu0 0.0
          %3600 = vmatpush1.msra.mxu0 0.0
          %3601 = vmatprep.subr.mxu0 0.0
          %3602 = vmatpush1.msra.mxu0 0.0
          %3603 = vmatprep.subr.mxu0 0.0
          %3604 = vmatpush1.msra.mxu0 0.0
          %3605 = vmatprep.subr.mxu0 0.0
          %3606 = vmatpush1.msra.mxu0 0.0
          %3607 = vmatprep.subr.mxu0 0.0
          %3608 = vmatpush1.msra.mxu0 0.0
          %3609 = vmatprep.subr.mxu0 0.0
          %3610 = vmatpush1.msra.mxu0 0.0
          %3611 = vmatprep.subr.mxu0 0.0
          %3612 = vmatpush1.msra.mxu0 0.0
          %3613 = vmatprep.subr.mxu0 0.0
          %3614 = vmatpush1.msra.mxu0 0.0
          %3615 = vmatprep.subr.mxu0 0.0
          %3616 = vmatpush1.msra.mxu0 0.0
          %3617 = vmatprep.subr.mxu0 0.0
          %3618 = vmatpush1.msra.mxu0 0.0
          %3619 = vmatprep.subr.mxu0 0.0
          %3620 = vmatpush1.msra.mxu0 0.0
          %3621 = vmatprep.subr.mxu0 0.0
          %3622 = vmatpush1.msra.mxu0 0.0
          %3623 = vmatprep.subr.mxu0 0.0
          %3624 = vmatpush1.msra.mxu0 0.0
          %3625 = vmatprep.subr.mxu0 0.0
          %3626 = vmatpush1.msra.mxu0 0.0
          %3627 = vmatprep.mubr.f32.mxu0 0.0
          %3628 = vmatmul.mubr.f32.gmra.mrb[0].mxu0 %v3535
          %v3629 = vpop.f32.mrb[0].mxu0
          %v3630 = vadd.f32 %v3562, %v3629
          %v3631 = vpop.f32.mrb[0].mxu0
          %3632 = vmatprep.mubr.f32.mxu0 0.0
          %3633 = vmatmul.mubr.f32.gmra.mrb[0].mxu0 %v3536
          %v3634 = vpop.f32.mrb[0].mxu0
          %v3635 = vadd.f32 %v3562, %v3634
          %v3636 = vpop.f32.mrb[0].mxu0
          %3637 = vmatprep.mubr.f32.mxu0 0.0
          %3638 = vmatmul.mubr.f32.gmra.mrb[0].mxu0 %v3537
          %v3639 = vpop.f32.mrb[0].mxu0
          %v3640 = vadd.f32 %v3562, %v3639
          %v3641 = vpop.f32.mrb[0].mxu0
          %3642 = vmatprep.mubr.f32.mxu0 0.0
          %3643 = vmatmul.mubr.f32.gmra.mrb[0].mxu0 %v3538
          %v3644 = vpop.f32.mrb[0].mxu0
          %v3645 = vadd.f32 %v3562, %v3644
          %v3646 = vpop.f32.mrb[0].mxu0
          %3647 = vmatprep.mubr.f32.mxu0 0.0
          %3648 = vmatmul.mubr.f32.gmra.mrb[0].mxu0 %v3539
          %v3649 = vpop.f32.mrb[0].mxu0
          %v3650 = vadd.f32 %v3562, %v3649
          %v3651 = vpop.f32.mrb[0].mxu0
          %3652 = vmatprep.mubr.f32.mxu0 0.0
          %3653 = vmatmul.mubr.f32.gmra.mrb[0].mxu0 %v3540
          %v3654 = vpop.f32.mrb[0].mxu0
          %v3655 = vadd.f32 %v3562, %v3654
          %v3656 = vpop.f32.mrb[0].mxu0
          %3657 = vmatprep.mubr.f32.mxu0 0.0
          %3658 = vmatmul.mubr.f32.gmra.mrb[0].mxu0 %v3541
          %v3659 = vpop.f32.mrb[0].mxu0
          %v3660 = vadd.f32 %v3562, %v3659
          %v3661 = vpop.f32.mrb[0].mxu0
          %3662 = vmatprep.mubr.f32.mxu0 0.0
          %3663 = vmatmul.mubr.f32.gmra.mrb[0].mxu0 %v3542
          %v3664 = vpop.f32.mrb[0].mxu0
          %v3665 = vadd.f32 %v3562, %v3664
          %v3666 = vpop.f32.mrb[0].mxu0
          %3667 = vdwg.mxu0
          %v3668 = vmax.f32 %v3630, 0.0
          %v3669 = vmax.f32 %v3635, 0.0
          %v3670 = vmax.f32 %v3640, 0.0
          %v3671 = vmax.f32 %v3645, 0.0
          %v3672 = vmax.f32 %v3650, 0.0
          %v3673 = vmax.f32 %v3655, 0.0
          %v3674 = vmax.f32 %v3660, 0.0
          %v3675 = vmax.f32 %v3665, 0.0
          %v3676 = vand.u32 2147483647, %v3630
          %v3677 = vand.u32 2147483647, %v3635
          %v3678 = vand.u32 2147483647, %v3640
          %v3679 = vand.u32 2147483647, %v3645
          %v3680 = vand.u32 2147483647, %v3650
          %v3681 = vand.u32 2147483647, %v3655
          %v3682 = vand.u32 2147483647, %v3660
          %v3683 = vand.u32 2147483647, %v3665
          %v3684 = vsub.f32 0.0, %v3676
          %v3685 = vsub.f32 0.0, %v3677
          %v3686 = vsub.f32 0.0, %v3678
          %v3687 = vsub.f32 0.0, %v3679
          %v3688 = vsub.f32 0.0, %v3680
          %v3689 = vsub.f32 0.0, %v3681
          %v3690 = vsub.f32 0.0, %v3682
          %v3691 = vsub.f32 0.0, %v3683
          %v3692 = vmul.f32 %v3684, 1.442695
          %v3693 = vpow.pop %v3692
          %v3694 = vmul.f32 %v3685, 1.442695
          %v3695 = vpow.pop %v3694
          %v3696 = vmul.f32 %v3686, 1.442695
          %v3697 = vpow.pop %v3696
          %v3698 = vmul.f32 %v3687, 1.442695
          %v3699 = vpow.pop %v3698
          %v3700 = vmul.f32 %v3688, 1.442695
          %v3701 = vpow.pop %v3700
          %v3702 = vmul.f32 %v3689, 1.442695
          %v3703 = vpow.pop %v3702
          %v3704 = vmul.f32 %v3690, 1.442695
          %v3705 = vpow.pop %v3704
          %v3706 = vmul.f32 %v3691, 1.442695
          %v3707 = vpow.pop %v3706
          %v3708 = vadd.f32 %v3693, 1.0
          %v3709 = vlog2.pop %v3708
          %v3710 = vmul.f32 %v3709, 0.6931472
          %v3711 = vmul.f32 -0.5, %v3693
          %v3712 = vadd.f32 %v3711, 1.0
          %v3713 = vmul.f32 %v3712, %v3693
          %v3714 = vand.u32 2147483647, %v3693
          %vm3715 = vcmp.lt.f32.partialorder %v3714, 0.0004427343
          %v3716 = vsel %vm3715, %v3713, %v3710
          %v3717 = vadd.f32 %v3695, 1.0
          %v3718 = vlog2.pop %v3717
          %v3719 = vmul.f32 %v3718, 0.6931472
          %v3720 = vmul.f32 -0.5, %v3695
          %v3721 = vadd.f32 %v3720, 1.0
          %v3722 = vmul.f32 %v3721, %v3695
          %v3723 = vand.u32 2147483647, %v3695
          %vm3724 = vcmp.lt.f32.partialorder %v3723, 0.0004427343
          %v3725 = vsel %vm3724, %v3722, %v3719
          %v3726 = vadd.f32 %v3697, 1.0
          %v3727 = vlog2.pop %v3726
          %v3728 = vmul.f32 %v3727, 0.6931472
          %v3729 = vmul.f32 -0.5, %v3697
          %v3730 = vadd.f32 %v3729, 1.0
          %v3731 = vmul.f32 %v3730, %v3697
          %v3732 = vand.u32 2147483647, %v3697
          %vm3733 = vcmp.lt.f32.partialorder %v3732, 0.0004427343
          %v3734 = vsel %vm3733, %v3731, %v3728
          %v3735 = vadd.f32 %v3699, 1.0
          %v3736 = vlog2.pop %v3735
          %v3737 = vmul.f32 %v3736, 0.6931472
          %v3738 = vmul.f32 -0.5, %v3699
          %v3739 = vadd.f32 %v3738, 1.0
          %v3740 = vmul.f32 %v3739, %v3699
          %v3741 = vand.u32 2147483647, %v3699
          %vm3742 = vcmp.lt.f32.partialorder %v3741, 0.0004427343
          %v3743 = vsel %vm3742, %v3740, %v3737
          %v3744 = vadd.f32 %v3701, 1.0
          %v3745 = vlog2.pop %v3744
          %v3746 = vmul.f32 %v3745, 0.6931472
          %v3747 = vmul.f32 -0.5, %v3701
          %v3748 = vadd.f32 %v3747, 1.0
          %v3749 = vmul.f32 %v3748, %v3701
          %v3750 = vand.u32 2147483647, %v3701
          %vm3751 = vcmp.lt.f32.partialorder %v3750, 0.0004427343
          %v3752 = vsel %vm3751, %v3749, %v3746
          %v3753 = vadd.f32 %v3703, 1.0
          %v3754 = vlog2.pop %v3753
          %v3755 = vmul.f32 %v3754, 0.6931472
          %v3756 = vmul.f32 -0.5, %v3703
          %v3757 = vadd.f32 %v3756, 1.0
          %v3758 = vmul.f32 %v3757, %v3703
          %v3759 = vand.u32 2147483647, %v3703
          %vm3760 = vcmp.lt.f32.partialorder %v3759, 0.0004427343
          %v3761 = vsel %vm3760, %v3758, %v3755
          %v3762 = vadd.f32 %v3705, 1.0
          %v3763 = vlog2.pop %v3762
          %v3764 = vmul.f32 %v3763, 0.6931472
          %v3765 = vmul.f32 -0.5, %v3705
          %v3766 = vadd.f32 %v3765, 1.0
          %v3767 = vmul.f32 %v3766, %v3705
          %v3768 = vand.u32 2147483647, %v3705
          %vm3769 = vcmp.lt.f32.partialorder %v3768, 0.0004427343
          %v3770 = vsel %vm3769, %v3767, %v3764
          %v3771 = vadd.f32 %v3707, 1.0
          %v3772 = vlog2.pop %v3771
          %v3773 = vmul.f32 %v3772, 0.6931472
          %v3774 = vmul.f32 -0.5, %v3707
          %v3775 = vadd.f32 %v3774, 1.0
          %v3776 = vmul.f32 %v3775, %v3707
          %v3777 = vand.u32 2147483647, %v3707
          %vm3778 = vcmp.lt.f32.partialorder %v3777, 0.0004427343
          %v3779 = vsel %vm3778, %v3776, %v3773
          %v3780 = vadd.f32 %v3668, %v3716
          %v3781 = vadd.f32 %v3669, %v3725
          %v3782 = vadd.f32 %v3670, %v3734
          %v3783 = vadd.f32 %v3671, %v3743
          %v3784 = vadd.f32 %v3672, %v3752
          %v3785 = vadd.f32 %v3673, %v3761
          %v3786 = vadd.f32 %v3674, %v3770
          %v3787 = vadd.f32 %v3675, %v3779
          %v3788 = vsub.f32 %v3780, 0.6931472
          %v3789 = vsub.f32 %v3781, 0.6931472
          %v3790 = vsub.f32 %v3782, 0.6931472
          %v3791 = vsub.f32 %v3783, 0.6931472
          %v3792 = vsub.f32 %v3784, 0.6931472
          %v3793 = vsub.f32 %v3785, 0.6931472
          %v3794 = vsub.f32 %v3786, 0.6931472
          %v3795 = vsub.f32 %v3787, 0.6931472
          %v3796 = vld [vmem:[#allocation13] sm:$0xff]
          %v3797 = vld [vmem:[#allocation13 + $0x8] sm:$0xff]
          %v3798 = vld [vmem:[#allocation13 + $0x10] sm:$0xff]
          %v3799 = vld [vmem:[#allocation13 + $0x18] sm:$0xff]
          %v3800 = vld [vmem:[#allocation13 + $0x20] sm:$0xff]
          %v3801 = vld [vmem:[#allocation13 + $0x28] sm:$0xff]
          %v3802 = vld [vmem:[#allocation13 + $0x30] sm:$0xff]
          %v3803 = vld [vmem:[#allocation13 + $0x38] sm:$0xff]
          %v3804 = vld [vmem:[#allocation13 + $0x40] sm:$0xff]
          %v3805 = vld [vmem:[#allocation13 + $0x48] sm:$0xff]
          %v3806 = vld [vmem:[#allocation13 + $0x50] sm:$0xff]
          %v3807 = vld [vmem:[#allocation13 + $0x58] sm:$0xff]
          %v3808 = vld [vmem:[#allocation13 + $0x60] sm:$0xff]
          %v3809 = vld [vmem:[#allocation13 + $0x68] sm:$0xff]
          %v3810 = vld [vmem:[#allocation13 + $0x70] sm:$0xff]
          %v3811 = vld [vmem:[#allocation13 + $0x78] sm:$0xff]
          %v3812 = vlaneseq
          %v3813 = vshrl.u32 %v3812, 7
          %v3814 = vsub.s32 3, %v3813
          %v3815 = vrot.slane %v472, %v3814
          %3816 = vmatprep.subr.mxu0 0.0
          %3817 = vmatpush1.msra.mxu0 %v3796
          %3818 = vmatprep.subr.mxu0 0.0
          %3819 = vmatpush1.msra.mxu0 %v3797
          %3820 = vmatprep.subr.mxu0 0.0
          %3821 = vmatpush1.msra.mxu0 %v3798
          %3822 = vmatprep.subr.mxu0 0.0
          %3823 = vmatpush1.msra.mxu0 %v3799
          %3824 = vmatprep.subr.mxu0 0.0
          %3825 = vmatpush1.msra.mxu0 %v3800
          %3826 = vmatprep.subr.mxu0 0.0
          %3827 = vmatpush1.msra.mxu0 %v3801
          %3828 = vmatprep.subr.mxu0 0.0
          %3829 = vmatpush1.msra.mxu0 %v3802
          %3830 = vmatprep.subr.mxu0 0.0
          %3831 = vmatpush1.msra.mxu0 %v3803
          %3832 = vmatprep.subr.mxu0 0.0
          %3833 = vmatpush1.msra.mxu0 %v3804
          %3834 = vmatprep.subr.mxu0 0.0
          %3835 = vmatpush1.msra.mxu0 %v3805
          %3836 = vmatprep.subr.mxu0 0.0
          %3837 = vmatpush1.msra.mxu0 %v3806
          %3838 = vmatprep.subr.mxu0 0.0
          %3839 = vmatpush1.msra.mxu0 %v3807
          %3840 = vmatprep.subr.mxu0 0.0
          %3841 = vmatpush1.msra.mxu0 %v3808
          %3842 = vmatprep.subr.mxu0 0.0
          %3843 = vmatpush1.msra.mxu0 %v3809
          %3844 = vmatprep.subr.mxu0 0.0
          %3845 = vmatpush1.msra.mxu0 %v3810
          %3846 = vmatprep.subr.mxu0 0.0
          %3847 = vmatpush1.msra.mxu0 %v3811
          %3848 = vmatprep.subr.mxu0 0.0
          %3849 = vmatpush1.msra.mxu0 0.0
          %3850 = vmatprep.subr.mxu0 0.0
          %3851 = vmatpush1.msra.mxu0 0.0
          %3852 = vmatprep.subr.mxu0 0.0
          %3853 = vmatpush1.msra.mxu0 0.0
          %3854 = vmatprep.subr.mxu0 0.0
          %3855 = vmatpush1.msra.mxu0 0.0
          %3856 = vmatprep.subr.mxu0 0.0
          %3857 = vmatpush1.msra.mxu0 0.0
          %3858 = vmatprep.subr.mxu0 0.0
          %3859 = vmatpush1.msra.mxu0 0.0
          %3860 = vmatprep.subr.mxu0 0.0
          %3861 = vmatpush1.msra.mxu0 0.0
          %3862 = vmatprep.subr.mxu0 0.0
          %3863 = vmatpush1.msra.mxu0 0.0
          %3864 = vmatprep.subr.mxu0 0.0
          %3865 = vmatpush1.msra.mxu0 0.0
          %3866 = vmatprep.subr.mxu0 0.0
          %3867 = vmatpush1.msra.mxu0 0.0
          %3868 = vmatprep.subr.mxu0 0.0
          %3869 = vmatpush1.msra.mxu0 0.0
          %3870 = vmatprep.subr.mxu0 0.0
          %3871 = vmatpush1.msra.mxu0 0.0
          %3872 = vmatprep.subr.mxu0 0.0
          %3873 = vmatpush1.msra.mxu0 0.0
          %3874 = vmatprep.subr.mxu0 0.0
          %3875 = vmatpush1.msra.mxu0 0.0
          %3876 = vmatprep.subr.mxu0 0.0
          %3877 = vmatpush1.msra.mxu0 0.0
          %3878 = vmatprep.subr.mxu0 0.0
          %3879 = vmatpush1.msra.mxu0 0.0
          %3880 = vmatprep.mubr.f32.mxu0 0.0
          %3881 = vmatmul.mubr.f32.gmra.mrb[0].mxu0 %v3788
          %v3882 = vpop.f32.mrb[0].mxu0
          %v3883 = vadd.f32 %v3815, %v3882
          %v3884 = vpop.f32.mrb[0].mxu0
          %3885 = vmatprep.mubr.f32.mxu0 0.0
          %3886 = vmatmul.mubr.f32.gmra.mrb[0].mxu0 %v3789
          %v3887 = vpop.f32.mrb[0].mxu0
          %v3888 = vadd.f32 %v3815, %v3887
          %v3889 = vpop.f32.mrb[0].mxu0
          %3890 = vmatprep.mubr.f32.mxu0 0.0
          %3891 = vmatmul.mubr.f32.gmra.mrb[0].mxu0 %v3790
          %v3892 = vpop.f32.mrb[0].mxu0
          %v3893 = vadd.f32 %v3815, %v3892
          %v3894 = vpop.f32.mrb[0].mxu0
          %3895 = vmatprep.mubr.f32.mxu0 0.0
          %3896 = vmatmul.mubr.f32.gmra.mrb[0].mxu0 %v3791
          %v3897 = vpop.f32.mrb[0].mxu0
          %v3898 = vadd.f32 %v3815, %v3897
          %v3899 = vpop.f32.mrb[0].mxu0
          %3900 = vmatprep.mubr.f32.mxu0 0.0
          %3901 = vmatmul.mubr.f32.gmra.mrb[0].mxu0 %v3792
          %v3902 = vpop.f32.mrb[0].mxu0
          %v3903 = vadd.f32 %v3815, %v3902
          %v3904 = vpop.f32.mrb[0].mxu0
          %3905 = vmatprep.mubr.f32.mxu0 0.0
          %3906 = vmatmul.mubr.f32.gmra.mrb[0].mxu0 %v3793
          %v3907 = vpop.f32.mrb[0].mxu0
          %v3908 = vadd.f32 %v3815, %v3907
          %v3909 = vpop.f32.mrb[0].mxu0
          %3910 = vmatprep.mubr.f32.mxu0 0.0
          %3911 = vmatmul.mubr.f32.gmra.mrb[0].mxu0 %v3794
          %v3912 = vpop.f32.mrb[0].mxu0
          %v3913 = vadd.f32 %v3815, %v3912
          %v3914 = vpop.f32.mrb[0].mxu0
          %3915 = vmatprep.mubr.f32.mxu0 0.0
          %3916 = vmatmul.mubr.f32.gmra.mrb[0].mxu0 %v3795
          %v3917 = vpop.f32.mrb[0].mxu0
          %v3918 = vadd.f32 %v3815, %v3917
          %v3919 = vpop.f32.mrb[0].mxu0
          %3920 = vdwg.mxu0
          %3921 = vst [vmem:[#allocation15] sm:$0xff] %v3883
          %3922 = vst [vmem:[#allocation15 + $0x8] sm:$0xff] %v3888
          %3923 = vst [vmem:[#allocation15 + $0x10] sm:$0xff] %v3893
          %3924 = vst [vmem:[#allocation15 + $0x18] sm:$0xff] %v3898
          %3925 = vst [vmem:[#allocation15 + $0x20] sm:$0xff] %v3903
          %3926 = vst [vmem:[#allocation15 + $0x28] sm:$0xff] %v3908
          %3927 = vst [vmem:[#allocation15 + $0x30] sm:$0xff] %v3913
          %3928 = vst [vmem:[#allocation15 + $0x38] sm:$0xff] %v3918
        $region92: #{tpu_custom_call.1} parent=59 // pred_fallthru
          _
        // Predicated region
        $region93: #{tpu_custom_call.1} parent=59 // pred_check
          %p3929 = pneg %p264
        $region94: #{tpu_custom_call.1} parent=59 // pred_check_branch
          %3931 = sbr.rel (%p3929) target = $region96
        $region95: #{tpu_custom_call.1} parent=59 // pred_region
          %s3933 = ssub.s32 1024, 1024
          %3934 = vsyncadd [#allocation6], %s3933
          %s3935 = sshll.u32 [#allocation15], 4
          %s3936 = int_to_ptr.vmem [resolvable:$true] %s3935
          %3941 = dma.vmem_to_hbm [thread:$0]  %s3936, 1024, %s10, [#allocation6], 128, 128, 8
        $region96: #{tpu_custom_call.1} parent=59 // pred_fallthru
          _
        // Predicated region
        $region97: #{tpu_custom_call.1} parent=59 // pred_check
          %p3942 = pneg %p264
        $region98: #{tpu_custom_call.1} parent=59 // pred_check_branch
          %3944 = sbr.rel (%p3942) target = $region100
        $region99: #{tpu_custom_call.1} parent=59 // pred_region
          %3945 = dma.done [#allocation6], 1024
        $region100: #{tpu_custom_call.1} parent=59 // pred_fallthru
          _
      $region60: #{tpu_custom_call.1} parent=5 // pred_fallthru
        _
      %p3946 = scmp.le.s32.totalorder 2, %s21
      // Predicated region
      $region101: #{tpu_custom_call.1} parent=5 // pred_check
        %p3947 = pneg %p3946
      $region102: #{tpu_custom_call.1} parent=5 // pred_check_branch
        %3949 = sbr.rel (%p3947) target = $region104
      $region103: #{tpu_custom_call.1} parent=5 // pred_region
        %s3950 = ssub.s32 %s21, 2
      $region104: #{tpu_custom_call.1} parent=5 // pred_fallthru
        _
    $region6: #{tpu_custom_call.1} parent=1 // loop_footer
      %s25 = sadd.s32 1, %s21
    $region7: #{tpu_custom_call.1} parent=1 // loop_footer_branch
      %20 = sbr.rel target = $region3
    $region8: #{tpu_custom_call.1} parent=1 // loop_exit
      _
    %3951 = vsyncpa [#allocation5], 1
    %s3952 = scalar_lea.sflag [#allocation5], 1
    %3953 = vsyncpa %s3952, 1
    %3954 = vsyncpa [#allocation8], 1
    %3955 = vsyncpa [#allocation11], 1
    %3956 = vsyncpa [#allocation14], 1
    %3957 = vsyncpa [#allocation6], 1
    %s3958 = scalar_lea.sflag [#allocation6], 1
    %3959 = vsyncpa %s3958, 1

</llo_original>
